<compile_context>
chip_gen: v7x
topology: tpu7x:2x2x1
jax: 0.10.0
libtpu: 0.0.40
codegen_flags: <defaults>
</compile_context>

<pallas_src>
import functools

import jax
import jax.numpy as jnp
from jax.experimental import pallas as pl
from jax.experimental.pallas import tpu as pltpu


_LANE = 128  # TPU lane width; point blocks are kept lane-aligned


# ----------------------------- Pallas kernel --------------------------------
def _pointnet_feat_kernel(x_ref,
                          w1t, b1, w2t, b2, w3t, b3, w4t, b4, w5t, b5,
                          o_ref, *, c5_chunk):
    """One grid step = (one batch element, one block of n_blk points).

    x_ref : [1, 3, n_blk] f32    channel-major points (points lane-dense)
    w1t   : [64, 3]      f32     fused conv1+BN weight, channel-major (VPU layer)
    w2t..w4t : [Cout, Cin] bf16  fused conv+BN weights, channel-major (MXU layers)
    w5t   : [1024, 128]  bf16
    b1..b5: [Cout, 1]    f32     column biases
    o_ref : [1, 1024, 1] f32     running max over point blocks (resident across grid axis 1)
    """
    n_idx = pl.program_id(1)
    x = x_ref[0]                                          # [3, n_blk] f32

    # ---- layer 1 (Cin = 3): degenerate for the MXU -> three VPU broadcast FMAs.
    w1 = w1t[...]                                         # [64, 3] f32
    h = (w1[:, 0:1] * x[0:1, :]
         + w1[:, 1:2] * x[1:2, :]
         + w1[:, 2:3] * x[2:3, :]
         + b1[...])
    h = jnp.maximum(h, 0.0).astype(jnp.bfloat16)          # [64, n_blk]

    # ---- layers 2..4: bf16 MXU matmuls, f32 accumulation, fused bias + ReLU.
    def mxu_layer(h_in, wt_ref, b_ref):
        y = jnp.dot(wt_ref[...], h_in, preferred_element_type=jnp.float32)
        return jnp.maximum(y + b_ref[...], 0.0).astype(jnp.bfloat16)

    h = mxu_layer(h, w2t, b2)                             # [64, n_blk]
    h = mxu_layer(h, w3t, b3)                             # [64, n_blk]
    h = mxu_layer(h, w4t, b4)                             # [128, n_blk]

    # ---- layer 5 (128 -> 1024), chunked over output channels so the full
    #      [1024, n_blk] f32 tensor is never materialized.  ReLU(. + b) is
    #      monotonic, so bias + ReLU are applied after the max over points.
    n_out = w5t.shape[0]
    cols = []
    for c0 in range(0, n_out, c5_chunk):
        y = jnp.dot(w5t[c0:c0 + c5_chunk, :], h,
                    preferred_element_type=jnp.float32)   # [c5, n_blk] f32
        cols.append(jnp.max(y, axis=-1, keepdims=True))   # [c5, 1]
    col = jnp.concatenate(cols, axis=0)                   # [1024, 1]
    col = jnp.maximum(col + b5[...], 0.0)                 # bias + ReLU after the max

    # Running max over point blocks; the first block writes directly (no -inf
    # init + read-modify-max on step 0).
    @pl.when(n_idx == 0)
    def _():
        o_ref[0] = col

    @pl.when(n_idx > 0)
    def _():
        o_ref[0] = jnp.maximum(o_ref[0], col)


# ------------------------------ glue (plain JAX) -----------------------------
def fuse_pointnet_params(params, eps=1e-5):
    """Fold eval-mode BatchNorm1d into the preceding 1x1 Conv1d, transpose to
    channel-major [Cout, Cin], and cast the MXU-layer weights to bf16.

    Hoisted out of the jitted forward so the fold / transpose / cast run once.
    Layer 1 stays f32 (it runs on the VPU); biases stay f32 columns [Cout, 1].
    """
    fused = []
    for li, (w, b, gamma, beta, mean, var) in enumerate(params):
        scale = gamma / jnp.sqrt(var + eps)
        w_t = jnp.transpose(w * scale[None, :])                 # [Cout, Cin]
        b_col = ((b - mean) * scale + beta).reshape(-1, 1).astype(jnp.float32)
        w_dtype = jnp.float32 if li == 0 else jnp.bfloat16
        fused.append((w_t.astype(w_dtype), b_col))
    return fused


def _init_layer_params(key, c_in, c_out):
    """Deterministic synthetic init for Conv1d(c_in, c_out, 1) + BatchNorm1d(c_out)."""
    k_w, k_b, k_g, k_be, k_m, k_v = jax.random.split(key, 6)
    w = jax.random.normal(k_w, (c_in, c_out), jnp.float32) * (1.0 / jnp.sqrt(c_in))
    b = jax.random.normal(k_b, (c_out,), jnp.float32) * 0.05
    gamma = 1.0 + 0.1 * jax.random.normal(k_g, (c_out,), jnp.float32)
    beta = 0.05 * jax.random.normal(k_be, (c_out,), jnp.float32)
    mean = 0.05 * jax.random.normal(k_m, (c_out,), jnp.float32)
    var = 1.0 + 0.1 * jax.random.uniform(k_v, (c_out,), jnp.float32)
    return w, b, gamma, beta, mean, var


def init_pointnet_params(key):
    dims = [(3, 64), (64, 64), (64, 64), (64, 128), (128, 1024)]
    keys = jax.random.split(key, len(dims))
    return [_init_layer_params(k, ci, co) for k, (ci, co) in zip(keys, dims)]


@functools.partial(jax.jit, static_argnames=("max_points_per_step",))
def pointnet_partseg_features(pointcloud, fused_params, *, max_points_per_step=2048):
    """PointNetPartSeg shared backbone.

    pointcloud:   [B, N, 3]  (layout from the reference docstring)
    fused_params: output of fuse_pointnet_params (BN folded, channel-major, bf16 MXU weights)
    max_points_per_step: points per grid step (static). 2048 keeps worst-case live
        VMEM ~11 MiB (safe for v7x's 64 MiB); v5e/v6e can use 4096.
    returns:      [B, 1024]  global PointNet feature
    """
    x = pointcloud.astype(jnp.float32)
    B, N, C = x.shape
    assert C == 3

    # Point blocking: n_blk is a lane-aligned multiple of 128, sized so n_steps * n_blk
    # covers N with minimal padding while n_blk stays near max_points_per_step.
    n_steps = pl.cdiv(N, max_points_per_step)
    n_blk = pl.cdiv(pl.cdiv(N, n_steps), _LANE) * _LANE
    n_pad = n_blk * n_steps

    # Pad the point axis by replicating point 0: max() is duplicate-invariant,
    # so no in-kernel ragged-N mask is needed.
    if n_pad > N:
        x = jnp.concatenate(
            [x, jnp.broadcast_to(x[:, :1, :], (B, n_pad - N, 3))], axis=1)

    # Channel-major layout: [B, 3, n_pad].  Per-step tiles are lane-dense and the
    # HBM->VMEM DMA is 3 contiguous segments (vs. n_blk 12-byte strided segments).
    xt = jnp.transpose(x, (0, 2, 1))

    in_specs = [pl.BlockSpec((1, 3, n_blk), lambda b, n: (b, 0, n))]
    flat_params = []
    for w, bias in fused_params:
        flat_params += [w, bias]
        # constants: full-array blocks pinned to block (0, 0) for every grid step
        in_specs.append(pl.BlockSpec(w.shape, lambda b, n: (0, 0)))
        in_specs.append(pl.BlockSpec(bias.shape, lambda b, n: (0, 0)))

    kernel = functools.partial(_pointnet_feat_kernel, c5_chunk=256)

    out = pl.pallas_call(
        kernel,
        out_shape=jax.ShapeDtypeStruct((B, 1024, 1), jnp.float32),
        grid_spec=pltpu.PrefetchScalarGridSpec(
            num_scalar_prefetch=0,
            grid=(B, n_steps),                 # reduction (point) axis last
            in_specs=in_specs,
            # column output block (contiguous writeback since minor dim is 1);
            # resident across the point axis.
            out_specs=pl.BlockSpec((1, 1024, 1), lambda b, n: (b, 0, 0)),
        ),
        compiler_params=pltpu.CompilerParams(
            dimension_semantics=("parallel", "arbitrary"),
            vmem_limit_bytes=40 * 1024 * 1024,   # conservative for v7x (64 MiB VMEM)
        ),
    )(xt, *flat_params)

    return out.reshape(B, 1024)


# pure-JAX f32 reference for a sanity check
def _reference_features(pointcloud, params, eps=1e-5):
    x = pointcloud.astype(jnp.float32)  # [B, N, 3]
    for (w, b, gamma, beta, mean, var) in params:
        scale = gamma / jnp.sqrt(var + eps)
        w_eff = w * scale[None, :]
        b_eff = (b - mean) * scale + beta
        x = jnp.maximum(jnp.einsum("bnc,cd->bnd", x, w_eff) + b_eff, 0.0)
    return jnp.max(x, axis=1)  # [B, 1024]


if __name__ == "__main__":
    key = jax.random.PRNGKey(0)
    k_x, k_p, k_x2 = jax.random.split(key, 3)

    params = init_pointnet_params(k_p)
    fused = fuse_pointnet_params(params)  # BN fold + transpose + bf16 cast: runs once

    # Test 1: ragged N (not a multiple of 128) -> exercises the replicate-padding path.
    B, N = 2, 200
    pointcloud = jax.random.normal(k_x, (B, N, 3), jnp.float32)
    feat = jax.block_until_ready(pointnet_partseg_features(pointcloud, fused))
    ref = _reference_features(pointcloud, params)
    assert feat.shape == (B, 1024)
    err = float(jnp.max(jnp.abs(feat - ref)))
    scale = max(1.0, float(jnp.max(jnp.abs(ref))))
    # bf16 MXU operands (f32 accumulation) -> loosened tolerance vs the f32 reference
    assert err < 5e-2 * scale, f"max abs error {err} (scale {scale})"

    # Test 2: multiple point blocks -> exercises the resident running-max path.
    pc2 = jax.random.normal(k_x2, (2, 300, 3), jnp.float32)
    feat2 = jax.block_until_ready(
        pointnet_partseg_features(pc2, fused, max_points_per_step=128))
    ref2 = _reference_features(pc2, params)
    err2 = float(jnp.max(jnp.abs(feat2 - ref2)))
    scale2 = max(1.0, float(jnp.max(jnp.abs(ref2))))
    assert err2 < 5e-2 * scale2, f"max abs error {err2} (scale {scale2})"

    print("KERNEL_OK")
</pallas_src>

<mosaic_0001>
module attributes {stable_mosaic.version = 11 : i64} {
  func.func @_pointnet_feat_kernel(%arg0: i32, %arg1: i32, %arg2: memref<1x3x256xf32, #tpu.memory_space<vmem>>, %arg3: memref<64x3xf32, #tpu.memory_space<vmem>>, %arg4: memref<64x1xf32, #tpu.memory_space<vmem>>, %arg5: memref<64x64xbf16, #tpu.memory_space<vmem>>, %arg6: memref<64x1xf32, #tpu.memory_space<vmem>>, %arg7: memref<64x64xbf16, #tpu.memory_space<vmem>>, %arg8: memref<64x1xf32, #tpu.memory_space<vmem>>, %arg9: memref<128x64xbf16, #tpu.memory_space<vmem>>, %arg10: memref<128x1xf32, #tpu.memory_space<vmem>>, %arg11: memref<1024x128xbf16, #tpu.memory_space<vmem>>, %arg12: memref<1024x1xf32, #tpu.memory_space<vmem>>, %arg13: memref<1x1024x1xf32, #tpu.memory_space<vmem>>) attributes {dimension_semantics = [#tpu.dimension_semantics<parallel>, #tpu.dimension_semantics<arbitrary>], iteration_bounds = array<i64: 2, 1>, scalar_prefetch = 0 : i64, scratch_operands = 0 : i64, tpu.core_type = #tpu.core_type<tc>, window_params = [{transform_indices = @transform_0, window_bounds = array<i64: 1, 3, 256>}, {pipeline_mode = #tpu.pipeline_mode<synchronous>, transform_indices = @transform_1, window_bounds = array<i64: 64, 3>}, {pipeline_mode = #tpu.pipeline_mode<synchronous>, transform_indices = @transform_2, window_bounds = array<i64: 64, 1>}, {pipeline_mode = #tpu.pipeline_mode<synchronous>, transform_indices = @transform_3, window_bounds = array<i64: 64, 64>}, {pipeline_mode = #tpu.pipeline_mode<synchronous>, transform_indices = @transform_4, window_bounds = array<i64: 64, 1>}, {pipeline_mode = #tpu.pipeline_mode<synchronous>, transform_indices = @transform_5, window_bounds = array<i64: 64, 64>}, {pipeline_mode = #tpu.pipeline_mode<synchronous>, transform_indices = @transform_6, window_bounds = array<i64: 64, 1>}, {pipeline_mode = #tpu.pipeline_mode<synchronous>, transform_indices = @transform_7, window_bounds = array<i64: 128, 64>}, {pipeline_mode = #tpu.pipeline_mode<synchronous>, transform_indices = @transform_8, window_bounds = array<i64: 128, 1>}, {pipeline_mode = #tpu.pipeline_mode<synchronous>, transform_indices = @transform_9, window_bounds = array<i64: 1024, 128>}, {pipeline_mode = #tpu.pipeline_mode<synchronous>, transform_indices = @transform_10, window_bounds = array<i64: 1024, 1>}, {transform_indices = @transform_11, window_bounds = array<i64: 1, 1024, 1>}]} {
    %c0 = arith.constant 0 : index
    %c0_0 = arith.constant 0 : index
    %c0_1 = arith.constant 0 : index
    %0 = vector.load %arg2[%c0, %c0_0, %c0_1] : memref<1x3x256xf32, #tpu.memory_space<vmem>>, vector<1x3x256xf32>
    %1 = vector.shape_cast %0 : vector<1x3x256xf32> to vector<3x256xf32>
    %c0_2 = arith.constant 0 : index
    %c0_3 = arith.constant 0 : index
    %2 = vector.load %arg3[%c0_2, %c0_3] : memref<64x3xf32, #tpu.memory_space<vmem>>, vector<64x3xf32>
    %3 = vector.extract_strided_slice %2 {offsets = [0, 0], sizes = [64, 1], strides = [1, 1]} : vector<64x3xf32> to vector<64x1xf32>
    %4 = vector.extract_strided_slice %1 {offsets = [0, 0], sizes = [1, 256], strides = [1, 1]} : vector<3x256xf32> to vector<1x256xf32>
    %5 = vector.broadcast %3 : vector<64x1xf32> to vector<64x256xf32>
    %6 = vector.broadcast %4 : vector<1x256xf32> to vector<64x256xf32>
    %7 = arith.mulf %5, %6 : vector<64x256xf32>
    %8 = vector.extract_strided_slice %2 {offsets = [0, 1], sizes = [64, 1], strides = [1, 1]} : vector<64x3xf32> to vector<64x1xf32>
    %9 = vector.extract_strided_slice %1 {offsets = [1, 0], sizes = [1, 256], strides = [1, 1]} : vector<3x256xf32> to vector<1x256xf32>
    %10 = vector.broadcast %8 : vector<64x1xf32> to vector<64x256xf32>
    %11 = vector.broadcast %9 : vector<1x256xf32> to vector<64x256xf32>
    %12 = arith.mulf %10, %11 : vector<64x256xf32>
    %13 = arith.addf %7, %12 : vector<64x256xf32>
    %14 = vector.extract_strided_slice %2 {offsets = [0, 2], sizes = [64, 1], strides = [1, 1]} : vector<64x3xf32> to vector<64x1xf32>
    %15 = vector.extract_strided_slice %1 {offsets = [2, 0], sizes = [1, 256], strides = [1, 1]} : vector<3x256xf32> to vector<1x256xf32>
    %16 = vector.broadcast %14 : vector<64x1xf32> to vector<64x256xf32>
    %17 = vector.broadcast %15 : vector<1x256xf32> to vector<64x256xf32>
    %18 = arith.mulf %16, %17 : vector<64x256xf32>
    %19 = arith.addf %13, %18 : vector<64x256xf32>
    %c0_4 = arith.constant 0 : index
    %c0_5 = arith.constant 0 : index
    %20 = vector.load %arg4[%c0_4, %c0_5] : memref<64x1xf32, #tpu.memory_space<vmem>>, vector<64x1xf32>
    %21 = vector.broadcast %20 : vector<64x1xf32> to vector<64x256xf32>
    %22 = arith.addf %19, %21 : vector<64x256xf32>
    %cst = arith.constant 0.000000e+00 : f32
    %23 = vector.broadcast %cst : f32 to vector<64x256xf32>
    %24 = arith.maximumf %22, %23 : vector<64x256xf32>
    %25 = arith.truncf %24 : vector<64x256xf32> to vector<64x256xbf16>
    %c0_6 = arith.constant 0 : index
    %c0_7 = arith.constant 0 : index
    %26 = vector.load %arg5[%c0_6, %c0_7] : memref<64x64xbf16, #tpu.memory_space<vmem>>, vector<64x64xbf16>
    %cst_8 = arith.constant dense<0.000000e+00> : vector<64x256xf32>
    %27 = tpu.matmul %26, %25, %cst_8 {dimension_numbers = #tpu.dot_dimension_numbers<[1], [0], [0], [1], [0, 0, 1, 1], [], []>} : vector<64x64xbf16>, vector<64x256xbf16>, vector<64x256xf32> -> vector<64x256xf32>
    %c0_9 = arith.constant 0 : index
    %c0_10 = arith.constant 0 : index
    %28 = vector.load %arg6[%c0_9, %c0_10] : memref<64x1xf32, #tpu.memory_space<vmem>>, vector<64x1xf32>
    %29 = vector.broadcast %28 : vector<64x1xf32> to vector<64x256xf32>
    %30 = arith.addf %27, %29 : vector<64x256xf32>
    %cst_11 = arith.constant 0.000000e+00 : f32
    %31 = vector.broadcast %cst_11 : f32 to vector<64x256xf32>
    %32 = arith.maximumf %30, %31 : vector<64x256xf32>
    %33 = arith.truncf %32 : vector<64x256xf32> to vector<64x256xbf16>
    %c0_12 = arith.constant 0 : index
    %c0_13 = arith.constant 0 : index
    %34 = vector.load %arg7[%c0_12, %c0_13] : memref<64x64xbf16, #tpu.memory_space<vmem>>, vector<64x64xbf16>
    %cst_14 = arith.constant dense<0.000000e+00> : vector<64x256xf32>
    %35 = tpu.matmul %34, %33, %cst_14 {dimension_numbers = #tpu.dot_dimension_numbers<[1], [0], [0], [1], [0, 0, 1, 1], [], []>} : vector<64x64xbf16>, vector<64x256xbf16>, vector<64x256xf32> -> vector<64x256xf32>
    %c0_15 = arith.constant 0 : index
    %c0_16 = arith.constant 0 : index
    %36 = vector.load %arg8[%c0_15, %c0_16] : memref<64x1xf32, #tpu.memory_space<vmem>>, vector<64x1xf32>
    %37 = vector.broadcast %36 : vector<64x1xf32> to vector<64x256xf32>
    %38 = arith.addf %35, %37 : vector<64x256xf32>
    %cst_17 = arith.constant 0.000000e+00 : f32
    %39 = vector.broadcast %cst_17 : f32 to vector<64x256xf32>
    %40 = arith.maximumf %38, %39 : vector<64x256xf32>
    %41 = arith.truncf %40 : vector<64x256xf32> to vector<64x256xbf16>
    %c0_18 = arith.constant 0 : index
    %c0_19 = arith.constant 0 : index
    %42 = vector.load %arg9[%c0_18, %c0_19] : memref<128x64xbf16, #tpu.memory_space<vmem>>, vector<128x64xbf16>
    %cst_20 = arith.constant dense<0.000000e+00> : vector<128x256xf32>
    %43 = tpu.matmul %42, %41, %cst_20 {dimension_numbers = #tpu.dot_dimension_numbers<[1], [0], [0], [1], [0, 0, 1, 1], [], []>} : vector<128x64xbf16>, vector<64x256xbf16>, vector<128x256xf32> -> vector<128x256xf32>
    %c0_21 = arith.constant 0 : index
    %c0_22 = arith.constant 0 : index
    %44 = vector.load %arg10[%c0_21, %c0_22] : memref<128x1xf32, #tpu.memory_space<vmem>>, vector<128x1xf32>
    %45 = vector.broadcast %44 : vector<128x1xf32> to vector<128x256xf32>
    %46 = arith.addf %43, %45 : vector<128x256xf32>
    %cst_23 = arith.constant 0.000000e+00 : f32
    %47 = vector.broadcast %cst_23 : f32 to vector<128x256xf32>
    %48 = arith.maximumf %46, %47 : vector<128x256xf32>
    %49 = arith.truncf %48 : vector<128x256xf32> to vector<128x256xbf16>
    %c0_24 = arith.constant 0 : index
    %c0_25 = arith.constant 0 : index
    %50 = vector.load %arg11[%c0_24, %c0_25] : memref<1024x128xbf16, #tpu.memory_space<vmem>>, vector<256x128xbf16>
    %cst_26 = arith.constant dense<0.000000e+00> : vector<256x256xf32>
    %51 = tpu.matmul %50, %49, %cst_26 {dimension_numbers = #tpu.dot_dimension_numbers<[1], [0], [0], [1], [0, 0, 1, 1], [], []>} : vector<256x128xbf16>, vector<128x256xbf16>, vector<256x256xf32> -> vector<256x256xf32>
    %cst_27 = arith.constant dense<0xFF800000> : vector<256xf32>
    %52 = vector.multi_reduction <maximumf>, %51, %cst_27 [1] : vector<256x256xf32> to vector<256xf32>
    %53 = vector.shape_cast %52 : vector<256xf32> to vector<256x1xf32>
    %c256 = arith.constant 256 : index
    %c0_28 = arith.constant 0 : index
    %54 = vector.load %arg11[%c256, %c0_28] : memref<1024x128xbf16, #tpu.memory_space<vmem>>, vector<256x128xbf16>
    %cst_29 = arith.constant dense<0.000000e+00> : vector<256x256xf32>
    %55 = tpu.matmul %54, %49, %cst_29 {dimension_numbers = #tpu.dot_dimension_numbers<[1], [0], [0], [1], [0, 0, 1, 1], [], []>} : vector<256x128xbf16>, vector<128x256xbf16>, vector<256x256xf32> -> vector<256x256xf32>
    %cst_30 = arith.constant dense<0xFF800000> : vector<256xf32>
    %56 = vector.multi_reduction <maximumf>, %55, %cst_30 [1] : vector<256x256xf32> to vector<256xf32>
    %57 = vector.shape_cast %56 : vector<256xf32> to vector<256x1xf32>
    %c512 = arith.constant 512 : index
    %c0_31 = arith.constant 0 : index
    %58 = vector.load %arg11[%c512, %c0_31] : memref<1024x128xbf16, #tpu.memory_space<vmem>>, vector<256x128xbf16>
    %cst_32 = arith.constant dense<0.000000e+00> : vector<256x256xf32>
    %59 = tpu.matmul %58, %49, %cst_32 {dimension_numbers = #tpu.dot_dimension_numbers<[1], [0], [0], [1], [0, 0, 1, 1], [], []>} : vector<256x128xbf16>, vector<128x256xbf16>, vector<256x256xf32> -> vector<256x256xf32>
    %cst_33 = arith.constant dense<0xFF800000> : vector<256xf32>
    %60 = vector.multi_reduction <maximumf>, %59, %cst_33 [1] : vector<256x256xf32> to vector<256xf32>
    %61 = vector.shape_cast %60 : vector<256xf32> to vector<256x1xf32>
    %c768 = arith.constant 768 : index
    %c0_34 = arith.constant 0 : index
    %62 = vector.load %arg11[%c768, %c0_34] : memref<1024x128xbf16, #tpu.memory_space<vmem>>, vector<256x128xbf16>
    %cst_35 = arith.constant dense<0.000000e+00> : vector<256x256xf32>
    %63 = tpu.matmul %62, %49, %cst_35 {dimension_numbers = #tpu.dot_dimension_numbers<[1], [0], [0], [1], [0, 0, 1, 1], [], []>} : vector<256x128xbf16>, vector<128x256xbf16>, vector<256x256xf32> -> vector<256x256xf32>
    %cst_36 = arith.constant dense<0xFF800000> : vector<256xf32>
    %64 = vector.multi_reduction <maximumf>, %63, %cst_36 [1] : vector<256x256xf32> to vector<256xf32>
    %65 = vector.shape_cast %64 : vector<256xf32> to vector<256x1xf32>
    %66 = tpu.concatenate %53, %57, %61, %65 in 0 : vector<256x1xf32>, vector<256x1xf32>, vector<256x1xf32>, vector<256x1xf32> -> vector<1024x1xf32>
    %c0_37 = arith.constant 0 : index
    %c0_38 = arith.constant 0 : index
    %67 = vector.load %arg12[%c0_37, %c0_38] : memref<1024x1xf32, #tpu.memory_space<vmem>>, vector<1024x1xf32>
    %68 = arith.addf %66, %67 : vector<1024x1xf32>
    %cst_39 = arith.constant 0.000000e+00 : f32
    %69 = vector.broadcast %cst_39 : f32 to vector<1024x1xf32>
    %70 = arith.maximumf %68, %69 : vector<1024x1xf32>
    %c0_i32 = arith.constant 0 : i32
    %71 = arith.cmpi eq, %arg1, %c0_i32 : i32
    %72 = arith.extui %71 : i1 to i32
    %c0_i32_40 = arith.constant 0 : i32
    %73 = arith.cmpi ne, %72, %c0_i32_40 : i32
    scf.if %73 {
      %c0_43 = arith.constant 0 : index
      %c0_44 = arith.constant 0 : index
      %c0_45 = arith.constant 0 : index
      %77 = vector.load %arg13[%c0_43, %c0_44, %c0_45] : memref<1x1024x1xf32, #tpu.memory_space<vmem>>, vector<1x1024x1xf32>
      %78 = vector.shape_cast %77 : vector<1x1024x1xf32> to vector<1024x1xf32>
      %79 = vector.shape_cast %70 : vector<1024x1xf32> to vector<1x1024x1xf32>
      tpu.vector_store %arg13[%c0_43, %c0_44, %c0_45], %79 {strides = array<i32>} : memref<1x1024x1xf32, #tpu.memory_space<vmem>>, vector<1x1024x1xf32>,
    } else {
    }
    %c0_i32_41 = arith.constant 0 : i32
    %74 = arith.cmpi sgt, %arg1, %c0_i32_41 : i32
    %75 = arith.extui %74 : i1 to i32
    %c0_i32_42 = arith.constant 0 : i32
    %76 = arith.cmpi ne, %75, %c0_i32_42 : i32
    scf.if %76 {
      %c0_43 = arith.constant 0 : index
      %c0_44 = arith.constant 0 : index
      %c0_45 = arith.constant 0 : index
      %77 = vector.load %arg13[%c0_43, %c0_44, %c0_45] : memref<1x1024x1xf32, #tpu.memory_space<vmem>>, vector<1x1024x1xf32>
      %78 = vector.shape_cast %77 : vector<1x1024x1xf32> to vector<1024x1xf32>
      %79 = arith.maximumf %78, %70 : vector<1024x1xf32>
      %c0_46 = arith.constant 0 : index
      %c0_47 = arith.constant 0 : index
      %c0_48 = arith.constant 0 : index
      %80 = vector.load %arg13[%c0_46, %c0_47, %c0_48] : memref<1x1024x1xf32, #tpu.memory_space<vmem>>, vector<1x1024x1xf32>
      %81 = vector.shape_cast %80 : vector<1x1024x1xf32> to vector<1024x1xf32>
      %82 = vector.shape_cast %79 : vector<1024x1xf32> to vector<1x1024x1xf32>
      tpu.vector_store %arg13[%c0_46, %c0_47, %c0_48], %82 {strides = array<i32>} : memref<1x1024x1xf32, #tpu.memory_space<vmem>>, vector<1x1024x1xf32>,
    } else {
    }
    return
  }
  func.func @transform_0(%arg0: i32, %arg1: i32) -> (i32, i32, i32) {
    %c0_i32 = arith.constant 0 : i32
    %c0_i32_0 = arith.constant 0 : i32
    return %arg0, %c0_i32, %arg1 : i32, i32, i32
  }
  func.func @transform_1(%arg0: i32, %arg1: i32) -> (i32, i32) {
    %c0_i32 = arith.constant 0 : i32
    %c0_i32_0 = arith.constant 0 : i32
    %c0_i32_1 = arith.constant 0 : i32
    return %c0_i32, %c0_i32_0 : i32, i32
  }
  func.func @transform_2(%arg0: i32, %arg1: i32) -> (i32, i32) {
    %c0_i32 = arith.constant 0 : i32
    %c0_i32_0 = arith.constant 0 : i32
    %c0_i32_1 = arith.constant 0 : i32
    return %c0_i32, %c0_i32_0 : i32, i32
  }
  func.func @transform_3(%arg0: i32, %arg1: i32) -> (i32, i32) {
    %c0_i32 = arith.constant 0 : i32
    %c0_i32_0 = arith.constant 0 : i32
    %c0_i32_1 = arith.constant 0 : i32
    return %c0_i32, %c0_i32_0 : i32, i32
  }
  func.func @transform_4(%arg0: i32, %arg1: i32) -> (i32, i32) {
    %c0_i32 = arith.constant 0 : i32
    %c0_i32_0 = arith.constant 0 : i32
    %c0_i32_1 = arith.constant 0 : i32
    return %c0_i32, %c0_i32_0 : i32, i32
  }
  func.func @transform_5(%arg0: i32, %arg1: i32) -> (i32, i32) {
    %c0_i32 = arith.constant 0 : i32
    %c0_i32_0 = arith.constant 0 : i32
    %c0_i32_1 = arith.constant 0 : i32
    return %c0_i32, %c0_i32_0 : i32, i32
  }
  func.func @transform_6(%arg0: i32, %arg1: i32) -> (i32, i32) {
    %c0_i32 = arith.constant 0 : i32
    %c0_i32_0 = arith.constant 0 : i32
    %c0_i32_1 = arith.constant 0 : i32
    return %c0_i32, %c0_i32_0 : i32, i32
  }
  func.func @transform_7(%arg0: i32, %arg1: i32) -> (i32, i32) {
    %c0_i32 = arith.constant 0 : i32
    %c0_i32_0 = arith.constant 0 : i32
    %c0_i32_1 = arith.constant 0 : i32
    return %c0_i32, %c0_i32_0 : i32, i32
  }
  func.func @transform_8(%arg0: i32, %arg1: i32) -> (i32, i32) {
    %c0_i32 = arith.constant 0 : i32
    %c0_i32_0 = arith.constant 0 : i32
    %c0_i32_1 = arith.constant 0 : i32
    return %c0_i32, %c0_i32_0 : i32, i32
  }
  func.func @transform_9(%arg0: i32, %arg1: i32) -> (i32, i32) {
    %c0_i32 = arith.constant 0 : i32
    %c0_i32_0 = arith.constant 0 : i32
    %c0_i32_1 = arith.constant 0 : i32
    return %c0_i32, %c0_i32_0 : i32, i32
  }
  func.func @transform_10(%arg0: i32, %arg1: i32) -> (i32, i32) {
    %c0_i32 = arith.constant 0 : i32
    %c0_i32_0 = arith.constant 0 : i32
    %c0_i32_1 = arith.constant 0 : i32
    return %c0_i32, %c0_i32_0 : i32, i32
  }
  func.func @transform_11(%arg0: i32, %arg1: i32) -> (i32, i32, i32) {
    %c0_i32 = arith.constant 0 : i32
    %c0_i32_0 = arith.constant 0 : i32
    %c0_i32_1 = arith.constant 0 : i32
    return %arg0, %c0_i32, %c0_i32_0 : i32, i32, i32
  }
}

</mosaic_0001>

<llo_original>
// kernel: pointnet_partseg_features.1
$region0: #{pointnet_partseg_features.1}
  #allocation0 [shape = 'u32[]', space=smem, size = 0x4, offset = 0x4, fixed_abs, tag = 'smem constant byte address 0x4 - core index']
  #allocation1 [shape = 'u32[144,128]{1,0:T(1,128)}', space=vmem, size = 0x12000, scoped, tag = 'internal scratch']
  %s0 = inlined_call_operand.vmem [shape: f32[2,3,256], index: 0, kind: input, shape index: {}]
  %s1 = inlined_call_operand.vmem [shape: f32[64,3], index: 1, kind: input, shape index: {}]
  %s2 = inlined_call_operand.vmem [shape: f32[64,1], index: 2, kind: input, shape index: {}]
  %s3 = inlined_call_operand.vmem [shape: bf16[64,64], index: 3, kind: input, shape index: {}]
  %s4 = inlined_call_operand.vmem [shape: f32[64,1], index: 4, kind: input, shape index: {}]
  %s5 = inlined_call_operand.vmem [shape: bf16[64,64], index: 5, kind: input, shape index: {}]
  %s6 = inlined_call_operand.vmem [shape: f32[64,1], index: 6, kind: input, shape index: {}]
  %s7 = inlined_call_operand.vmem [shape: bf16[128,64], index: 7, kind: input, shape index: {}]
  %s8 = inlined_call_operand.vmem [shape: f32[128,1], index: 8, kind: input, shape index: {}]
  %s9 = inlined_call_operand.vmem [shape: bf16[1024,128], index: 9, kind: input, shape index: {}]
  %s10 = inlined_call_operand.vmem [shape: f32[1024,1], index: 10, kind: input, shape index: {}]
  %s11 = inlined_call_operand.vmem [shape: f32[2,1024,1], index: 11, kind: output, shape index: {}]
  %s12 = sld [smem:[#allocation0]]
  $region85: #{pointnet_partseg_features.1} parent=0
    _
  %s14 = ssub.s32 1, %s12
  %s15 = scalar_select 0, %s14, %s12
  loop: start=0, step=1, limit=4
  $region2: #{pointnet_partseg_features.1} parent=0 // loop_pre_header
    _
  $region3: #{pointnet_partseg_features.1} parent=0 // loop_header
    %s17 = sphi 0, %s21
    %p18 = scmp.ge.s32.totalorder %s17, 4
    %s24 = sphi 0, %s36
    %s25 = sphi 0, %s32
    %s26 = sphi 0, %s24
    %s27 = sphi 0, %s25
    %s28 = sphi 0, %s26
    %s29 = sphi 0, %s27
    %s41 = sphi 0, %s43
    %s44 = sphi 0, %s41
    %s45 = sphi 0, %s44
    %s61 = sphi 0, %s45
    %s65 = sphi 0, %s65
    %s67 = sphi 0, %s65
    %s68 = sphi 0, %s67
    %s82 = sphi 0, %s68
    %s86 = sphi 0, %s86
    %s88 = sphi 0, %s86
    %s89 = sphi 0, %s88
    %s103 = sphi 0, %s89
    %s107 = sphi 0, %s107
    %s109 = sphi 0, %s107
    %s110 = sphi 0, %s109
    %s124 = sphi 0, %s110
    %s128 = sphi 0, %s128
    %s130 = sphi 0, %s128
    %s131 = sphi 0, %s130
    %s145 = sphi 0, %s131
    %s149 = sphi 0, %s149
    %s151 = sphi 0, %s149
    %s152 = sphi 0, %s151
    %s166 = sphi 0, %s152
    %s170 = sphi 0, %s170
    %s172 = sphi 0, %s170
    %s173 = sphi 0, %s172
    %s187 = sphi 0, %s173
    %s191 = sphi 0, %s191
    %s193 = sphi 0, %s191
    %s194 = sphi 0, %s193
    %s208 = sphi 0, %s194
    %s212 = sphi 0, %s212
    %s214 = sphi 0, %s212
    %s215 = sphi 0, %s214
    %s229 = sphi 0, %s215
    %s233 = sphi 0, %s233
    %s235 = sphi 0, %s233
    %s236 = sphi 0, %s235
    %s250 = sphi 0, %s236
    %s254 = sphi 0, %s254
    %s256 = sphi 0, %s254
    %s257 = sphi 0, %s256
    %s271 = sphi 0, %s257
    %s277 = sphi 0, %s279
    %s280 = sphi 0, %s277
    %s281 = sphi 0, %s280
    %s297 = sphi 0, %s281
  $region4: #{pointnet_partseg_features.1} parent=0 // loop_header_branch
    %20 = sbr.rel (%p18) target = $region8
  $region5: #{pointnet_partseg_features.1} parent=0 // loop_body
    %s22 = ssub.s32 %s17, 1
    %s23 = ssub.s32 %s17, 2
    %s30 = sadd.s32 1, %s25
    %p31 = scmp.ge.s32.totalorder %s30, 1
    %s32 = scalar_select %p31, 0, %s30
    %s33 = sadd.s32 1, %s24
    %s34 = scalar_select %p31, %s33, %s24
    %p35 = scmp.ge.s32.totalorder %s34, 2
    %s36 = scalar_select %p35, 0, %s34
    %s37 = ssub.s32 %s24, %s36
    %s38 = ssub.s32 %s25, %s32
    %s39 = sor.u32 %s37, %s38
    %p40 = scmp.eq.s32.totalorder %s39, 0
    %s42 = sadd.s32 %s41, 1
    %s43 = scalar_select %p40, %s41, %s42
    %p46 = pneg %p40
    %p47 = scmp.eq.s32.totalorder %s17, 1
    %p48 = por %p46, %p47
    %p49 = scmp.ne.s32.totalorder %s41, %s44
    %p50 = scmp.eq.s32.totalorder %s17, 0
    %p51 = por %p49, %p50
    %p52 = scmp.ne.s32.totalorder %s41, %s44
    %p53 = scmp.eq.s32.totalorder %s22, 1
    %p54 = por %p52, %p53
    %p55 = scmp.ne.s32.totalorder %s44, %s45
    %p56 = scmp.eq.s32.totalorder %s22, 0
    %p57 = por %p55, %p56
    %p58 = scmp.ne.s32.totalorder %s44, %s45
    %p59 = scmp.eq.s32.totalorder %s23, 1
    %p60 = por %p58, %p59
    %p62 = scmp.ne.s32.totalorder %s45, %s61
    %p63 = scmp.eq.s32.totalorder %s23, 0
    %p64 = por %p62, %p63
    %s66 = sadd.s32 %s65, 1
    %p69 = scmp.eq.s32.totalorder %s17, 1
    %p70 = scmp.ne.s32.totalorder %s65, %s67
    %p71 = scmp.eq.s32.totalorder %s17, 0
    %p72 = por %p70, %p71
    %p73 = scmp.ne.s32.totalorder %s65, %s67
    %p74 = scmp.eq.s32.totalorder %s22, 1
    %p75 = por %p73, %p74
    %p76 = scmp.ne.s32.totalorder %s67, %s68
    %p77 = scmp.eq.s32.totalorder %s22, 0
    %p78 = por %p76, %p77
    %p79 = scmp.ne.s32.totalorder %s67, %s68
    %p80 = scmp.eq.s32.totalorder %s23, 1
    %p81 = por %p79, %p80
    %p83 = scmp.ne.s32.totalorder %s68, %s82
    %p84 = scmp.eq.s32.totalorder %s23, 0
    %p85 = por %p83, %p84
    %s87 = sadd.s32 %s86, 1
    %p90 = scmp.eq.s32.totalorder %s17, 1
    %p91 = scmp.ne.s32.totalorder %s86, %s88
    %p92 = scmp.eq.s32.totalorder %s17, 0
    %p93 = por %p91, %p92
    %p94 = scmp.ne.s32.totalorder %s86, %s88
    %p95 = scmp.eq.s32.totalorder %s22, 1
    %p96 = por %p94, %p95
    %p97 = scmp.ne.s32.totalorder %s88, %s89
    %p98 = scmp.eq.s32.totalorder %s22, 0
    %p99 = por %p97, %p98
    %p100 = scmp.ne.s32.totalorder %s88, %s89
    %p101 = scmp.eq.s32.totalorder %s23, 1
    %p102 = por %p100, %p101
    %p104 = scmp.ne.s32.totalorder %s89, %s103
    %p105 = scmp.eq.s32.totalorder %s23, 0
    %p106 = por %p104, %p105
    %s108 = sadd.s32 %s107, 1
    %p111 = scmp.eq.s32.totalorder %s17, 1
    %p112 = scmp.ne.s32.totalorder %s107, %s109
    %p113 = scmp.eq.s32.totalorder %s17, 0
    %p114 = por %p112, %p113
    %p115 = scmp.ne.s32.totalorder %s107, %s109
    %p116 = scmp.eq.s32.totalorder %s22, 1
    %p117 = por %p115, %p116
    %p118 = scmp.ne.s32.totalorder %s109, %s110
    %p119 = scmp.eq.s32.totalorder %s22, 0
    %p120 = por %p118, %p119
    %p121 = scmp.ne.s32.totalorder %s109, %s110
    %p122 = scmp.eq.s32.totalorder %s23, 1
    %p123 = por %p121, %p122
    %p125 = scmp.ne.s32.totalorder %s110, %s124
    %p126 = scmp.eq.s32.totalorder %s23, 0
    %p127 = por %p125, %p126
    %s129 = sadd.s32 %s128, 1
    %p132 = scmp.eq.s32.totalorder %s17, 1
    %p133 = scmp.ne.s32.totalorder %s128, %s130
    %p134 = scmp.eq.s32.totalorder %s17, 0
    %p135 = por %p133, %p134
    %p136 = scmp.ne.s32.totalorder %s128, %s130
    %p137 = scmp.eq.s32.totalorder %s22, 1
    %p138 = por %p136, %p137
    %p139 = scmp.ne.s32.totalorder %s130, %s131
    %p140 = scmp.eq.s32.totalorder %s22, 0
    %p141 = por %p139, %p140
    %p142 = scmp.ne.s32.totalorder %s130, %s131
    %p143 = scmp.eq.s32.totalorder %s23, 1
    %p144 = por %p142, %p143
    %p146 = scmp.ne.s32.totalorder %s131, %s145
    %p147 = scmp.eq.s32.totalorder %s23, 0
    %p148 = por %p146, %p147
    %s150 = sadd.s32 %s149, 1
    %p153 = scmp.eq.s32.totalorder %s17, 1
    %p154 = scmp.ne.s32.totalorder %s149, %s151
    %p155 = scmp.eq.s32.totalorder %s17, 0
    %p156 = por %p154, %p155
    %p157 = scmp.ne.s32.totalorder %s149, %s151
    %p158 = scmp.eq.s32.totalorder %s22, 1
    %p159 = por %p157, %p158
    %p160 = scmp.ne.s32.totalorder %s151, %s152
    %p161 = scmp.eq.s32.totalorder %s22, 0
    %p162 = por %p160, %p161
    %p163 = scmp.ne.s32.totalorder %s151, %s152
    %p164 = scmp.eq.s32.totalorder %s23, 1
    %p165 = por %p163, %p164
    %p167 = scmp.ne.s32.totalorder %s152, %s166
    %p168 = scmp.eq.s32.totalorder %s23, 0
    %p169 = por %p167, %p168
    %s171 = sadd.s32 %s170, 1
    %p174 = scmp.eq.s32.totalorder %s17, 1
    %p175 = scmp.ne.s32.totalorder %s170, %s172
    %p176 = scmp.eq.s32.totalorder %s17, 0
    %p177 = por %p175, %p176
    %p178 = scmp.ne.s32.totalorder %s170, %s172
    %p179 = scmp.eq.s32.totalorder %s22, 1
    %p180 = por %p178, %p179
    %p181 = scmp.ne.s32.totalorder %s172, %s173
    %p182 = scmp.eq.s32.totalorder %s22, 0
    %p183 = por %p181, %p182
    %p184 = scmp.ne.s32.totalorder %s172, %s173
    %p185 = scmp.eq.s32.totalorder %s23, 1
    %p186 = por %p184, %p185
    %p188 = scmp.ne.s32.totalorder %s173, %s187
    %p189 = scmp.eq.s32.totalorder %s23, 0
    %p190 = por %p188, %p189
    %s192 = sadd.s32 %s191, 1
    %p195 = scmp.eq.s32.totalorder %s17, 1
    %p196 = scmp.ne.s32.totalorder %s191, %s193
    %p197 = scmp.eq.s32.totalorder %s17, 0
    %p198 = por %p196, %p197
    %p199 = scmp.ne.s32.totalorder %s191, %s193
    %p200 = scmp.eq.s32.totalorder %s22, 1
    %p201 = por %p199, %p200
    %p202 = scmp.ne.s32.totalorder %s193, %s194
    %p203 = scmp.eq.s32.totalorder %s22, 0
    %p204 = por %p202, %p203
    %p205 = scmp.ne.s32.totalorder %s193, %s194
    %p206 = scmp.eq.s32.totalorder %s23, 1
    %p207 = por %p205, %p206
    %p209 = scmp.ne.s32.totalorder %s194, %s208
    %p210 = scmp.eq.s32.totalorder %s23, 0
    %p211 = por %p209, %p210
    %s213 = sadd.s32 %s212, 1
    %p216 = scmp.eq.s32.totalorder %s17, 1
    %p217 = scmp.ne.s32.totalorder %s212, %s214
    %p218 = scmp.eq.s32.totalorder %s17, 0
    %p219 = por %p217, %p218
    %p220 = scmp.ne.s32.totalorder %s212, %s214
    %p221 = scmp.eq.s32.totalorder %s22, 1
    %p222 = por %p220, %p221
    %p223 = scmp.ne.s32.totalorder %s214, %s215
    %p224 = scmp.eq.s32.totalorder %s22, 0
    %p225 = por %p223, %p224
    %p226 = scmp.ne.s32.totalorder %s214, %s215
    %p227 = scmp.eq.s32.totalorder %s23, 1
    %p228 = por %p226, %p227
    %p230 = scmp.ne.s32.totalorder %s215, %s229
    %p231 = scmp.eq.s32.totalorder %s23, 0
    %p232 = por %p230, %p231
    %s234 = sadd.s32 %s233, 1
    %p237 = scmp.eq.s32.totalorder %s17, 1
    %p238 = scmp.ne.s32.totalorder %s233, %s235
    %p239 = scmp.eq.s32.totalorder %s17, 0
    %p240 = por %p238, %p239
    %p241 = scmp.ne.s32.totalorder %s233, %s235
    %p242 = scmp.eq.s32.totalorder %s22, 1
    %p243 = por %p241, %p242
    %p244 = scmp.ne.s32.totalorder %s235, %s236
    %p245 = scmp.eq.s32.totalorder %s22, 0
    %p246 = por %p244, %p245
    %p247 = scmp.ne.s32.totalorder %s235, %s236
    %p248 = scmp.eq.s32.totalorder %s23, 1
    %p249 = por %p247, %p248
    %p251 = scmp.ne.s32.totalorder %s236, %s250
    %p252 = scmp.eq.s32.totalorder %s23, 0
    %p253 = por %p251, %p252
    %s255 = sadd.s32 %s254, 1
    %p258 = scmp.eq.s32.totalorder %s17, 1
    %p259 = scmp.ne.s32.totalorder %s254, %s256
    %p260 = scmp.eq.s32.totalorder %s17, 0
    %p261 = por %p259, %p260
    %p262 = scmp.ne.s32.totalorder %s254, %s256
    %p263 = scmp.eq.s32.totalorder %s22, 1
    %p264 = por %p262, %p263
    %p265 = scmp.ne.s32.totalorder %s256, %s257
    %p266 = scmp.eq.s32.totalorder %s22, 0
    %p267 = por %p265, %p266
    %p268 = scmp.ne.s32.totalorder %s256, %s257
    %p269 = scmp.eq.s32.totalorder %s23, 1
    %p270 = por %p268, %p269
    %p272 = scmp.ne.s32.totalorder %s257, %s271
    %p273 = scmp.eq.s32.totalorder %s23, 0
    %p274 = por %p272, %p273
    %s275 = ssub.s32 %s24, %s36
    %p276 = scmp.eq.s32.totalorder %s275, 0
    %s278 = sadd.s32 %s277, 1
    %s279 = scalar_select %p276, %s277, %s278
    %p282 = pneg %p276
    %p283 = scmp.eq.s32.totalorder %s17, 1
    %p284 = por %p282, %p283
    %p285 = scmp.ne.s32.totalorder %s277, %s280
    %p286 = scmp.eq.s32.totalorder %s17, 0
    %p287 = por %p285, %p286
    %p288 = scmp.ne.s32.totalorder %s277, %s280
    %p289 = scmp.eq.s32.totalorder %s22, 1
    %p290 = por %p288, %p289
    %p291 = scmp.ne.s32.totalorder %s280, %s281
    %p292 = scmp.eq.s32.totalorder %s22, 0
    %p293 = por %p291, %p292
    %p294 = scmp.ne.s32.totalorder %s280, %s281
    %p295 = scmp.eq.s32.totalorder %s23, 1
    %p296 = por %p294, %p295
    %p298 = scmp.ne.s32.totalorder %s281, %s297
    %p299 = scmp.eq.s32.totalorder %s23, 0
    %p300 = por %p298, %p299
    %p301 = scmp.le.s32.totalorder 1, %s17
    %p302 = scmp.lt.s32.totalorder %s17, 3
    %p303 = pnand %p301, %p302
    %p304 = pneg %p303
    // Predicated region
    $region9: #{pointnet_partseg_features.1} parent=5 // pred_check
      _
    $region10: #{pointnet_partseg_features.1} parent=5 // pred_check_branch
      %306 = sbr.rel (%p303) target = $region12
    $region11: #{pointnet_partseg_features.1} parent=5 // pred_region
      %s307 = ssub.s32 %s17, 1
      // Predicated region
      $region13: #{pointnet_partseg_features.1} parent=11 // pred_check
        %p308 = pneg %p78
      $region14: #{pointnet_partseg_features.1} parent=11 // pred_check_branch
        %310 = sbr.rel (%p308) target = $region16
      $region15: #{pointnet_partseg_features.1} parent=11 // pred_region
        _
      $region16: #{pointnet_partseg_features.1} parent=11 // pred_fallthru
        _
      // Predicated region
      $region17: #{pointnet_partseg_features.1} parent=11 // pred_check
        %p311 = pneg %p99
      $region18: #{pointnet_partseg_features.1} parent=11 // pred_check_branch
        %313 = sbr.rel (%p311) target = $region20
      $region19: #{pointnet_partseg_features.1} parent=11 // pred_region
        _
      $region20: #{pointnet_partseg_features.1} parent=11 // pred_fallthru
        _
      // Predicated region
      $region21: #{pointnet_partseg_features.1} parent=11 // pred_check
        %p314 = pneg %p120
      $region22: #{pointnet_partseg_features.1} parent=11 // pred_check_branch
        %316 = sbr.rel (%p314) target = $region24
      $region23: #{pointnet_partseg_features.1} parent=11 // pred_region
        _
      $region24: #{pointnet_partseg_features.1} parent=11 // pred_fallthru
        _
      // Predicated region
      $region25: #{pointnet_partseg_features.1} parent=11 // pred_check
        %p317 = pneg %p141
      $region26: #{pointnet_partseg_features.1} parent=11 // pred_check_branch
        %319 = sbr.rel (%p317) target = $region28
      $region27: #{pointnet_partseg_features.1} parent=11 // pred_region
        _
      $region28: #{pointnet_partseg_features.1} parent=11 // pred_fallthru
        _
      // Predicated region
      $region29: #{pointnet_partseg_features.1} parent=11 // pred_check
        %p320 = pneg %p162
      $region30: #{pointnet_partseg_features.1} parent=11 // pred_check_branch
        %322 = sbr.rel (%p320) target = $region32
      $region31: #{pointnet_partseg_features.1} parent=11 // pred_region
        _
      $region32: #{pointnet_partseg_features.1} parent=11 // pred_fallthru
        _
      // Predicated region
      $region33: #{pointnet_partseg_features.1} parent=11 // pred_check
        %p323 = pneg %p183
      $region34: #{pointnet_partseg_features.1} parent=11 // pred_check_branch
        %325 = sbr.rel (%p323) target = $region36
      $region35: #{pointnet_partseg_features.1} parent=11 // pred_region
        _
      $region36: #{pointnet_partseg_features.1} parent=11 // pred_fallthru
        _
      // Predicated region
      $region37: #{pointnet_partseg_features.1} parent=11 // pred_check
        %p326 = pneg %p204
      $region38: #{pointnet_partseg_features.1} parent=11 // pred_check_branch
        %328 = sbr.rel (%p326) target = $region40
      $region39: #{pointnet_partseg_features.1} parent=11 // pred_region
        _
      $region40: #{pointnet_partseg_features.1} parent=11 // pred_fallthru
        _
      // Predicated region
      $region41: #{pointnet_partseg_features.1} parent=11 // pred_check
        %p329 = pneg %p225
      $region42: #{pointnet_partseg_features.1} parent=11 // pred_check_branch
        %331 = sbr.rel (%p329) target = $region44
      $region43: #{pointnet_partseg_features.1} parent=11 // pred_region
        _
      $region44: #{pointnet_partseg_features.1} parent=11 // pred_fallthru
        _
      // Predicated region
      $region45: #{pointnet_partseg_features.1} parent=11 // pred_check
        %p332 = pneg %p246
      $region46: #{pointnet_partseg_features.1} parent=11 // pred_check_branch
        %334 = sbr.rel (%p332) target = $region48
      $region47: #{pointnet_partseg_features.1} parent=11 // pred_region
        _
      $region48: #{pointnet_partseg_features.1} parent=11 // pred_fallthru
        _
      // Predicated region
      $region49: #{pointnet_partseg_features.1} parent=11 // pred_check
        %p335 = pneg %p267
      $region50: #{pointnet_partseg_features.1} parent=11 // pred_check_branch
        %337 = sbr.rel (%p335) target = $region52
      $region51: #{pointnet_partseg_features.1} parent=11 // pred_region
        _
      $region52: #{pointnet_partseg_features.1} parent=11 // pred_fallthru
        _
    $region12: #{pointnet_partseg_features.1} parent=5 // pred_fallthru
      _
    %p338 = scmp.lt.s32.totalorder %s17, 2
    // Predicated region
    $region53: #{pointnet_partseg_features.1} parent=5 // pred_check
      %p339 = pneg %p338
    $region54: #{pointnet_partseg_features.1} parent=5 // pred_check_branch
      %341 = sbr.rel (%p339) target = $region56
    $region55: #{pointnet_partseg_features.1} parent=5 // pred_region
      // Predicated region
      $region57: #{pointnet_partseg_features.1} parent=55 // pred_check
        %p342 = pneg %p51
      $region58: #{pointnet_partseg_features.1} parent=55 // pred_check_branch
        %344 = sbr.rel (%p342) target = $region60
      $region59: #{pointnet_partseg_features.1} parent=55 // pred_region
        %s345 = smul.u32 2, %s25
        %p346 = scmp.lt.s32.totalorder %s24, 1
        %s347 = scalar_select %p346, %s24, 1
        %p348 = scmp.lt.s32.totalorder %s345, 1
        %s349 = scalar_select %p348, %s345, 1
        %s350 = smul.addr %s347, 2
        %s351 = sadd.s32 %s349, %s350
        %s352 = smul.addr %s351, 4
        %s353 = scalar_lea.vmem %s0, %s352
        %s354 = smul.u32 2, %s25
      $region60: #{pointnet_partseg_features.1} parent=55 // pred_fallthru
        _
    $region56: #{pointnet_partseg_features.1} parent=5 // pred_fallthru
      _
    %p355 = scmp.le.s32.totalorder 1, %s17
    %p356 = scmp.lt.s32.totalorder %s17, 3
    %p357 = pnand %p355, %p356
    %p358 = pneg %p357
    // Predicated region
    $region61: #{pointnet_partseg_features.1} parent=5 // pred_check
      _
    $region62: #{pointnet_partseg_features.1} parent=5 // pred_check_branch
      %360 = sbr.rel (%p357) target = $region64
    $region63: #{pointnet_partseg_features.1} parent=5 // pred_region
      %s361 = ssub.s32 %s17, 1
      %s362 = smul.u32 2, %s27
      %p363 = scmp.lt.s32.totalorder %s26, 1
      %s364 = scalar_select %p363, %s26, 1
      %p365 = scmp.lt.s32.totalorder %s362, 1
      %s366 = scalar_select %p365, %s362, 1
      %s367 = smul.addr %s364, 2
      %s368 = sadd.s32 %s366, %s367
      %s369 = smul.addr %s368, 4
      %s370 = scalar_lea.vmem %s0, %s369
      %p371 = pneg %p57
      %p372 = pneg %p54
      %p373 = pneg %p78
      %p374 = pneg %p75
      %p375 = pneg %p99
      %p376 = pneg %p96
      %p377 = pneg %p120
      %p378 = pneg %p117
      %p379 = pneg %p141
      %p380 = pneg %p138
      %p381 = pneg %p162
      %p382 = pneg %p159
      %p383 = pneg %p183
      %p384 = pneg %p180
      %p385 = pneg %p204
      %p386 = pneg %p201
      %p387 = pneg %p225
      %p388 = pneg %p222
      %p389 = pneg %p246
      %p390 = pneg %p243
      %p391 = pneg %p267
      %p392 = pneg %p264
      %p393 = pneg %p293
      %p394 = pneg %p290
      %p395 = scmp.lt.s32.totalorder %s26, 1
      %s396 = scalar_select %p395, %s26, 1
      %s397 = smul.addr %s396, 128
      %s398 = smul.addr %s397, 8
      %s399 = scalar_lea.vmem %s11, %s398
      %s400 = smul.u32 2, %s27
      %p401 = scmp.lt.s32.totalorder %s26, 1
      %s402 = scalar_select %p401, %s26, 1
      %p403 = scmp.lt.s32.totalorder %s400, 1
      %s404 = scalar_select %p403, %s400, 1
      %s405 = smul.addr %s402, 2
      %s406 = sadd.s32 %s404, %s405
      %s407 = smul.addr %s406, 4
      %s408 = scalar_lea.vmem %s0, %s407
      %s409 = smul.u32 2, %s27
      %p410 = scmp.lt.s32.totalorder %s26, 1
      %s411 = scalar_select %p410, %s26, 1
      %s412 = smul.addr %s411, 128
      %s413 = smul.addr %s412, 8
      %s414 = scalar_lea.vmem %s11, %s413
      %v416 = vld [vmem:[%s408] sm:$0x77]
      %v417 = vld [vmem:[%s1] sm:$0xff]
      %v418 = vld [vmem:[%s1 + $0x8] sm:$0xff]
      %v419 = vld [vmem:[%s1 + $0x10] sm:$0xff]
      %v420 = vld [vmem:[%s1 + $0x18] sm:$0xff]
      %v421 = vld [vmem:[%s1 + $0x20] sm:$0xff]
      %v422 = vld [vmem:[%s1 + $0x28] sm:$0xff]
      %v423 = vld [vmem:[%s1 + $0x30] sm:$0xff]
      %v424 = vld [vmem:[%s1 + $0x38] sm:$0xff]
      %426 = vset.pattern.permute.xlu0 0
      %427 = vperm.xlu0 %426, %v417
      %v428 = vpop.permute.xlu0 %427
      %431 = vset.pattern.permute.xlu0 0
      %432 = vperm.xlu0 %431, %v418
      %v433 = vpop.permute.xlu0 %432
      %436 = vset.pattern.permute.xlu0 0
      %437 = vperm.xlu0 %436, %v419
      %v438 = vpop.permute.xlu0 %437
      %441 = vset.pattern.permute.xlu0 0
      %442 = vperm.xlu0 %441, %v420
      %v443 = vpop.permute.xlu0 %442
      %446 = vset.pattern.permute.xlu0 0
      %447 = vperm.xlu0 %446, %v421
      %v448 = vpop.permute.xlu0 %447
      %451 = vset.pattern.permute.xlu0 0
      %452 = vperm.xlu0 %451, %v422
      %v453 = vpop.permute.xlu0 %452
      %456 = vset.pattern.permute.xlu0 0
      %457 = vperm.xlu0 %456, %v423
      %v458 = vpop.permute.xlu0 %457
      %461 = vset.pattern.permute.xlu0 0
      %462 = vperm.xlu0 %461, %v424
      %v463 = vpop.permute.xlu0 %462
      %v466 = vlaneseq
      %v467 = vshrl.u32 %v466, 7
      %v468 = vsub.s32 0, %v467
      %v469 = vrot.slane %v416, %v468
      %v470 = vlaneseq
      %v471 = vshrl.u32 %v470, 7
      %v472 = vsub.s32 4, %v471
      %v473 = vrot.slane %v416, %v472
      %v476 = vlaneseq
      %v477 = vshrl.u32 %v476, 7
      %v478 = vsub.s32 0, %v477
      %v479 = vrot.slane %v469, %v478
      %v480 = vlaneseq
      %v481 = vshrl.u32 %v480, 7
      %v482 = vsub.s32 0, %v481
      %v483 = vrot.slane %v473, %v482
      %v484 = vmul.f32 %v428, %v479
      %v485 = vmul.f32 %v428, %v483
      %v486 = vmul.f32 %v433, %v479
      %v487 = vmul.f32 %v433, %v483
      %v488 = vmul.f32 %v438, %v479
      %v489 = vmul.f32 %v438, %v483
      %v490 = vmul.f32 %v443, %v479
      %v491 = vmul.f32 %v443, %v483
      %v492 = vmul.f32 %v448, %v479
      %v493 = vmul.f32 %v448, %v483
      %v494 = vmul.f32 %v453, %v479
      %v495 = vmul.f32 %v453, %v483
      %v496 = vmul.f32 %v458, %v479
      %v497 = vmul.f32 %v458, %v483
      %v498 = vmul.f32 %v463, %v479
      %v499 = vmul.f32 %v463, %v483
      %500 = vset.pattern.permute.xlu0 1
      %501 = vperm.xlu0 %500, %v417
      %v502 = vpop.permute.xlu0 %501
      %504 = vset.pattern.permute.xlu0 1
      %505 = vperm.xlu0 %504, %v418
      %v506 = vpop.permute.xlu0 %505
      %508 = vset.pattern.permute.xlu0 1
      %509 = vperm.xlu0 %508, %v419
      %v510 = vpop.permute.xlu0 %509
      %512 = vset.pattern.permute.xlu0 1
      %513 = vperm.xlu0 %512, %v420
      %v514 = vpop.permute.xlu0 %513
      %516 = vset.pattern.permute.xlu0 1
      %517 = vperm.xlu0 %516, %v421
      %v518 = vpop.permute.xlu0 %517
      %520 = vset.pattern.permute.xlu0 1
      %521 = vperm.xlu0 %520, %v422
      %v522 = vpop.permute.xlu0 %521
      %524 = vset.pattern.permute.xlu0 1
      %525 = vperm.xlu0 %524, %v423
      %v526 = vpop.permute.xlu0 %525
      %528 = vset.pattern.permute.xlu0 1
      %529 = vperm.xlu0 %528, %v424
      %v530 = vpop.permute.xlu0 %529
      %v532 = vlaneseq
      %v533 = vshrl.u32 %v532, 7
      %v534 = vsub.s32 1, %v533
      %v535 = vrot.slane %v416, %v534
      %v536 = vlaneseq
      %v537 = vshrl.u32 %v536, 7
      %v538 = vsub.s32 5, %v537
      %v539 = vrot.slane %v416, %v538
      %v542 = vlaneseq
      %v543 = vshrl.u32 %v542, 7
      %v544 = vsub.s32 1, %v543
      %v545 = vrot.slane %v535, %v544
      %v546 = vlaneseq
      %v547 = vshrl.u32 %v546, 7
      %v548 = vsub.s32 1, %v547
      %v549 = vrot.slane %v539, %v548
      %v550 = vmul.f32 %v502, %v545
      %v551 = vmul.f32 %v502, %v549
      %v552 = vmul.f32 %v506, %v545
      %v553 = vmul.f32 %v506, %v549
      %v554 = vmul.f32 %v510, %v545
      %v555 = vmul.f32 %v510, %v549
      %v556 = vmul.f32 %v514, %v545
      %v557 = vmul.f32 %v514, %v549
      %v558 = vmul.f32 %v518, %v545
      %v559 = vmul.f32 %v518, %v549
      %v560 = vmul.f32 %v522, %v545
      %v561 = vmul.f32 %v522, %v549
      %v562 = vmul.f32 %v526, %v545
      %v563 = vmul.f32 %v526, %v549
      %v564 = vmul.f32 %v530, %v545
      %v565 = vmul.f32 %v530, %v549
      %v566 = vadd.f32 %v484, %v550
      %v567 = vadd.f32 %v485, %v551
      %v568 = vadd.f32 %v486, %v552
      %v569 = vadd.f32 %v487, %v553
      %v570 = vadd.f32 %v488, %v554
      %v571 = vadd.f32 %v489, %v555
      %v572 = vadd.f32 %v490, %v556
      %v573 = vadd.f32 %v491, %v557
      %v574 = vadd.f32 %v492, %v558
      %v575 = vadd.f32 %v493, %v559
      %v576 = vadd.f32 %v494, %v560
      %v577 = vadd.f32 %v495, %v561
      %v578 = vadd.f32 %v496, %v562
      %v579 = vadd.f32 %v497, %v563
      %v580 = vadd.f32 %v498, %v564
      %v581 = vadd.f32 %v499, %v565
      %582 = vset.pattern.permute.xlu0 2
      %583 = vperm.xlu0 %582, %v417
      %v584 = vpop.permute.xlu0 %583
      %586 = vset.pattern.permute.xlu0 2
      %587 = vperm.xlu0 %586, %v418
      %v588 = vpop.permute.xlu0 %587
      %590 = vset.pattern.permute.xlu0 2
      %591 = vperm.xlu0 %590, %v419
      %v592 = vpop.permute.xlu0 %591
      %594 = vset.pattern.permute.xlu0 2
      %595 = vperm.xlu0 %594, %v420
      %v596 = vpop.permute.xlu0 %595
      %598 = vset.pattern.permute.xlu0 2
      %599 = vperm.xlu0 %598, %v421
      %v600 = vpop.permute.xlu0 %599
      %602 = vset.pattern.permute.xlu0 2
      %603 = vperm.xlu0 %602, %v422
      %v604 = vpop.permute.xlu0 %603
      %606 = vset.pattern.permute.xlu0 2
      %607 = vperm.xlu0 %606, %v423
      %v608 = vpop.permute.xlu0 %607
      %610 = vset.pattern.permute.xlu0 2
      %611 = vperm.xlu0 %610, %v424
      %v612 = vpop.permute.xlu0 %611
      %v614 = vlaneseq
      %v615 = vshrl.u32 %v614, 7
      %v616 = vsub.s32 2, %v615
      %v617 = vrot.slane %v416, %v616
      %v618 = vlaneseq
      %v619 = vshrl.u32 %v618, 7
      %v620 = vsub.s32 6, %v619
      %v621 = vrot.slane %v416, %v620
      %v624 = vlaneseq
      %v625 = vshrl.u32 %v624, 7
      %v626 = vsub.s32 2, %v625
      %v627 = vrot.slane %v617, %v626
      %v628 = vlaneseq
      %v629 = vshrl.u32 %v628, 7
      %v630 = vsub.s32 2, %v629
      %v631 = vrot.slane %v621, %v630
      %v632 = vmul.f32 %v584, %v627
      %v633 = vmul.f32 %v584, %v631
      %v634 = vmul.f32 %v588, %v627
      %v635 = vmul.f32 %v588, %v631
      %v636 = vmul.f32 %v592, %v627
      %v637 = vmul.f32 %v592, %v631
      %v638 = vmul.f32 %v596, %v627
      %v639 = vmul.f32 %v596, %v631
      %v640 = vmul.f32 %v600, %v627
      %v641 = vmul.f32 %v600, %v631
      %v642 = vmul.f32 %v604, %v627
      %v643 = vmul.f32 %v604, %v631
      %v644 = vmul.f32 %v608, %v627
      %v645 = vmul.f32 %v608, %v631
      %v646 = vmul.f32 %v612, %v627
      %v647 = vmul.f32 %v612, %v631
      %v648 = vadd.f32 %v566, %v632
      %v649 = vadd.f32 %v567, %v633
      %v650 = vadd.f32 %v568, %v634
      %v651 = vadd.f32 %v569, %v635
      %v652 = vadd.f32 %v570, %v636
      %v653 = vadd.f32 %v571, %v637
      %v654 = vadd.f32 %v572, %v638
      %v655 = vadd.f32 %v573, %v639
      %v656 = vadd.f32 %v574, %v640
      %v657 = vadd.f32 %v575, %v641
      %v658 = vadd.f32 %v576, %v642
      %v659 = vadd.f32 %v577, %v643
      %v660 = vadd.f32 %v578, %v644
      %v661 = vadd.f32 %v579, %v645
      %v662 = vadd.f32 %v580, %v646
      %v663 = vadd.f32 %v581, %v647
      %v664 = vld [vmem:[%s2] sm:$0xff]
      %v665 = vld [vmem:[%s2 + $0x8] sm:$0xff]
      %v666 = vld [vmem:[%s2 + $0x10] sm:$0xff]
      %v667 = vld [vmem:[%s2 + $0x18] sm:$0xff]
      %v668 = vld [vmem:[%s2 + $0x20] sm:$0xff]
      %v669 = vld [vmem:[%s2 + $0x28] sm:$0xff]
      %v670 = vld [vmem:[%s2 + $0x30] sm:$0xff]
      %v671 = vld [vmem:[%s2 + $0x38] sm:$0xff]
      %673 = vset.pattern.permute.xlu0 0
      %674 = vperm.xlu0 %673, %v664
      %v675 = vpop.permute.xlu0 %674
      %678 = vset.pattern.permute.xlu0 0
      %679 = vperm.xlu0 %678, %v665
      %v680 = vpop.permute.xlu0 %679
      %683 = vset.pattern.permute.xlu0 0
      %684 = vperm.xlu0 %683, %v666
      %v685 = vpop.permute.xlu0 %684
      %688 = vset.pattern.permute.xlu0 0
      %689 = vperm.xlu0 %688, %v667
      %v690 = vpop.permute.xlu0 %689
      %693 = vset.pattern.permute.xlu0 0
      %694 = vperm.xlu0 %693, %v668
      %v695 = vpop.permute.xlu0 %694
      %698 = vset.pattern.permute.xlu0 0
      %699 = vperm.xlu0 %698, %v669
      %v700 = vpop.permute.xlu0 %699
      %703 = vset.pattern.permute.xlu0 0
      %704 = vperm.xlu0 %703, %v670
      %v705 = vpop.permute.xlu0 %704
      %708 = vset.pattern.permute.xlu0 0
      %709 = vperm.xlu0 %708, %v671
      %v710 = vpop.permute.xlu0 %709
      %v712 = vadd.f32 %v648, %v675
      %v713 = vadd.f32 %v649, %v675
      %v714 = vadd.f32 %v650, %v680
      %v715 = vadd.f32 %v651, %v680
      %v716 = vadd.f32 %v652, %v685
      %v717 = vadd.f32 %v653, %v685
      %v718 = vadd.f32 %v654, %v690
      %v719 = vadd.f32 %v655, %v690
      %v720 = vadd.f32 %v656, %v695
      %v721 = vadd.f32 %v657, %v695
      %v722 = vadd.f32 %v658, %v700
      %v723 = vadd.f32 %v659, %v700
      %v724 = vadd.f32 %v660, %v705
      %v725 = vadd.f32 %v661, %v705
      %v726 = vadd.f32 %v662, %v710
      %v727 = vadd.f32 %v663, %v710
      %v728 = vmax.f32 %v712, 0.0
      %v729 = vmax.f32 %v713, 0.0
      %v730 = vmax.f32 %v714, 0.0
      %v731 = vmax.f32 %v715, 0.0
      %v732 = vmax.f32 %v716, 0.0
      %v733 = vmax.f32 %v717, 0.0
      %v734 = vmax.f32 %v718, 0.0
      %v735 = vmax.f32 %v719, 0.0
      %v736 = vmax.f32 %v720, 0.0
      %v737 = vmax.f32 %v721, 0.0
      %v738 = vmax.f32 %v722, 0.0
      %v739 = vmax.f32 %v723, 0.0
      %v740 = vmax.f32 %v724, 0.0
      %v741 = vmax.f32 %v725, 0.0
      %v742 = vmax.f32 %v726, 0.0
      %v743 = vmax.f32 %v727, 0.0
      %v744 = vpack.c.bf16 %v730, %v728
      %v745 = vpack.c.bf16 %v731, %v729
      %v746 = vpack.c.bf16 %v734, %v732
      %v747 = vpack.c.bf16 %v735, %v733
      %v748 = vpack.c.bf16 %v738, %v736
      %v749 = vpack.c.bf16 %v739, %v737
      %v750 = vpack.c.bf16 %v742, %v740
      %v751 = vpack.c.bf16 %v743, %v741
      %v752 = vld [vmem:[%s3] sm:$0xf]
      %v753 = vld [vmem:[%s3 + $0x4] sm:$0xf]
      %v754 = vld [vmem:[%s3 + $0x8] sm:$0xf]
      %v755 = vld [vmem:[%s3 + $0xc] sm:$0xf]
      %v756 = vld [vmem:[%s3 + $0x10] sm:$0xf]
      %v757 = vld [vmem:[%s3 + $0x14] sm:$0xf]
      %v758 = vld [vmem:[%s3 + $0x18] sm:$0xf]
      %v759 = vld [vmem:[%s3 + $0x1c] sm:$0xf]
      %v760 = vld [vmem:[%s4] sm:$0xff]
      %v761 = vld [vmem:[%s4 + $0x8] sm:$0xff]
      %v762 = vld [vmem:[%s4 + $0x10] sm:$0xff]
      %v763 = vld [vmem:[%s4 + $0x18] sm:$0xff]
      %v764 = vld [vmem:[%s4 + $0x20] sm:$0xff]
      %v765 = vld [vmem:[%s4 + $0x28] sm:$0xff]
      %v766 = vld [vmem:[%s4 + $0x30] sm:$0xff]
      %v767 = vld [vmem:[%s4 + $0x38] sm:$0xff]
      %769 = vset.pattern.permute.xlu0 0
      %770 = vperm.xlu0 %769, %v760
      %v771 = vpop.permute.xlu0 %770
      %774 = vset.pattern.permute.xlu0 0
      %775 = vperm.xlu0 %774, %v761
      %v776 = vpop.permute.xlu0 %775
      %779 = vset.pattern.permute.xlu0 0
      %780 = vperm.xlu0 %779, %v762
      %v781 = vpop.permute.xlu0 %780
      %784 = vset.pattern.permute.xlu0 0
      %785 = vperm.xlu0 %784, %v763
      %v786 = vpop.permute.xlu0 %785
      %789 = vset.pattern.permute.xlu0 0
      %790 = vperm.xlu0 %789, %v764
      %v791 = vpop.permute.xlu0 %790
      %794 = vset.pattern.permute.xlu0 0
      %795 = vperm.xlu0 %794, %v765
      %v796 = vpop.permute.xlu0 %795
      %799 = vset.pattern.permute.xlu0 0
      %800 = vperm.xlu0 %799, %v766
      %v801 = vpop.permute.xlu0 %800
      %804 = vset.pattern.permute.xlu0 0
      %805 = vperm.xlu0 %804, %v767
      %v806 = vpop.permute.xlu0 %805
      %v816 = vunpack.c.l.b16 %v752
      %v817 = vunpack.c.l.b16 %v753
      %v818 = vunpack.c.l.b16 %v754
      %v819 = vunpack.c.l.b16 %v755
      %v820 = vunpack.c.l.b16 %v756
      %v821 = vunpack.c.l.b16 %v757
      %v822 = vunpack.c.l.b16 %v758
      %v823 = vunpack.c.l.b16 %v759
      %v824 = vpack.c.b16 %v817, %v816
      %v825 = vpack.c.b16 %v819, %v818
      %v826 = vpack.c.b16 %v821, %v820
      %v827 = vpack.c.b16 %v823, %v822
      %vm828 = vcmask 523264
      %v830 = vsel %vm828, %v824, 0
      %v833 = vsel %vm828, %v825, 0
      %v836 = vsel %vm828, %v826, 0
      %v839 = vsel %vm828, %v827, 0
      %841 = vmatprep.subr.bf16.mxu0 %v745
      %842 = vmatpush1.bf16.msra.mxu0 %v744
      %843 = vmatprep.subr.bf16.mxu0 %v747
      %844 = vmatpush1.bf16.msra.mxu0 %v746
      %845 = vmatprep.subr.bf16.mxu0 %v749
      %846 = vmatpush1.bf16.msra.mxu0 %v748
      %847 = vmatprep.subr.bf16.mxu0 %v751
      %848 = vmatpush1.bf16.msra.mxu0 %v750
      %849 = vmatprep.subr.bf16.mxu0 0
      %850 = vmatpush1.bf16.msra.mxu0 0
      %851 = vmatprep.subr.bf16.mxu0 0
      %852 = vmatpush1.bf16.msra.mxu0 0
      %853 = vmatprep.subr.bf16.mxu0 0
      %854 = vmatpush1.bf16.msra.mxu0 0
      %855 = vmatprep.subr.bf16.mxu0 0
      %856 = vmatpush1.bf16.msra.mxu0 0
      %857 = vmatprep.subr.bf16.mxu0 0
      %858 = vmatpush1.bf16.msra.mxu0 0
      %859 = vmatprep.subr.bf16.mxu0 0
      %860 = vmatpush1.bf16.msra.mxu0 0
      %861 = vmatprep.subr.bf16.mxu0 0
      %862 = vmatpush1.bf16.msra.mxu0 0
      %863 = vmatprep.subr.bf16.mxu0 0
      %864 = vmatpush1.bf16.msra.mxu0 0
      %865 = vmatprep.subr.bf16.mxu0 0
      %866 = vmatpush1.bf16.msra.mxu0 0
      %867 = vmatprep.subr.bf16.mxu0 0
      %868 = vmatpush1.bf16.msra.mxu0 0
      %869 = vmatprep.subr.bf16.mxu0 0
      %870 = vmatpush1.bf16.msra.mxu0 0
      %871 = vmatprep.subr.bf16.mxu0 0
      %872 = vmatpush1.bf16.msra.mxu0 0
      %873 = vmatprep.mubr.bf16.mxu0 0
      %874 = vmatmul.mubr.bf16.gmra.mrb[0].mxu0 %v830
      %v875 = vpop.f32.mrb[0].mxu0
      %v876 = vadd.f32 %v771, %v875
      %v877 = vpop.f32.mrb[0].mxu0
      %v878 = vadd.f32 %v771, %v877
      %v879 = vpop.f32.mrb[0].mxu0
      %v880 = vadd.f32 %v776, %v879
      %v881 = vpop.f32.mrb[0].mxu0
      %v882 = vadd.f32 %v776, %v881
      %883 = vmatprep.mubr.bf16.mxu0 0
      %884 = vmatmul.mubr.bf16.gmra.mrb[0].mxu0 %v833
      %v885 = vpop.f32.mrb[0].mxu0
      %v886 = vadd.f32 %v781, %v885
      %v887 = vpop.f32.mrb[0].mxu0
      %v888 = vadd.f32 %v781, %v887
      %v889 = vpop.f32.mrb[0].mxu0
      %v890 = vadd.f32 %v786, %v889
      %v891 = vpop.f32.mrb[0].mxu0
      %v892 = vadd.f32 %v786, %v891
      %893 = vmatprep.mubr.bf16.mxu0 0
      %894 = vmatmul.mubr.bf16.gmra.mrb[0].mxu0 %v836
      %v895 = vpop.f32.mrb[0].mxu0
      %v896 = vadd.f32 %v791, %v895
      %v897 = vpop.f32.mrb[0].mxu0
      %v898 = vadd.f32 %v791, %v897
      %v899 = vpop.f32.mrb[0].mxu0
      %v900 = vadd.f32 %v796, %v899
      %v901 = vpop.f32.mrb[0].mxu0
      %v902 = vadd.f32 %v796, %v901
      %903 = vmatprep.mubr.bf16.mxu0 0
      %904 = vmatmul.mubr.bf16.gmra.mrb[0].mxu0 %v839
      %v905 = vpop.f32.mrb[0].mxu0
      %v906 = vadd.f32 %v801, %v905
      %v907 = vpop.f32.mrb[0].mxu0
      %v908 = vadd.f32 %v801, %v907
      %v909 = vpop.f32.mrb[0].mxu0
      %v910 = vadd.f32 %v806, %v909
      %v911 = vpop.f32.mrb[0].mxu0
      %v912 = vadd.f32 %v806, %v911
      %913 = vdwg.mxu0
      %v914 = vmax.f32 %v876, 0.0
      %v915 = vmax.f32 %v878, 0.0
      %v916 = vmax.f32 %v880, 0.0
      %v917 = vmax.f32 %v882, 0.0
      %v918 = vmax.f32 %v886, 0.0
      %v919 = vmax.f32 %v888, 0.0
      %v920 = vmax.f32 %v890, 0.0
      %v921 = vmax.f32 %v892, 0.0
      %v922 = vmax.f32 %v896, 0.0
      %v923 = vmax.f32 %v898, 0.0
      %v924 = vmax.f32 %v900, 0.0
      %v925 = vmax.f32 %v902, 0.0
      %v926 = vmax.f32 %v906, 0.0
      %v927 = vmax.f32 %v908, 0.0
      %v928 = vmax.f32 %v910, 0.0
      %v929 = vmax.f32 %v912, 0.0
      %v930 = vpack.c.bf16 %v916, %v914
      %v931 = vpack.c.bf16 %v917, %v915
      %v932 = vpack.c.bf16 %v920, %v918
      %v933 = vpack.c.bf16 %v921, %v919
      %v934 = vpack.c.bf16 %v924, %v922
      %v935 = vpack.c.bf16 %v925, %v923
      %v936 = vpack.c.bf16 %v928, %v926
      %v937 = vpack.c.bf16 %v929, %v927
      %v938 = vld [vmem:[%s5] sm:$0xf]
      %v939 = vld [vmem:[%s5 + $0x4] sm:$0xf]
      %v940 = vld [vmem:[%s5 + $0x8] sm:$0xf]
      %v941 = vld [vmem:[%s5 + $0xc] sm:$0xf]
      %v942 = vld [vmem:[%s5 + $0x10] sm:$0xf]
      %v943 = vld [vmem:[%s5 + $0x14] sm:$0xf]
      %v944 = vld [vmem:[%s5 + $0x18] sm:$0xf]
      %v945 = vld [vmem:[%s5 + $0x1c] sm:$0xf]
      %v946 = vld [vmem:[%s6] sm:$0xff]
      %v947 = vld [vmem:[%s6 + $0x8] sm:$0xff]
      %v948 = vld [vmem:[%s6 + $0x10] sm:$0xff]
      %v949 = vld [vmem:[%s6 + $0x18] sm:$0xff]
      %v950 = vld [vmem:[%s6 + $0x20] sm:$0xff]
      %v951 = vld [vmem:[%s6 + $0x28] sm:$0xff]
      %v952 = vld [vmem:[%s6 + $0x30] sm:$0xff]
      %v953 = vld [vmem:[%s6 + $0x38] sm:$0xff]
      %955 = vset.pattern.permute.xlu0 0
      %956 = vperm.xlu0 %955, %v946
      %v957 = vpop.permute.xlu0 %956
      %960 = vset.pattern.permute.xlu0 0
      %961 = vperm.xlu0 %960, %v947
      %v962 = vpop.permute.xlu0 %961
      %965 = vset.pattern.permute.xlu0 0
      %966 = vperm.xlu0 %965, %v948
      %v967 = vpop.permute.xlu0 %966
      %970 = vset.pattern.permute.xlu0 0
      %971 = vperm.xlu0 %970, %v949
      %v972 = vpop.permute.xlu0 %971
      %975 = vset.pattern.permute.xlu0 0
      %976 = vperm.xlu0 %975, %v950
      %v977 = vpop.permute.xlu0 %976
      %980 = vset.pattern.permute.xlu0 0
      %981 = vperm.xlu0 %980, %v951
      %v982 = vpop.permute.xlu0 %981
      %985 = vset.pattern.permute.xlu0 0
      %986 = vperm.xlu0 %985, %v952
      %v987 = vpop.permute.xlu0 %986
      %990 = vset.pattern.permute.xlu0 0
      %991 = vperm.xlu0 %990, %v953
      %v992 = vpop.permute.xlu0 %991
      %v1002 = vunpack.c.l.b16 %v938
      %v1003 = vunpack.c.l.b16 %v939
      %v1004 = vunpack.c.l.b16 %v940
      %v1005 = vunpack.c.l.b16 %v941
      %v1006 = vunpack.c.l.b16 %v942
      %v1007 = vunpack.c.l.b16 %v943
      %v1008 = vunpack.c.l.b16 %v944
      %v1009 = vunpack.c.l.b16 %v945
      %v1010 = vpack.c.b16 %v1003, %v1002
      %v1011 = vpack.c.b16 %v1005, %v1004
      %v1012 = vpack.c.b16 %v1007, %v1006
      %v1013 = vpack.c.b16 %v1009, %v1008
      %v1015 = vsel %vm828, %v1010, 0
      %v1018 = vsel %vm828, %v1011, 0
      %v1021 = vsel %vm828, %v1012, 0
      %v1024 = vsel %vm828, %v1013, 0
      %1026 = vmatprep.subr.bf16.mxu0 %v931
      %1027 = vmatpush1.bf16.msra.mxu0 %v930
      %1028 = vmatprep.subr.bf16.mxu0 %v933
      %1029 = vmatpush1.bf16.msra.mxu0 %v932
      %1030 = vmatprep.subr.bf16.mxu0 %v935
      %1031 = vmatpush1.bf16.msra.mxu0 %v934
      %1032 = vmatprep.subr.bf16.mxu0 %v937
      %1033 = vmatpush1.bf16.msra.mxu0 %v936
      %1034 = vmatprep.subr.bf16.mxu0 0
      %1035 = vmatpush1.bf16.msra.mxu0 0
      %1036 = vmatprep.subr.bf16.mxu0 0
      %1037 = vmatpush1.bf16.msra.mxu0 0
      %1038 = vmatprep.subr.bf16.mxu0 0
      %1039 = vmatpush1.bf16.msra.mxu0 0
      %1040 = vmatprep.subr.bf16.mxu0 0
      %1041 = vmatpush1.bf16.msra.mxu0 0
      %1042 = vmatprep.subr.bf16.mxu0 0
      %1043 = vmatpush1.bf16.msra.mxu0 0
      %1044 = vmatprep.subr.bf16.mxu0 0
      %1045 = vmatpush1.bf16.msra.mxu0 0
      %1046 = vmatprep.subr.bf16.mxu0 0
      %1047 = vmatpush1.bf16.msra.mxu0 0
      %1048 = vmatprep.subr.bf16.mxu0 0
      %1049 = vmatpush1.bf16.msra.mxu0 0
      %1050 = vmatprep.subr.bf16.mxu0 0
      %1051 = vmatpush1.bf16.msra.mxu0 0
      %1052 = vmatprep.subr.bf16.mxu0 0
      %1053 = vmatpush1.bf16.msra.mxu0 0
      %1054 = vmatprep.subr.bf16.mxu0 0
      %1055 = vmatpush1.bf16.msra.mxu0 0
      %1056 = vmatprep.subr.bf16.mxu0 0
      %1057 = vmatpush1.bf16.msra.mxu0 0
      %1058 = vmatprep.mubr.bf16.mxu0 0
      %1059 = vmatmul.mubr.bf16.gmra.mrb[0].mxu0 %v1015
      %v1060 = vpop.f32.mrb[0].mxu0
      %v1061 = vadd.f32 %v957, %v1060
      %v1062 = vpop.f32.mrb[0].mxu0
      %v1063 = vadd.f32 %v957, %v1062
      %v1064 = vpop.f32.mrb[0].mxu0
      %v1065 = vadd.f32 %v962, %v1064
      %v1066 = vpop.f32.mrb[0].mxu0
      %v1067 = vadd.f32 %v962, %v1066
      %1068 = vmatprep.mubr.bf16.mxu0 0
      %1069 = vmatmul.mubr.bf16.gmra.mrb[0].mxu0 %v1018
      %v1070 = vpop.f32.mrb[0].mxu0
      %v1071 = vadd.f32 %v967, %v1070
      %v1072 = vpop.f32.mrb[0].mxu0
      %v1073 = vadd.f32 %v967, %v1072
      %v1074 = vpop.f32.mrb[0].mxu0
      %v1075 = vadd.f32 %v972, %v1074
      %v1076 = vpop.f32.mrb[0].mxu0
      %v1077 = vadd.f32 %v972, %v1076
      %1078 = vmatprep.mubr.bf16.mxu0 0
      %1079 = vmatmul.mubr.bf16.gmra.mrb[0].mxu0 %v1021
      %v1080 = vpop.f32.mrb[0].mxu0
      %v1081 = vadd.f32 %v977, %v1080
      %v1082 = vpop.f32.mrb[0].mxu0
      %v1083 = vadd.f32 %v977, %v1082
      %v1084 = vpop.f32.mrb[0].mxu0
      %v1085 = vadd.f32 %v982, %v1084
      %v1086 = vpop.f32.mrb[0].mxu0
      %v1087 = vadd.f32 %v982, %v1086
      %1088 = vmatprep.mubr.bf16.mxu0 0
      %1089 = vmatmul.mubr.bf16.gmra.mrb[0].mxu0 %v1024
      %v1090 = vpop.f32.mrb[0].mxu0
      %v1091 = vadd.f32 %v987, %v1090
      %v1092 = vpop.f32.mrb[0].mxu0
      %v1093 = vadd.f32 %v987, %v1092
      %v1094 = vpop.f32.mrb[0].mxu0
      %v1095 = vadd.f32 %v992, %v1094
      %v1096 = vpop.f32.mrb[0].mxu0
      %v1097 = vadd.f32 %v992, %v1096
      %1098 = vdwg.mxu0
      %v1099 = vmax.f32 %v1061, 0.0
      %v1100 = vmax.f32 %v1063, 0.0
      %v1101 = vmax.f32 %v1065, 0.0
      %v1102 = vmax.f32 %v1067, 0.0
      %v1103 = vmax.f32 %v1071, 0.0
      %v1104 = vmax.f32 %v1073, 0.0
      %v1105 = vmax.f32 %v1075, 0.0
      %v1106 = vmax.f32 %v1077, 0.0
      %v1107 = vmax.f32 %v1081, 0.0
      %v1108 = vmax.f32 %v1083, 0.0
      %v1109 = vmax.f32 %v1085, 0.0
      %v1110 = vmax.f32 %v1087, 0.0
      %v1111 = vmax.f32 %v1091, 0.0
      %v1112 = vmax.f32 %v1093, 0.0
      %v1113 = vmax.f32 %v1095, 0.0
      %v1114 = vmax.f32 %v1097, 0.0
      %v1115 = vpack.c.bf16 %v1101, %v1099
      %v1116 = vpack.c.bf16 %v1102, %v1100
      %v1117 = vpack.c.bf16 %v1105, %v1103
      %v1118 = vpack.c.bf16 %v1106, %v1104
      %v1119 = vpack.c.bf16 %v1109, %v1107
      %v1120 = vpack.c.bf16 %v1110, %v1108
      %v1121 = vpack.c.bf16 %v1113, %v1111
      %v1122 = vpack.c.bf16 %v1114, %v1112
      %v1123 = vld [vmem:[%s7] sm:$0xf]
      %v1124 = vld [vmem:[%s7 + $0x4] sm:$0xf]
      %v1125 = vld [vmem:[%s7 + $0x8] sm:$0xf]
      %v1126 = vld [vmem:[%s7 + $0xc] sm:$0xf]
      %v1127 = vld [vmem:[%s7 + $0x10] sm:$0xf]
      %v1128 = vld [vmem:[%s7 + $0x14] sm:$0xf]
      %v1129 = vld [vmem:[%s7 + $0x18] sm:$0xf]
      %v1130 = vld [vmem:[%s7 + $0x1c] sm:$0xf]
      %v1131 = vld [vmem:[%s7 + $0x20] sm:$0xf]
      %v1132 = vld [vmem:[%s7 + $0x24] sm:$0xf]
      %v1133 = vld [vmem:[%s7 + $0x28] sm:$0xf]
      %v1134 = vld [vmem:[%s7 + $0x2c] sm:$0xf]
      %v1135 = vld [vmem:[%s7 + $0x30] sm:$0xf]
      %v1136 = vld [vmem:[%s7 + $0x34] sm:$0xf]
      %v1137 = vld [vmem:[%s7 + $0x38] sm:$0xf]
      %v1138 = vld [vmem:[%s7 + $0x3c] sm:$0xf]
      %v1139 = vld [vmem:[%s8] sm:$0xff]
      %v1140 = vld [vmem:[%s8 + $0x8] sm:$0xff]
      %v1141 = vld [vmem:[%s8 + $0x10] sm:$0xff]
      %v1142 = vld [vmem:[%s8 + $0x18] sm:$0xff]
      %v1143 = vld [vmem:[%s8 + $0x20] sm:$0xff]
      %v1144 = vld [vmem:[%s8 + $0x28] sm:$0xff]
      %v1145 = vld [vmem:[%s8 + $0x30] sm:$0xff]
      %v1146 = vld [vmem:[%s8 + $0x38] sm:$0xff]
      %v1147 = vld [vmem:[%s8 + $0x40] sm:$0xff]
      %v1148 = vld [vmem:[%s8 + $0x48] sm:$0xff]
      %v1149 = vld [vmem:[%s8 + $0x50] sm:$0xff]
      %v1150 = vld [vmem:[%s8 + $0x58] sm:$0xff]
      %v1151 = vld [vmem:[%s8 + $0x60] sm:$0xff]
      %v1152 = vld [vmem:[%s8 + $0x68] sm:$0xff]
      %v1153 = vld [vmem:[%s8 + $0x70] sm:$0xff]
      %v1154 = vld [vmem:[%s8 + $0x78] sm:$0xff]
      %1156 = vset.pattern.permute.xlu0 0
      %1157 = vperm.xlu0 %1156, %v1139
      %v1158 = vpop.permute.xlu0 %1157
      %1161 = vset.pattern.permute.xlu0 0
      %1162 = vperm.xlu0 %1161, %v1140
      %v1163 = vpop.permute.xlu0 %1162
      %1166 = vset.pattern.permute.xlu0 0
      %1167 = vperm.xlu0 %1166, %v1141
      %v1168 = vpop.permute.xlu0 %1167
      %1171 = vset.pattern.permute.xlu0 0
      %1172 = vperm.xlu0 %1171, %v1142
      %v1173 = vpop.permute.xlu0 %1172
      %1176 = vset.pattern.permute.xlu0 0
      %1177 = vperm.xlu0 %1176, %v1143
      %v1178 = vpop.permute.xlu0 %1177
      %1181 = vset.pattern.permute.xlu0 0
      %1182 = vperm.xlu0 %1181, %v1144
      %v1183 = vpop.permute.xlu0 %1182
      %1186 = vset.pattern.permute.xlu0 0
      %1187 = vperm.xlu0 %1186, %v1145
      %v1188 = vpop.permute.xlu0 %1187
      %1191 = vset.pattern.permute.xlu0 0
      %1192 = vperm.xlu0 %1191, %v1146
      %v1193 = vpop.permute.xlu0 %1192
      %1196 = vset.pattern.permute.xlu0 0
      %1197 = vperm.xlu0 %1196, %v1147
      %v1198 = vpop.permute.xlu0 %1197
      %1201 = vset.pattern.permute.xlu0 0
      %1202 = vperm.xlu0 %1201, %v1148
      %v1203 = vpop.permute.xlu0 %1202
      %1206 = vset.pattern.permute.xlu0 0
      %1207 = vperm.xlu0 %1206, %v1149
      %v1208 = vpop.permute.xlu0 %1207
      %1211 = vset.pattern.permute.xlu0 0
      %1212 = vperm.xlu0 %1211, %v1150
      %v1213 = vpop.permute.xlu0 %1212
      %1216 = vset.pattern.permute.xlu0 0
      %1217 = vperm.xlu0 %1216, %v1151
      %v1218 = vpop.permute.xlu0 %1217
      %1221 = vset.pattern.permute.xlu0 0
      %1222 = vperm.xlu0 %1221, %v1152
      %v1223 = vpop.permute.xlu0 %1222
      %1226 = vset.pattern.permute.xlu0 0
      %1227 = vperm.xlu0 %1226, %v1153
      %v1228 = vpop.permute.xlu0 %1227
      %1231 = vset.pattern.permute.xlu0 0
      %1232 = vperm.xlu0 %1231, %v1154
      %v1233 = vpop.permute.xlu0 %1232
      %v1251 = vunpack.c.l.b16 %v1123
      %v1252 = vunpack.c.l.b16 %v1124
      %v1253 = vunpack.c.l.b16 %v1125
      %v1254 = vunpack.c.l.b16 %v1126
      %v1255 = vunpack.c.l.b16 %v1127
      %v1256 = vunpack.c.l.b16 %v1128
      %v1257 = vunpack.c.l.b16 %v1129
      %v1258 = vunpack.c.l.b16 %v1130
      %v1259 = vunpack.c.l.b16 %v1131
      %v1260 = vunpack.c.l.b16 %v1132
      %v1261 = vunpack.c.l.b16 %v1133
      %v1262 = vunpack.c.l.b16 %v1134
      %v1263 = vunpack.c.l.b16 %v1135
      %v1264 = vunpack.c.l.b16 %v1136
      %v1265 = vunpack.c.l.b16 %v1137
      %v1266 = vunpack.c.l.b16 %v1138
      %v1267 = vpack.c.b16 %v1252, %v1251
      %v1268 = vpack.c.b16 %v1254, %v1253
      %v1269 = vpack.c.b16 %v1256, %v1255
      %v1270 = vpack.c.b16 %v1258, %v1257
      %v1271 = vpack.c.b16 %v1260, %v1259
      %v1272 = vpack.c.b16 %v1262, %v1261
      %v1273 = vpack.c.b16 %v1264, %v1263
      %v1274 = vpack.c.b16 %v1266, %v1265
      %v1276 = vsel %vm828, %v1267, 0
      %v1279 = vsel %vm828, %v1268, 0
      %v1282 = vsel %vm828, %v1269, 0
      %v1285 = vsel %vm828, %v1270, 0
      %v1288 = vsel %vm828, %v1271, 0
      %v1291 = vsel %vm828, %v1272, 0
      %v1294 = vsel %vm828, %v1273, 0
      %v1297 = vsel %vm828, %v1274, 0
      %1299 = vmatprep.subr.bf16.mxu0 %v1116
      %1300 = vmatpush1.bf16.msra.mxu0 %v1115
      %1301 = vmatprep.subr.bf16.mxu0 %v1118
      %1302 = vmatpush1.bf16.msra.mxu0 %v1117
      %1303 = vmatprep.subr.bf16.mxu0 %v1120
      %1304 = vmatpush1.bf16.msra.mxu0 %v1119
      %1305 = vmatprep.subr.bf16.mxu0 %v1122
      %1306 = vmatpush1.bf16.msra.mxu0 %v1121
      %1307 = vmatprep.subr.bf16.mxu0 0
      %1308 = vmatpush1.bf16.msra.mxu0 0
      %1309 = vmatprep.subr.bf16.mxu0 0
      %1310 = vmatpush1.bf16.msra.mxu0 0
      %1311 = vmatprep.subr.bf16.mxu0 0
      %1312 = vmatpush1.bf16.msra.mxu0 0
      %1313 = vmatprep.subr.bf16.mxu0 0
      %1314 = vmatpush1.bf16.msra.mxu0 0
      %1315 = vmatprep.subr.bf16.mxu0 0
      %1316 = vmatpush1.bf16.msra.mxu0 0
      %1317 = vmatprep.subr.bf16.mxu0 0
      %1318 = vmatpush1.bf16.msra.mxu0 0
      %1319 = vmatprep.subr.bf16.mxu0 0
      %1320 = vmatpush1.bf16.msra.mxu0 0
      %1321 = vmatprep.subr.bf16.mxu0 0
      %1322 = vmatpush1.bf16.msra.mxu0 0
      %1323 = vmatprep.subr.bf16.mxu0 0
      %1324 = vmatpush1.bf16.msra.mxu0 0
      %1325 = vmatprep.subr.bf16.mxu0 0
      %1326 = vmatpush1.bf16.msra.mxu0 0
      %1327 = vmatprep.subr.bf16.mxu0 0
      %1328 = vmatpush1.bf16.msra.mxu0 0
      %1329 = vmatprep.subr.bf16.mxu0 0
      %1330 = vmatpush1.bf16.msra.mxu0 0
      %1331 = vmatprep.mubr.bf16.mxu0 0
      %1332 = vmatmul.mubr.bf16.gmra.mrb[0].mxu0 %v1276
      %v1333 = vpop.f32.mrb[0].mxu0
      %v1334 = vadd.f32 %v1158, %v1333
      %v1335 = vpop.f32.mrb[0].mxu0
      %v1336 = vadd.f32 %v1158, %v1335
      %v1337 = vpop.f32.mrb[0].mxu0
      %v1338 = vadd.f32 %v1163, %v1337
      %v1339 = vpop.f32.mrb[0].mxu0
      %v1340 = vadd.f32 %v1163, %v1339
      %1341 = vmatprep.mubr.bf16.mxu0 0
      %1342 = vmatmul.mubr.bf16.gmra.mrb[0].mxu0 %v1279
      %v1343 = vpop.f32.mrb[0].mxu0
      %v1344 = vadd.f32 %v1168, %v1343
      %v1345 = vpop.f32.mrb[0].mxu0
      %v1346 = vadd.f32 %v1168, %v1345
      %v1347 = vpop.f32.mrb[0].mxu0
      %v1348 = vadd.f32 %v1173, %v1347
      %v1349 = vpop.f32.mrb[0].mxu0
      %v1350 = vadd.f32 %v1173, %v1349
      %1351 = vmatprep.mubr.bf16.mxu0 0
      %1352 = vmatmul.mubr.bf16.gmra.mrb[0].mxu0 %v1282
      %v1353 = vpop.f32.mrb[0].mxu0
      %v1354 = vadd.f32 %v1178, %v1353
      %v1355 = vpop.f32.mrb[0].mxu0
      %v1356 = vadd.f32 %v1178, %v1355
      %v1357 = vpop.f32.mrb[0].mxu0
      %v1358 = vadd.f32 %v1183, %v1357
      %v1359 = vpop.f32.mrb[0].mxu0
      %v1360 = vadd.f32 %v1183, %v1359
      %1361 = vmatprep.mubr.bf16.mxu0 0
      %1362 = vmatmul.mubr.bf16.gmra.mrb[0].mxu0 %v1285
      %v1363 = vpop.f32.mrb[0].mxu0
      %v1364 = vadd.f32 %v1188, %v1363
      %v1365 = vpop.f32.mrb[0].mxu0
      %v1366 = vadd.f32 %v1188, %v1365
      %v1367 = vpop.f32.mrb[0].mxu0
      %v1368 = vadd.f32 %v1193, %v1367
      %v1369 = vpop.f32.mrb[0].mxu0
      %v1370 = vadd.f32 %v1193, %v1369
      %1371 = vmatprep.mubr.bf16.mxu0 0
      %1372 = vmatmul.mubr.bf16.gmra.mrb[0].mxu0 %v1288
      %v1373 = vpop.f32.mrb[0].mxu0
      %v1374 = vadd.f32 %v1198, %v1373
      %v1375 = vpop.f32.mrb[0].mxu0
      %v1376 = vadd.f32 %v1198, %v1375
      %v1377 = vpop.f32.mrb[0].mxu0
      %v1378 = vadd.f32 %v1203, %v1377
      %v1379 = vpop.f32.mrb[0].mxu0
      %v1380 = vadd.f32 %v1203, %v1379
      %1381 = vmatprep.mubr.bf16.mxu0 0
      %1382 = vmatmul.mubr.bf16.gmra.mrb[0].mxu0 %v1291
      %v1383 = vpop.f32.mrb[0].mxu0
      %v1384 = vadd.f32 %v1208, %v1383
      %v1385 = vpop.f32.mrb[0].mxu0
      %v1386 = vadd.f32 %v1208, %v1385
      %v1387 = vpop.f32.mrb[0].mxu0
      %v1388 = vadd.f32 %v1213, %v1387
      %v1389 = vpop.f32.mrb[0].mxu0
      %v1390 = vadd.f32 %v1213, %v1389
      %1391 = vmatprep.mubr.bf16.mxu0 0
      %1392 = vmatmul.mubr.bf16.gmra.mrb[0].mxu0 %v1294
      %v1393 = vpop.f32.mrb[0].mxu0
      %v1394 = vadd.f32 %v1218, %v1393
      %v1395 = vpop.f32.mrb[0].mxu0
      %v1396 = vadd.f32 %v1218, %v1395
      %v1397 = vpop.f32.mrb[0].mxu0
      %v1398 = vadd.f32 %v1223, %v1397
      %v1399 = vpop.f32.mrb[0].mxu0
      %v1400 = vadd.f32 %v1223, %v1399
      %1401 = vmatprep.mubr.bf16.mxu0 0
      %1402 = vmatmul.mubr.bf16.gmra.mrb[0].mxu0 %v1297
      %v1403 = vpop.f32.mrb[0].mxu0
      %v1404 = vadd.f32 %v1228, %v1403
      %v1405 = vpop.f32.mrb[0].mxu0
      %v1406 = vadd.f32 %v1228, %v1405
      %v1407 = vpop.f32.mrb[0].mxu0
      %v1408 = vadd.f32 %v1233, %v1407
      %v1409 = vpop.f32.mrb[0].mxu0
      %v1410 = vadd.f32 %v1233, %v1409
      %1411 = vdwg.mxu0
      %v1412 = vmax.f32 %v1334, 0.0
      %v1413 = vmax.f32 %v1336, 0.0
      %v1414 = vmax.f32 %v1338, 0.0
      %v1415 = vmax.f32 %v1340, 0.0
      %v1416 = vmax.f32 %v1344, 0.0
      %v1417 = vmax.f32 %v1346, 0.0
      %v1418 = vmax.f32 %v1348, 0.0
      %v1419 = vmax.f32 %v1350, 0.0
      %v1420 = vmax.f32 %v1354, 0.0
      %v1421 = vmax.f32 %v1356, 0.0
      %v1422 = vmax.f32 %v1358, 0.0
      %v1423 = vmax.f32 %v1360, 0.0
      %v1424 = vmax.f32 %v1364, 0.0
      %v1425 = vmax.f32 %v1366, 0.0
      %v1426 = vmax.f32 %v1368, 0.0
      %v1427 = vmax.f32 %v1370, 0.0
      %v1428 = vmax.f32 %v1374, 0.0
      %v1429 = vmax.f32 %v1376, 0.0
      %v1430 = vmax.f32 %v1378, 0.0
      %v1431 = vmax.f32 %v1380, 0.0
      %v1432 = vmax.f32 %v1384, 0.0
      %v1433 = vmax.f32 %v1386, 0.0
      %v1434 = vmax.f32 %v1388, 0.0
      %v1435 = vmax.f32 %v1390, 0.0
      %v1436 = vmax.f32 %v1394, 0.0
      %v1437 = vmax.f32 %v1396, 0.0
      %v1438 = vmax.f32 %v1398, 0.0
      %v1439 = vmax.f32 %v1400, 0.0
      %v1440 = vmax.f32 %v1404, 0.0
      %v1441 = vmax.f32 %v1406, 0.0
      %v1442 = vmax.f32 %v1408, 0.0
      %v1443 = vmax.f32 %v1410, 0.0
      %v1444 = vpack.c.bf16 %v1414, %v1412
      %v1445 = vpack.c.bf16 %v1415, %v1413
      %v1446 = vpack.c.bf16 %v1418, %v1416
      %v1447 = vpack.c.bf16 %v1419, %v1417
      %v1448 = vpack.c.bf16 %v1422, %v1420
      %v1449 = vpack.c.bf16 %v1423, %v1421
      %v1450 = vpack.c.bf16 %v1426, %v1424
      %v1451 = vpack.c.bf16 %v1427, %v1425
      %v1452 = vpack.c.bf16 %v1430, %v1428
      %v1453 = vpack.c.bf16 %v1431, %v1429
      %v1454 = vpack.c.bf16 %v1434, %v1432
      %v1455 = vpack.c.bf16 %v1435, %v1433
      %v1456 = vpack.c.bf16 %v1438, %v1436
      %v1457 = vpack.c.bf16 %v1439, %v1437
      %v1458 = vpack.c.bf16 %v1442, %v1440
      %v1459 = vpack.c.bf16 %v1443, %v1441
      %v1460 = vld [vmem:[%s9] sm:$0xf]
      %v1461 = vld [vmem:[%s9 + $0x4] sm:$0xf]
      %v1462 = vld [vmem:[%s9 + $0x8] sm:$0xf]
      %v1463 = vld [vmem:[%s9 + $0xc] sm:$0xf]
      %v1464 = vld [vmem:[%s9 + $0x10] sm:$0xf]
      %v1465 = vld [vmem:[%s9 + $0x14] sm:$0xf]
      %v1466 = vld [vmem:[%s9 + $0x18] sm:$0xf]
      %v1467 = vld [vmem:[%s9 + $0x1c] sm:$0xf]
      %v1468 = vld [vmem:[%s9 + $0x20] sm:$0xf]
      %v1469 = vld [vmem:[%s9 + $0x24] sm:$0xf]
      %v1470 = vld [vmem:[%s9 + $0x28] sm:$0xf]
      %v1471 = vld [vmem:[%s9 + $0x2c] sm:$0xf]
      %v1472 = vld [vmem:[%s9 + $0x30] sm:$0xf]
      %v1473 = vld [vmem:[%s9 + $0x34] sm:$0xf]
      %v1474 = vld [vmem:[%s9 + $0x38] sm:$0xf]
      %v1475 = vld [vmem:[%s9 + $0x3c] sm:$0xf]
      %v1476 = vld [vmem:[%s9 + $0x40] sm:$0xf]
      %v1477 = vld [vmem:[%s9 + $0x44] sm:$0xf]
      %v1478 = vld [vmem:[%s9 + $0x48] sm:$0xf]
      %v1479 = vld [vmem:[%s9 + $0x4c] sm:$0xf]
      %v1480 = vld [vmem:[%s9 + $0x50] sm:$0xf]
      %v1481 = vld [vmem:[%s9 + $0x54] sm:$0xf]
      %v1482 = vld [vmem:[%s9 + $0x58] sm:$0xf]
      %v1483 = vld [vmem:[%s9 + $0x5c] sm:$0xf]
      %v1484 = vld [vmem:[%s9 + $0x60] sm:$0xf]
      %v1485 = vld [vmem:[%s9 + $0x64] sm:$0xf]
      %v1486 = vld [vmem:[%s9 + $0x68] sm:$0xf]
      %v1487 = vld [vmem:[%s9 + $0x6c] sm:$0xf]
      %v1488 = vld [vmem:[%s9 + $0x70] sm:$0xf]
      %v1489 = vld [vmem:[%s9 + $0x74] sm:$0xf]
      %v1490 = vld [vmem:[%s9 + $0x78] sm:$0xf]
      %v1491 = vld [vmem:[%s9 + $0x7c] sm:$0xf]
      %v1524 = vunpack.c.l.b16 %v1460
      %v1525 = vunpack.c.l.b16 %v1461
      %v1526 = vunpack.c.l.b16 %v1462
      %v1527 = vunpack.c.l.b16 %v1463
      %v1528 = vunpack.c.l.b16 %v1464
      %v1529 = vunpack.c.l.b16 %v1465
      %v1530 = vunpack.c.l.b16 %v1466
      %v1531 = vunpack.c.l.b16 %v1467
      %v1532 = vunpack.c.l.b16 %v1468
      %v1533 = vunpack.c.l.b16 %v1469
      %v1534 = vunpack.c.l.b16 %v1470
      %v1535 = vunpack.c.l.b16 %v1471
      %v1536 = vunpack.c.l.b16 %v1472
      %v1537 = vunpack.c.l.b16 %v1473
      %v1538 = vunpack.c.l.b16 %v1474
      %v1539 = vunpack.c.l.b16 %v1475
      %v1540 = vunpack.c.l.b16 %v1476
      %v1541 = vunpack.c.l.b16 %v1477
      %v1542 = vunpack.c.l.b16 %v1478
      %v1543 = vunpack.c.l.b16 %v1479
      %v1544 = vunpack.c.l.b16 %v1480
      %v1545 = vunpack.c.l.b16 %v1481
      %v1546 = vunpack.c.l.b16 %v1482
      %v1547 = vunpack.c.l.b16 %v1483
      %v1548 = vunpack.c.l.b16 %v1484
      %v1549 = vunpack.c.l.b16 %v1485
      %v1550 = vunpack.c.l.b16 %v1486
      %v1551 = vunpack.c.l.b16 %v1487
      %v1552 = vunpack.c.l.b16 %v1488
      %v1553 = vunpack.c.l.b16 %v1489
      %v1554 = vunpack.c.l.b16 %v1490
      %v1555 = vunpack.c.l.b16 %v1491
      %v1556 = vpack.c.b16 %v1525, %v1524
      %v1557 = vpack.c.b16 %v1527, %v1526
      %v1558 = vpack.c.b16 %v1529, %v1528
      %v1559 = vpack.c.b16 %v1531, %v1530
      %v1560 = vpack.c.b16 %v1533, %v1532
      %v1561 = vpack.c.b16 %v1535, %v1534
      %v1562 = vpack.c.b16 %v1537, %v1536
      %v1563 = vpack.c.b16 %v1539, %v1538
      %v1564 = vpack.c.b16 %v1541, %v1540
      %v1565 = vpack.c.b16 %v1543, %v1542
      %v1566 = vpack.c.b16 %v1545, %v1544
      %v1567 = vpack.c.b16 %v1547, %v1546
      %v1568 = vpack.c.b16 %v1549, %v1548
      %v1569 = vpack.c.b16 %v1551, %v1550
      %v1570 = vpack.c.b16 %v1553, %v1552
      %v1571 = vpack.c.b16 %v1555, %v1554
      %1588 = vmatprep.subr.bf16.mxu0 %v1445
      %1589 = vmatpush1.bf16.msra.mxu0 %v1444
      %1590 = vmatprep.subr.bf16.mxu0 %v1447
      %1591 = vmatpush1.bf16.msra.mxu0 %v1446
      %1592 = vmatprep.subr.bf16.mxu0 %v1449
      %1593 = vmatpush1.bf16.msra.mxu0 %v1448
      %1594 = vmatprep.subr.bf16.mxu0 %v1451
      %1595 = vmatpush1.bf16.msra.mxu0 %v1450
      %1596 = vmatprep.subr.bf16.mxu0 %v1453
      %1597 = vmatpush1.bf16.msra.mxu0 %v1452
      %1598 = vmatprep.subr.bf16.mxu0 %v1455
      %1599 = vmatpush1.bf16.msra.mxu0 %v1454
      %1600 = vmatprep.subr.bf16.mxu0 %v1457
      %1601 = vmatpush1.bf16.msra.mxu0 %v1456
      %1602 = vmatprep.subr.bf16.mxu0 %v1459
      %1603 = vmatpush1.bf16.msra.mxu0 %v1458
      %1604 = vmatprep.subr.bf16.mxu0 0
      %1605 = vmatpush1.bf16.msra.mxu0 0
      %1606 = vmatprep.subr.bf16.mxu0 0
      %1607 = vmatpush1.bf16.msra.mxu0 0
      %1608 = vmatprep.subr.bf16.mxu0 0
      %1609 = vmatpush1.bf16.msra.mxu0 0
      %1610 = vmatprep.subr.bf16.mxu0 0
      %1611 = vmatpush1.bf16.msra.mxu0 0
      %1612 = vmatprep.subr.bf16.mxu0 0
      %1613 = vmatpush1.bf16.msra.mxu0 0
      %1614 = vmatprep.subr.bf16.mxu0 0
      %1615 = vmatpush1.bf16.msra.mxu0 0
      %1616 = vmatprep.subr.bf16.mxu0 0
      %1617 = vmatpush1.bf16.msra.mxu0 0
      %1618 = vmatprep.subr.bf16.mxu0 0
      %1619 = vmatpush1.bf16.msra.mxu0 0
      %1620 = vmatprep.mubr.bf16.mxu0 0
      %1621 = vmatmul.mubr.bf16.gmra.mrb[0].mxu0 %v1556
      %v1622 = vpop.f32.mrb[0].mxu0
      %v1623 = vadd.f32 0.0, %v1622
      %v1624 = vpop.f32.mrb[0].mxu0
      %v1625 = vadd.f32 0.0, %v1624
      %v1626 = vpop.f32.mrb[0].mxu0
      %v1627 = vadd.f32 0.0, %v1626
      %v1628 = vpop.f32.mrb[0].mxu0
      %v1629 = vadd.f32 0.0, %v1628
      %1630 = vmatprep.mubr.bf16.mxu0 0
      %1631 = vmatmul.mubr.bf16.gmra.mrb[0].mxu0 %v1557
      %v1632 = vpop.f32.mrb[0].mxu0
      %v1633 = vadd.f32 0.0, %v1632
      %v1634 = vpop.f32.mrb[0].mxu0
      %v1635 = vadd.f32 0.0, %v1634
      %v1636 = vpop.f32.mrb[0].mxu0
      %v1637 = vadd.f32 0.0, %v1636
      %v1638 = vpop.f32.mrb[0].mxu0
      %v1639 = vadd.f32 0.0, %v1638
      %1640 = vmatprep.mubr.bf16.mxu0 0
      %1641 = vmatmul.mubr.bf16.gmra.mrb[0].mxu0 %v1558
      %v1642 = vpop.f32.mrb[0].mxu0
      %v1643 = vadd.f32 0.0, %v1642
      %v1644 = vpop.f32.mrb[0].mxu0
      %v1645 = vadd.f32 0.0, %v1644
      %v1646 = vpop.f32.mrb[0].mxu0
      %v1647 = vadd.f32 0.0, %v1646
      %v1648 = vpop.f32.mrb[0].mxu0
      %v1649 = vadd.f32 0.0, %v1648
      %1650 = vmatprep.mubr.bf16.mxu0 0
      %1651 = vmatmul.mubr.bf16.gmra.mrb[0].mxu0 %v1559
      %v1652 = vpop.f32.mrb[0].mxu0
      %v1653 = vadd.f32 0.0, %v1652
      %v1654 = vpop.f32.mrb[0].mxu0
      %v1655 = vadd.f32 0.0, %v1654
      %v1656 = vpop.f32.mrb[0].mxu0
      %v1657 = vadd.f32 0.0, %v1656
      %v1658 = vpop.f32.mrb[0].mxu0
      %v1659 = vadd.f32 0.0, %v1658
      %1660 = vmatprep.mubr.bf16.mxu0 0
      %1661 = vmatmul.mubr.bf16.gmra.mrb[0].mxu0 %v1560
      %v1662 = vpop.f32.mrb[0].mxu0
      %v1663 = vadd.f32 0.0, %v1662
      %v1664 = vpop.f32.mrb[0].mxu0
      %v1665 = vadd.f32 0.0, %v1664
      %v1666 = vpop.f32.mrb[0].mxu0
      %v1667 = vadd.f32 0.0, %v1666
      %v1668 = vpop.f32.mrb[0].mxu0
      %v1669 = vadd.f32 0.0, %v1668
      %1670 = vmatprep.mubr.bf16.mxu0 0
      %1671 = vmatmul.mubr.bf16.gmra.mrb[0].mxu0 %v1561
      %v1672 = vpop.f32.mrb[0].mxu0
      %v1673 = vadd.f32 0.0, %v1672
      %v1674 = vpop.f32.mrb[0].mxu0
      %v1675 = vadd.f32 0.0, %v1674
      %v1676 = vpop.f32.mrb[0].mxu0
      %v1677 = vadd.f32 0.0, %v1676
      %v1678 = vpop.f32.mrb[0].mxu0
      %v1679 = vadd.f32 0.0, %v1678
      %1680 = vmatprep.mubr.bf16.mxu0 0
      %1681 = vmatmul.mubr.bf16.gmra.mrb[0].mxu0 %v1562
      %v1682 = vpop.f32.mrb[0].mxu0
      %v1683 = vadd.f32 0.0, %v1682
      %v1684 = vpop.f32.mrb[0].mxu0
      %v1685 = vadd.f32 0.0, %v1684
      %v1686 = vpop.f32.mrb[0].mxu0
      %v1687 = vadd.f32 0.0, %v1686
      %v1688 = vpop.f32.mrb[0].mxu0
      %v1689 = vadd.f32 0.0, %v1688
      %1690 = vmatprep.mubr.bf16.mxu0 0
      %1691 = vmatmul.mubr.bf16.gmra.mrb[0].mxu0 %v1563
      %v1692 = vpop.f32.mrb[0].mxu0
      %v1693 = vadd.f32 0.0, %v1692
      %v1694 = vpop.f32.mrb[0].mxu0
      %v1695 = vadd.f32 0.0, %v1694
      %v1696 = vpop.f32.mrb[0].mxu0
      %v1697 = vadd.f32 0.0, %v1696
      %v1698 = vpop.f32.mrb[0].mxu0
      %v1699 = vadd.f32 0.0, %v1698
      %1700 = vmatprep.mubr.bf16.mxu0 0
      %1701 = vmatmul.mubr.bf16.gmra.mrb[0].mxu0 %v1564
      %v1702 = vpop.f32.mrb[0].mxu0
      %v1703 = vadd.f32 0.0, %v1702
      %v1704 = vpop.f32.mrb[0].mxu0
      %v1705 = vadd.f32 0.0, %v1704
      %v1706 = vpop.f32.mrb[0].mxu0
      %v1707 = vadd.f32 0.0, %v1706
      %v1708 = vpop.f32.mrb[0].mxu0
      %v1709 = vadd.f32 0.0, %v1708
      %1710 = vmatprep.mubr.bf16.mxu0 0
      %1711 = vmatmul.mubr.bf16.gmra.mrb[0].mxu0 %v1565
      %v1712 = vpop.f32.mrb[0].mxu0
      %v1713 = vadd.f32 0.0, %v1712
      %v1714 = vpop.f32.mrb[0].mxu0
      %v1715 = vadd.f32 0.0, %v1714
      %v1716 = vpop.f32.mrb[0].mxu0
      %v1717 = vadd.f32 0.0, %v1716
      %v1718 = vpop.f32.mrb[0].mxu0
      %v1719 = vadd.f32 0.0, %v1718
      %1720 = vmatprep.mubr.bf16.mxu0 0
      %1721 = vmatmul.mubr.bf16.gmra.mrb[0].mxu0 %v1566
      %v1722 = vpop.f32.mrb[0].mxu0
      %v1723 = vadd.f32 0.0, %v1722
      %v1724 = vpop.f32.mrb[0].mxu0
      %v1725 = vadd.f32 0.0, %v1724
      %v1726 = vpop.f32.mrb[0].mxu0
      %v1727 = vadd.f32 0.0, %v1726
      %v1728 = vpop.f32.mrb[0].mxu0
      %v1729 = vadd.f32 0.0, %v1728
      %1730 = vmatprep.mubr.bf16.mxu0 0
      %1731 = vmatmul.mubr.bf16.gmra.mrb[0].mxu0 %v1567
      %v1732 = vpop.f32.mrb[0].mxu0
      %v1733 = vadd.f32 0.0, %v1732
      %v1734 = vpop.f32.mrb[0].mxu0
      %v1735 = vadd.f32 0.0, %v1734
      %v1736 = vpop.f32.mrb[0].mxu0
      %v1737 = vadd.f32 0.0, %v1736
      %v1738 = vpop.f32.mrb[0].mxu0
      %v1739 = vadd.f32 0.0, %v1738
      %1740 = vmatprep.mubr.bf16.mxu0 0
      %1741 = vmatmul.mubr.bf16.gmra.mrb[0].mxu0 %v1568
      %v1742 = vpop.f32.mrb[0].mxu0
      %v1743 = vadd.f32 0.0, %v1742
      %v1744 = vpop.f32.mrb[0].mxu0
      %v1745 = vadd.f32 0.0, %v1744
      %v1746 = vpop.f32.mrb[0].mxu0
      %v1747 = vadd.f32 0.0, %v1746
      %v1748 = vpop.f32.mrb[0].mxu0
      %v1749 = vadd.f32 0.0, %v1748
      %1750 = vmatprep.mubr.bf16.mxu0 0
      %1751 = vmatmul.mubr.bf16.gmra.mrb[0].mxu0 %v1569
      %v1752 = vpop.f32.mrb[0].mxu0
      %v1753 = vadd.f32 0.0, %v1752
      %v1754 = vpop.f32.mrb[0].mxu0
      %v1755 = vadd.f32 0.0, %v1754
      %v1756 = vpop.f32.mrb[0].mxu0
      %v1757 = vadd.f32 0.0, %v1756
      %v1758 = vpop.f32.mrb[0].mxu0
      %v1759 = vadd.f32 0.0, %v1758
      %1760 = vmatprep.mubr.bf16.mxu0 0
      %1761 = vmatmul.mubr.bf16.gmra.mrb[0].mxu0 %v1570
      %v1762 = vpop.f32.mrb[0].mxu0
      %v1763 = vadd.f32 0.0, %v1762
      %v1764 = vpop.f32.mrb[0].mxu0
      %v1765 = vadd.f32 0.0, %v1764
      %v1766 = vpop.f32.mrb[0].mxu0
      %v1767 = vadd.f32 0.0, %v1766
      %v1768 = vpop.f32.mrb[0].mxu0
      %v1769 = vadd.f32 0.0, %v1768
      %1770 = vmatprep.mubr.bf16.mxu0 0
      %1771 = vmatmul.mubr.bf16.gmra.mrb[0].mxu0 %v1571
      %v1772 = vpop.f32.mrb[0].mxu0
      %v1773 = vadd.f32 0.0, %v1772
      %v1774 = vpop.f32.mrb[0].mxu0
      %v1775 = vadd.f32 0.0, %v1774
      %v1776 = vpop.f32.mrb[0].mxu0
      %v1777 = vadd.f32 0.0, %v1776
      %v1778 = vpop.f32.mrb[0].mxu0
      %v1779 = vadd.f32 0.0, %v1778
      %1780 = vdwg.mxu0
      %v1781 = vmax.f32 %v1623, %v1625
      %1782 = vmax.xlane.f32.xlu0 %v1781
      %v1783 = vpop.xlane.xlu0 %1782
      %v1784 = vmax.f32 %v1627, %v1629
      %1785 = vmax.xlane.f32.xlu0 %v1784
      %v1786 = vpop.xlane.xlu0 %1785
      %v1787 = vmax.f32 %v1633, %v1635
      %1788 = vmax.xlane.f32.xlu0 %v1787
      %v1789 = vpop.xlane.xlu0 %1788
      %v1790 = vmax.f32 %v1637, %v1639
      %1791 = vmax.xlane.f32.xlu0 %v1790
      %v1792 = vpop.xlane.xlu0 %1791
      %v1793 = vmax.f32 %v1643, %v1645
      %1794 = vmax.xlane.f32.xlu0 %v1793
      %v1795 = vpop.xlane.xlu0 %1794
      %v1796 = vmax.f32 %v1647, %v1649
      %1797 = vmax.xlane.f32.xlu0 %v1796
      %v1798 = vpop.xlane.xlu0 %1797
      %v1799 = vmax.f32 %v1653, %v1655
      %1800 = vmax.xlane.f32.xlu0 %v1799
      %v1801 = vpop.xlane.xlu0 %1800
      %v1802 = vmax.f32 %v1657, %v1659
      %1803 = vmax.xlane.f32.xlu0 %v1802
      %v1804 = vpop.xlane.xlu0 %1803
      %v1805 = vmax.f32 %v1663, %v1665
      %1806 = vmax.xlane.f32.xlu0 %v1805
      %v1807 = vpop.xlane.xlu0 %1806
      %v1808 = vmax.f32 %v1667, %v1669
      %1809 = vmax.xlane.f32.xlu0 %v1808
      %v1810 = vpop.xlane.xlu0 %1809
      %v1811 = vmax.f32 %v1673, %v1675
      %1812 = vmax.xlane.f32.xlu0 %v1811
      %v1813 = vpop.xlane.xlu0 %1812
      %v1814 = vmax.f32 %v1677, %v1679
      %1815 = vmax.xlane.f32.xlu0 %v1814
      %v1816 = vpop.xlane.xlu0 %1815
      %v1817 = vmax.f32 %v1683, %v1685
      %1818 = vmax.xlane.f32.xlu0 %v1817
      %v1819 = vpop.xlane.xlu0 %1818
      %v1820 = vmax.f32 %v1687, %v1689
      %1821 = vmax.xlane.f32.xlu0 %v1820
      %v1822 = vpop.xlane.xlu0 %1821
      %v1823 = vmax.f32 %v1693, %v1695
      %1824 = vmax.xlane.f32.xlu0 %v1823
      %v1825 = vpop.xlane.xlu0 %1824
      %v1826 = vmax.f32 %v1697, %v1699
      %1827 = vmax.xlane.f32.xlu0 %v1826
      %v1828 = vpop.xlane.xlu0 %1827
      %v1829 = vmax.f32 %v1703, %v1705
      %1830 = vmax.xlane.f32.xlu0 %v1829
      %v1831 = vpop.xlane.xlu0 %1830
      %v1832 = vmax.f32 %v1707, %v1709
      %1833 = vmax.xlane.f32.xlu0 %v1832
      %v1834 = vpop.xlane.xlu0 %1833
      %v1835 = vmax.f32 %v1713, %v1715
      %1836 = vmax.xlane.f32.xlu0 %v1835
      %v1837 = vpop.xlane.xlu0 %1836
      %v1838 = vmax.f32 %v1717, %v1719
      %1839 = vmax.xlane.f32.xlu0 %v1838
      %v1840 = vpop.xlane.xlu0 %1839
      %v1841 = vmax.f32 %v1723, %v1725
      %1842 = vmax.xlane.f32.xlu0 %v1841
      %v1843 = vpop.xlane.xlu0 %1842
      %v1844 = vmax.f32 %v1727, %v1729
      %1845 = vmax.xlane.f32.xlu0 %v1844
      %v1846 = vpop.xlane.xlu0 %1845
      %v1847 = vmax.f32 %v1733, %v1735
      %1848 = vmax.xlane.f32.xlu0 %v1847
      %v1849 = vpop.xlane.xlu0 %1848
      %v1850 = vmax.f32 %v1737, %v1739
      %1851 = vmax.xlane.f32.xlu0 %v1850
      %v1852 = vpop.xlane.xlu0 %1851
      %v1853 = vmax.f32 %v1743, %v1745
      %1854 = vmax.xlane.f32.xlu0 %v1853
      %v1855 = vpop.xlane.xlu0 %1854
      %v1856 = vmax.f32 %v1747, %v1749
      %1857 = vmax.xlane.f32.xlu0 %v1856
      %v1858 = vpop.xlane.xlu0 %1857
      %v1859 = vmax.f32 %v1753, %v1755
      %1860 = vmax.xlane.f32.xlu0 %v1859
      %v1861 = vpop.xlane.xlu0 %1860
      %v1862 = vmax.f32 %v1757, %v1759
      %1863 = vmax.xlane.f32.xlu0 %v1862
      %v1864 = vpop.xlane.xlu0 %1863
      %v1865 = vmax.f32 %v1763, %v1765
      %1866 = vmax.xlane.f32.xlu0 %v1865
      %v1867 = vpop.xlane.xlu0 %1866
      %v1868 = vmax.f32 %v1767, %v1769
      %1869 = vmax.xlane.f32.xlu0 %v1868
      %v1870 = vpop.xlane.xlu0 %1869
      %v1871 = vmax.f32 %v1773, %v1775
      %1872 = vmax.xlane.f32.xlu0 %v1871
      %v1873 = vpop.xlane.xlu0 %1872
      %v1874 = vmax.f32 %v1777, %v1779
      %1875 = vmax.xlane.f32.xlu0 %v1874
      %v1876 = vpop.xlane.xlu0 %1875
      %v1877 = vld [vmem:[%s9 + $0x80] sm:$0xf]
      %v1878 = vld [vmem:[%s9 + $0x84] sm:$0xf]
      %v1879 = vld [vmem:[%s9 + $0x88] sm:$0xf]
      %v1880 = vld [vmem:[%s9 + $0x8c] sm:$0xf]
      %v1881 = vld [vmem:[%s9 + $0x90] sm:$0xf]
      %v1882 = vld [vmem:[%s9 + $0x94] sm:$0xf]
      %v1883 = vld [vmem:[%s9 + $0x98] sm:$0xf]
      %v1884 = vld [vmem:[%s9 + $0x9c] sm:$0xf]
      %v1885 = vld [vmem:[%s9 + $0xa0] sm:$0xf]
      %v1886 = vld [vmem:[%s9 + $0xa4] sm:$0xf]
      %v1887 = vld [vmem:[%s9 + $0xa8] sm:$0xf]
      %v1888 = vld [vmem:[%s9 + $0xac] sm:$0xf]
      %v1889 = vld [vmem:[%s9 + $0xb0] sm:$0xf]
      %v1890 = vld [vmem:[%s9 + $0xb4] sm:$0xf]
      %v1891 = vld [vmem:[%s9 + $0xb8] sm:$0xf]
      %v1892 = vld [vmem:[%s9 + $0xbc] sm:$0xf]
      %v1893 = vld [vmem:[%s9 + $0xc0] sm:$0xf]
      %v1894 = vld [vmem:[%s9 + $0xc4] sm:$0xf]
      %v1895 = vld [vmem:[%s9 + $0xc8] sm:$0xf]
      %v1896 = vld [vmem:[%s9 + $0xcc] sm:$0xf]
      %v1897 = vld [vmem:[%s9 + $0xd0] sm:$0xf]
      %v1898 = vld [vmem:[%s9 + $0xd4] sm:$0xf]
      %v1899 = vld [vmem:[%s9 + $0xd8] sm:$0xf]
      %v1900 = vld [vmem:[%s9 + $0xdc] sm:$0xf]
      %v1901 = vld [vmem:[%s9 + $0xe0] sm:$0xf]
      %v1902 = vld [vmem:[%s9 + $0xe4] sm:$0xf]
      %v1903 = vld [vmem:[%s9 + $0xe8] sm:$0xf]
      %v1904 = vld [vmem:[%s9 + $0xec] sm:$0xf]
      %v1905 = vld [vmem:[%s9 + $0xf0] sm:$0xf]
      %v1906 = vld [vmem:[%s9 + $0xf4] sm:$0xf]
      %v1907 = vld [vmem:[%s9 + $0xf8] sm:$0xf]
      %v1908 = vld [vmem:[%s9 + $0xfc] sm:$0xf]
      %v1941 = vunpack.c.l.b16 %v1877
      %v1942 = vunpack.c.l.b16 %v1878
      %v1943 = vunpack.c.l.b16 %v1879
      %v1944 = vunpack.c.l.b16 %v1880
      %v1945 = vunpack.c.l.b16 %v1881
      %v1946 = vunpack.c.l.b16 %v1882
      %v1947 = vunpack.c.l.b16 %v1883
      %v1948 = vunpack.c.l.b16 %v1884
      %v1949 = vunpack.c.l.b16 %v1885
      %v1950 = vunpack.c.l.b16 %v1886
      %v1951 = vunpack.c.l.b16 %v1887
      %v1952 = vunpack.c.l.b16 %v1888
      %v1953 = vunpack.c.l.b16 %v1889
      %v1954 = vunpack.c.l.b16 %v1890
      %v1955 = vunpack.c.l.b16 %v1891
      %v1956 = vunpack.c.l.b16 %v1892
      %v1957 = vunpack.c.l.b16 %v1893
      %v1958 = vunpack.c.l.b16 %v1894
      %v1959 = vunpack.c.l.b16 %v1895
      %v1960 = vunpack.c.l.b16 %v1896
      %v1961 = vunpack.c.l.b16 %v1897
      %v1962 = vunpack.c.l.b16 %v1898
      %v1963 = vunpack.c.l.b16 %v1899
      %v1964 = vunpack.c.l.b16 %v1900
      %v1965 = vunpack.c.l.b16 %v1901
      %v1966 = vunpack.c.l.b16 %v1902
      %v1967 = vunpack.c.l.b16 %v1903
      %v1968 = vunpack.c.l.b16 %v1904
      %v1969 = vunpack.c.l.b16 %v1905
      %v1970 = vunpack.c.l.b16 %v1906
      %v1971 = vunpack.c.l.b16 %v1907
      %v1972 = vunpack.c.l.b16 %v1908
      %v1973 = vpack.c.b16 %v1942, %v1941
      %v1974 = vpack.c.b16 %v1944, %v1943
      %v1975 = vpack.c.b16 %v1946, %v1945
      %v1976 = vpack.c.b16 %v1948, %v1947
      %v1977 = vpack.c.b16 %v1950, %v1949
      %v1978 = vpack.c.b16 %v1952, %v1951
      %v1979 = vpack.c.b16 %v1954, %v1953
      %v1980 = vpack.c.b16 %v1956, %v1955
      %v1981 = vpack.c.b16 %v1958, %v1957
      %v1982 = vpack.c.b16 %v1960, %v1959
      %v1983 = vpack.c.b16 %v1962, %v1961
      %v1984 = vpack.c.b16 %v1964, %v1963
      %v1985 = vpack.c.b16 %v1966, %v1965
      %v1986 = vpack.c.b16 %v1968, %v1967
      %v1987 = vpack.c.b16 %v1970, %v1969
      %v1988 = vpack.c.b16 %v1972, %v1971
      %2005 = vmatprep.subr.bf16.mxu0 %v1445
      %2006 = vmatpush1.bf16.msra.mxu0 %v1444
      %2007 = vmatprep.subr.bf16.mxu0 %v1447
      %2008 = vmatpush1.bf16.msra.mxu0 %v1446
      %2009 = vmatprep.subr.bf16.mxu0 %v1449
      %2010 = vmatpush1.bf16.msra.mxu0 %v1448
      %2011 = vmatprep.subr.bf16.mxu0 %v1451
      %2012 = vmatpush1.bf16.msra.mxu0 %v1450
      %2013 = vmatprep.subr.bf16.mxu0 %v1453
      %2014 = vmatpush1.bf16.msra.mxu0 %v1452
      %2015 = vmatprep.subr.bf16.mxu0 %v1455
      %2016 = vmatpush1.bf16.msra.mxu0 %v1454
      %2017 = vmatprep.subr.bf16.mxu0 %v1457
      %2018 = vmatpush1.bf16.msra.mxu0 %v1456
      %2019 = vmatprep.subr.bf16.mxu0 %v1459
      %2020 = vmatpush1.bf16.msra.mxu0 %v1458
      %2021 = vmatprep.subr.bf16.mxu0 0
      %2022 = vmatpush1.bf16.msra.mxu0 0
      %2023 = vmatprep.subr.bf16.mxu0 0
      %2024 = vmatpush1.bf16.msra.mxu0 0
      %2025 = vmatprep.subr.bf16.mxu0 0
      %2026 = vmatpush1.bf16.msra.mxu0 0
      %2027 = vmatprep.subr.bf16.mxu0 0
      %2028 = vmatpush1.bf16.msra.mxu0 0
      %2029 = vmatprep.subr.bf16.mxu0 0
      %2030 = vmatpush1.bf16.msra.mxu0 0
      %2031 = vmatprep.subr.bf16.mxu0 0
      %2032 = vmatpush1.bf16.msra.mxu0 0
      %2033 = vmatprep.subr.bf16.mxu0 0
      %2034 = vmatpush1.bf16.msra.mxu0 0
      %2035 = vmatprep.subr.bf16.mxu0 0
      %2036 = vmatpush1.bf16.msra.mxu0 0
      %2037 = vmatprep.mubr.bf16.mxu0 0
      %2038 = vmatmul.mubr.bf16.gmra.mrb[0].mxu0 %v1973
      %v2039 = vpop.f32.mrb[0].mxu0
      %v2040 = vadd.f32 0.0, %v2039
      %v2041 = vpop.f32.mrb[0].mxu0
      %v2042 = vadd.f32 0.0, %v2041
      %v2043 = vpop.f32.mrb[0].mxu0
      %v2044 = vadd.f32 0.0, %v2043
      %v2045 = vpop.f32.mrb[0].mxu0
      %v2046 = vadd.f32 0.0, %v2045
      %2047 = vmatprep.mubr.bf16.mxu0 0
      %2048 = vmatmul.mubr.bf16.gmra.mrb[0].mxu0 %v1974
      %v2049 = vpop.f32.mrb[0].mxu0
      %v2050 = vadd.f32 0.0, %v2049
      %v2051 = vpop.f32.mrb[0].mxu0
      %v2052 = vadd.f32 0.0, %v2051
      %v2053 = vpop.f32.mrb[0].mxu0
      %v2054 = vadd.f32 0.0, %v2053
      %v2055 = vpop.f32.mrb[0].mxu0
      %v2056 = vadd.f32 0.0, %v2055
      %2057 = vmatprep.mubr.bf16.mxu0 0
      %2058 = vmatmul.mubr.bf16.gmra.mrb[0].mxu0 %v1975
      %v2059 = vpop.f32.mrb[0].mxu0
      %v2060 = vadd.f32 0.0, %v2059
      %v2061 = vpop.f32.mrb[0].mxu0
      %v2062 = vadd.f32 0.0, %v2061
      %v2063 = vpop.f32.mrb[0].mxu0
      %v2064 = vadd.f32 0.0, %v2063
      %v2065 = vpop.f32.mrb[0].mxu0
      %v2066 = vadd.f32 0.0, %v2065
      %2067 = vmatprep.mubr.bf16.mxu0 0
      %2068 = vmatmul.mubr.bf16.gmra.mrb[0].mxu0 %v1976
      %v2069 = vpop.f32.mrb[0].mxu0
      %v2070 = vadd.f32 0.0, %v2069
      %v2071 = vpop.f32.mrb[0].mxu0
      %v2072 = vadd.f32 0.0, %v2071
      %v2073 = vpop.f32.mrb[0].mxu0
      %v2074 = vadd.f32 0.0, %v2073
      %v2075 = vpop.f32.mrb[0].mxu0
      %v2076 = vadd.f32 0.0, %v2075
      %2077 = vmatprep.mubr.bf16.mxu0 0
      %2078 = vmatmul.mubr.bf16.gmra.mrb[0].mxu0 %v1977
      %v2079 = vpop.f32.mrb[0].mxu0
      %v2080 = vadd.f32 0.0, %v2079
      %v2081 = vpop.f32.mrb[0].mxu0
      %v2082 = vadd.f32 0.0, %v2081
      %v2083 = vpop.f32.mrb[0].mxu0
      %v2084 = vadd.f32 0.0, %v2083
      %v2085 = vpop.f32.mrb[0].mxu0
      %v2086 = vadd.f32 0.0, %v2085
      %2087 = vmatprep.mubr.bf16.mxu0 0
      %2088 = vmatmul.mubr.bf16.gmra.mrb[0].mxu0 %v1978
      %v2089 = vpop.f32.mrb[0].mxu0
      %v2090 = vadd.f32 0.0, %v2089
      %v2091 = vpop.f32.mrb[0].mxu0
      %v2092 = vadd.f32 0.0, %v2091
      %v2093 = vpop.f32.mrb[0].mxu0
      %v2094 = vadd.f32 0.0, %v2093
      %v2095 = vpop.f32.mrb[0].mxu0
      %v2096 = vadd.f32 0.0, %v2095
      %2097 = vmatprep.mubr.bf16.mxu0 0
      %2098 = vmatmul.mubr.bf16.gmra.mrb[0].mxu0 %v1979
      %v2099 = vpop.f32.mrb[0].mxu0
      %v2100 = vadd.f32 0.0, %v2099
      %v2101 = vpop.f32.mrb[0].mxu0
      %v2102 = vadd.f32 0.0, %v2101
      %v2103 = vpop.f32.mrb[0].mxu0
      %v2104 = vadd.f32 0.0, %v2103
      %v2105 = vpop.f32.mrb[0].mxu0
      %v2106 = vadd.f32 0.0, %v2105
      %2107 = vmatprep.mubr.bf16.mxu0 0
      %2108 = vmatmul.mubr.bf16.gmra.mrb[0].mxu0 %v1980
      %v2109 = vpop.f32.mrb[0].mxu0
      %v2110 = vadd.f32 0.0, %v2109
      %v2111 = vpop.f32.mrb[0].mxu0
      %v2112 = vadd.f32 0.0, %v2111
      %v2113 = vpop.f32.mrb[0].mxu0
      %v2114 = vadd.f32 0.0, %v2113
      %v2115 = vpop.f32.mrb[0].mxu0
      %v2116 = vadd.f32 0.0, %v2115
      %2117 = vmatprep.mubr.bf16.mxu0 0
      %2118 = vmatmul.mubr.bf16.gmra.mrb[0].mxu0 %v1981
      %v2119 = vpop.f32.mrb[0].mxu0
      %v2120 = vadd.f32 0.0, %v2119
      %v2121 = vpop.f32.mrb[0].mxu0
      %v2122 = vadd.f32 0.0, %v2121
      %v2123 = vpop.f32.mrb[0].mxu0
      %v2124 = vadd.f32 0.0, %v2123
      %v2125 = vpop.f32.mrb[0].mxu0
      %v2126 = vadd.f32 0.0, %v2125
      %2127 = vmatprep.mubr.bf16.mxu0 0
      %2128 = vmatmul.mubr.bf16.gmra.mrb[0].mxu0 %v1982
      %v2129 = vpop.f32.mrb[0].mxu0
      %v2130 = vadd.f32 0.0, %v2129
      %v2131 = vpop.f32.mrb[0].mxu0
      %v2132 = vadd.f32 0.0, %v2131
      %v2133 = vpop.f32.mrb[0].mxu0
      %v2134 = vadd.f32 0.0, %v2133
      %v2135 = vpop.f32.mrb[0].mxu0
      %v2136 = vadd.f32 0.0, %v2135
      %2137 = vmatprep.mubr.bf16.mxu0 0
      %2138 = vmatmul.mubr.bf16.gmra.mrb[0].mxu0 %v1983
      %v2139 = vpop.f32.mrb[0].mxu0
      %v2140 = vadd.f32 0.0, %v2139
      %v2141 = vpop.f32.mrb[0].mxu0
      %v2142 = vadd.f32 0.0, %v2141
      %v2143 = vpop.f32.mrb[0].mxu0
      %v2144 = vadd.f32 0.0, %v2143
      %v2145 = vpop.f32.mrb[0].mxu0
      %v2146 = vadd.f32 0.0, %v2145
      %2147 = vmatprep.mubr.bf16.mxu0 0
      %2148 = vmatmul.mubr.bf16.gmra.mrb[0].mxu0 %v1984
      %v2149 = vpop.f32.mrb[0].mxu0
      %v2150 = vadd.f32 0.0, %v2149
      %v2151 = vpop.f32.mrb[0].mxu0
      %v2152 = vadd.f32 0.0, %v2151
      %v2153 = vpop.f32.mrb[0].mxu0
      %v2154 = vadd.f32 0.0, %v2153
      %v2155 = vpop.f32.mrb[0].mxu0
      %v2156 = vadd.f32 0.0, %v2155
      %2157 = vmatprep.mubr.bf16.mxu0 0
      %2158 = vmatmul.mubr.bf16.gmra.mrb[0].mxu0 %v1985
      %v2159 = vpop.f32.mrb[0].mxu0
      %v2160 = vadd.f32 0.0, %v2159
      %v2161 = vpop.f32.mrb[0].mxu0
      %v2162 = vadd.f32 0.0, %v2161
      %v2163 = vpop.f32.mrb[0].mxu0
      %v2164 = vadd.f32 0.0, %v2163
      %v2165 = vpop.f32.mrb[0].mxu0
      %v2166 = vadd.f32 0.0, %v2165
      %2167 = vmatprep.mubr.bf16.mxu0 0
      %2168 = vmatmul.mubr.bf16.gmra.mrb[0].mxu0 %v1986
      %v2169 = vpop.f32.mrb[0].mxu0
      %v2170 = vadd.f32 0.0, %v2169
      %v2171 = vpop.f32.mrb[0].mxu0
      %v2172 = vadd.f32 0.0, %v2171
      %v2173 = vpop.f32.mrb[0].mxu0
      %v2174 = vadd.f32 0.0, %v2173
      %v2175 = vpop.f32.mrb[0].mxu0
      %v2176 = vadd.f32 0.0, %v2175
      %2177 = vmatprep.mubr.bf16.mxu0 0
      %2178 = vmatmul.mubr.bf16.gmra.mrb[0].mxu0 %v1987
      %v2179 = vpop.f32.mrb[0].mxu0
      %v2180 = vadd.f32 0.0, %v2179
      %v2181 = vpop.f32.mrb[0].mxu0
      %v2182 = vadd.f32 0.0, %v2181
      %v2183 = vpop.f32.mrb[0].mxu0
      %v2184 = vadd.f32 0.0, %v2183
      %v2185 = vpop.f32.mrb[0].mxu0
      %v2186 = vadd.f32 0.0, %v2185
      %2187 = vmatprep.mubr.bf16.mxu0 0
      %2188 = vmatmul.mubr.bf16.gmra.mrb[0].mxu0 %v1988
      %v2189 = vpop.f32.mrb[0].mxu0
      %v2190 = vadd.f32 0.0, %v2189
      %v2191 = vpop.f32.mrb[0].mxu0
      %v2192 = vadd.f32 0.0, %v2191
      %v2193 = vpop.f32.mrb[0].mxu0
      %v2194 = vadd.f32 0.0, %v2193
      %v2195 = vpop.f32.mrb[0].mxu0
      %v2196 = vadd.f32 0.0, %v2195
      %2197 = vdwg.mxu0
      %v2198 = vmax.f32 %v2040, %v2042
      %2199 = vmax.xlane.f32.xlu0 %v2198
      %v2200 = vpop.xlane.xlu0 %2199
      %v2201 = vmax.f32 %v2044, %v2046
      %2202 = vmax.xlane.f32.xlu0 %v2201
      %v2203 = vpop.xlane.xlu0 %2202
      %v2204 = vmax.f32 %v2050, %v2052
      %2205 = vmax.xlane.f32.xlu0 %v2204
      %v2206 = vpop.xlane.xlu0 %2205
      %v2207 = vmax.f32 %v2054, %v2056
      %2208 = vmax.xlane.f32.xlu0 %v2207
      %v2209 = vpop.xlane.xlu0 %2208
      %v2210 = vmax.f32 %v2060, %v2062
      %2211 = vmax.xlane.f32.xlu0 %v2210
      %v2212 = vpop.xlane.xlu0 %2211
      %v2213 = vmax.f32 %v2064, %v2066
      %2214 = vmax.xlane.f32.xlu0 %v2213
      %v2215 = vpop.xlane.xlu0 %2214
      %v2216 = vmax.f32 %v2070, %v2072
      %2217 = vmax.xlane.f32.xlu0 %v2216
      %v2218 = vpop.xlane.xlu0 %2217
      %v2219 = vmax.f32 %v2074, %v2076
      %2220 = vmax.xlane.f32.xlu0 %v2219
      %v2221 = vpop.xlane.xlu0 %2220
      %v2222 = vmax.f32 %v2080, %v2082
      %2223 = vmax.xlane.f32.xlu0 %v2222
      %v2224 = vpop.xlane.xlu0 %2223
      %v2225 = vmax.f32 %v2084, %v2086
      %2226 = vmax.xlane.f32.xlu0 %v2225
      %v2227 = vpop.xlane.xlu0 %2226
      %v2228 = vmax.f32 %v2090, %v2092
      %2229 = vmax.xlane.f32.xlu0 %v2228
      %v2230 = vpop.xlane.xlu0 %2229
      %v2231 = vmax.f32 %v2094, %v2096
      %2232 = vmax.xlane.f32.xlu0 %v2231
      %v2233 = vpop.xlane.xlu0 %2232
      %v2234 = vmax.f32 %v2100, %v2102
      %2235 = vmax.xlane.f32.xlu0 %v2234
      %v2236 = vpop.xlane.xlu0 %2235
      %v2237 = vmax.f32 %v2104, %v2106
      %2238 = vmax.xlane.f32.xlu0 %v2237
      %v2239 = vpop.xlane.xlu0 %2238
      %v2240 = vmax.f32 %v2110, %v2112
      %2241 = vmax.xlane.f32.xlu0 %v2240
      %v2242 = vpop.xlane.xlu0 %2241
      %v2243 = vmax.f32 %v2114, %v2116
      %2244 = vmax.xlane.f32.xlu0 %v2243
      %v2245 = vpop.xlane.xlu0 %2244
      %v2246 = vmax.f32 %v2120, %v2122
      %2247 = vmax.xlane.f32.xlu0 %v2246
      %v2248 = vpop.xlane.xlu0 %2247
      %v2249 = vmax.f32 %v2124, %v2126
      %2250 = vmax.xlane.f32.xlu0 %v2249
      %v2251 = vpop.xlane.xlu0 %2250
      %v2252 = vmax.f32 %v2130, %v2132
      %2253 = vmax.xlane.f32.xlu0 %v2252
      %v2254 = vpop.xlane.xlu0 %2253
      %v2255 = vmax.f32 %v2134, %v2136
      %2256 = vmax.xlane.f32.xlu0 %v2255
      %v2257 = vpop.xlane.xlu0 %2256
      %v2258 = vmax.f32 %v2140, %v2142
      %2259 = vmax.xlane.f32.xlu0 %v2258
      %v2260 = vpop.xlane.xlu0 %2259
      %v2261 = vmax.f32 %v2144, %v2146
      %2262 = vmax.xlane.f32.xlu0 %v2261
      %v2263 = vpop.xlane.xlu0 %2262
      %v2264 = vmax.f32 %v2150, %v2152
      %2265 = vmax.xlane.f32.xlu0 %v2264
      %v2266 = vpop.xlane.xlu0 %2265
      %v2267 = vmax.f32 %v2154, %v2156
      %2268 = vmax.xlane.f32.xlu0 %v2267
      %v2269 = vpop.xlane.xlu0 %2268
      %v2270 = vmax.f32 %v2160, %v2162
      %2271 = vmax.xlane.f32.xlu0 %v2270
      %v2272 = vpop.xlane.xlu0 %2271
      %v2273 = vmax.f32 %v2164, %v2166
      %2274 = vmax.xlane.f32.xlu0 %v2273
      %v2275 = vpop.xlane.xlu0 %2274
      %v2276 = vmax.f32 %v2170, %v2172
      %2277 = vmax.xlane.f32.xlu0 %v2276
      %v2278 = vpop.xlane.xlu0 %2277
      %v2279 = vmax.f32 %v2174, %v2176
      %2280 = vmax.xlane.f32.xlu0 %v2279
      %v2281 = vpop.xlane.xlu0 %2280
      %v2282 = vmax.f32 %v2180, %v2182
      %2283 = vmax.xlane.f32.xlu0 %v2282
      %v2284 = vpop.xlane.xlu0 %2283
      %v2285 = vmax.f32 %v2184, %v2186
      %2286 = vmax.xlane.f32.xlu0 %v2285
      %v2287 = vpop.xlane.xlu0 %2286
      %v2288 = vmax.f32 %v2190, %v2192
      %2289 = vmax.xlane.f32.xlu0 %v2288
      %v2290 = vpop.xlane.xlu0 %2289
      %v2291 = vmax.f32 %v2194, %v2196
      %2292 = vmax.xlane.f32.xlu0 %v2291
      %v2293 = vpop.xlane.xlu0 %2292
      %v2294 = vld [vmem:[%s9 + $0x100] sm:$0xf]
      %v2295 = vld [vmem:[%s9 + $0x104] sm:$0xf]
      %v2296 = vld [vmem:[%s9 + $0x108] sm:$0xf]
      %v2297 = vld [vmem:[%s9 + $0x10c] sm:$0xf]
      %v2298 = vld [vmem:[%s9 + $0x110] sm:$0xf]
      %v2299 = vld [vmem:[%s9 + $0x114] sm:$0xf]
      %v2300 = vld [vmem:[%s9 + $0x118] sm:$0xf]
      %v2301 = vld [vmem:[%s9 + $0x11c] sm:$0xf]
      %v2302 = vld [vmem:[%s9 + $0x120] sm:$0xf]
      %v2303 = vld [vmem:[%s9 + $0x124] sm:$0xf]
      %v2304 = vld [vmem:[%s9 + $0x128] sm:$0xf]
      %v2305 = vld [vmem:[%s9 + $0x12c] sm:$0xf]
      %v2306 = vld [vmem:[%s9 + $0x130] sm:$0xf]
      %v2307 = vld [vmem:[%s9 + $0x134] sm:$0xf]
      %v2308 = vld [vmem:[%s9 + $0x138] sm:$0xf]
      %v2309 = vld [vmem:[%s9 + $0x13c] sm:$0xf]
      %v2310 = vld [vmem:[%s9 + $0x140] sm:$0xf]
      %v2311 = vld [vmem:[%s9 + $0x144] sm:$0xf]
      %v2312 = vld [vmem:[%s9 + $0x148] sm:$0xf]
      %v2313 = vld [vmem:[%s9 + $0x14c] sm:$0xf]
      %v2314 = vld [vmem:[%s9 + $0x150] sm:$0xf]
      %v2315 = vld [vmem:[%s9 + $0x154] sm:$0xf]
      %v2316 = vld [vmem:[%s9 + $0x158] sm:$0xf]
      %v2317 = vld [vmem:[%s9 + $0x15c] sm:$0xf]
      %v2318 = vld [vmem:[%s9 + $0x160] sm:$0xf]
      %v2319 = vld [vmem:[%s9 + $0x164] sm:$0xf]
      %v2320 = vld [vmem:[%s9 + $0x168] sm:$0xf]
      %v2321 = vld [vmem:[%s9 + $0x16c] sm:$0xf]
      %v2322 = vld [vmem:[%s9 + $0x170] sm:$0xf]
      %v2323 = vld [vmem:[%s9 + $0x174] sm:$0xf]
      %v2324 = vld [vmem:[%s9 + $0x178] sm:$0xf]
      %v2325 = vld [vmem:[%s9 + $0x17c] sm:$0xf]
      %v2358 = vunpack.c.l.b16 %v2294
      %v2359 = vunpack.c.l.b16 %v2295
      %v2360 = vunpack.c.l.b16 %v2296
      %v2361 = vunpack.c.l.b16 %v2297
      %v2362 = vunpack.c.l.b16 %v2298
      %v2363 = vunpack.c.l.b16 %v2299
      %v2364 = vunpack.c.l.b16 %v2300
      %v2365 = vunpack.c.l.b16 %v2301
      %v2366 = vunpack.c.l.b16 %v2302
      %v2367 = vunpack.c.l.b16 %v2303
      %v2368 = vunpack.c.l.b16 %v2304
      %v2369 = vunpack.c.l.b16 %v2305
      %v2370 = vunpack.c.l.b16 %v2306
      %v2371 = vunpack.c.l.b16 %v2307
      %v2372 = vunpack.c.l.b16 %v2308
      %v2373 = vunpack.c.l.b16 %v2309
      %v2374 = vunpack.c.l.b16 %v2310
      %v2375 = vunpack.c.l.b16 %v2311
      %v2376 = vunpack.c.l.b16 %v2312
      %v2377 = vunpack.c.l.b16 %v2313
      %v2378 = vunpack.c.l.b16 %v2314
      %v2379 = vunpack.c.l.b16 %v2315
      %v2380 = vunpack.c.l.b16 %v2316
      %v2381 = vunpack.c.l.b16 %v2317
      %v2382 = vunpack.c.l.b16 %v2318
      %v2383 = vunpack.c.l.b16 %v2319
      %v2384 = vunpack.c.l.b16 %v2320
      %v2385 = vunpack.c.l.b16 %v2321
      %v2386 = vunpack.c.l.b16 %v2322
      %v2387 = vunpack.c.l.b16 %v2323
      %v2388 = vunpack.c.l.b16 %v2324
      %v2389 = vunpack.c.l.b16 %v2325
      %v2390 = vpack.c.b16 %v2359, %v2358
      %v2391 = vpack.c.b16 %v2361, %v2360
      %v2392 = vpack.c.b16 %v2363, %v2362
      %v2393 = vpack.c.b16 %v2365, %v2364
      %v2394 = vpack.c.b16 %v2367, %v2366
      %v2395 = vpack.c.b16 %v2369, %v2368
      %v2396 = vpack.c.b16 %v2371, %v2370
      %v2397 = vpack.c.b16 %v2373, %v2372
      %v2398 = vpack.c.b16 %v2375, %v2374
      %v2399 = vpack.c.b16 %v2377, %v2376
      %v2400 = vpack.c.b16 %v2379, %v2378
      %v2401 = vpack.c.b16 %v2381, %v2380
      %v2402 = vpack.c.b16 %v2383, %v2382
      %v2403 = vpack.c.b16 %v2385, %v2384
      %v2404 = vpack.c.b16 %v2387, %v2386
      %v2405 = vpack.c.b16 %v2389, %v2388
      %2422 = vmatprep.subr.bf16.mxu0 %v1445
      %2423 = vmatpush1.bf16.msra.mxu0 %v1444
      %2424 = vmatprep.subr.bf16.mxu0 %v1447
      %2425 = vmatpush1.bf16.msra.mxu0 %v1446
      %2426 = vmatprep.subr.bf16.mxu0 %v1449
      %2427 = vmatpush1.bf16.msra.mxu0 %v1448
      %2428 = vmatprep.subr.bf16.mxu0 %v1451
      %2429 = vmatpush1.bf16.msra.mxu0 %v1450
      %2430 = vmatprep.subr.bf16.mxu0 %v1453
      %2431 = vmatpush1.bf16.msra.mxu0 %v1452
      %2432 = vmatprep.subr.bf16.mxu0 %v1455
      %2433 = vmatpush1.bf16.msra.mxu0 %v1454
      %2434 = vmatprep.subr.bf16.mxu0 %v1457
      %2435 = vmatpush1.bf16.msra.mxu0 %v1456
      %2436 = vmatprep.subr.bf16.mxu0 %v1459
      %2437 = vmatpush1.bf16.msra.mxu0 %v1458
      %2438 = vmatprep.subr.bf16.mxu0 0
      %2439 = vmatpush1.bf16.msra.mxu0 0
      %2440 = vmatprep.subr.bf16.mxu0 0
      %2441 = vmatpush1.bf16.msra.mxu0 0
      %2442 = vmatprep.subr.bf16.mxu0 0
      %2443 = vmatpush1.bf16.msra.mxu0 0
      %2444 = vmatprep.subr.bf16.mxu0 0
      %2445 = vmatpush1.bf16.msra.mxu0 0
      %2446 = vmatprep.subr.bf16.mxu0 0
      %2447 = vmatpush1.bf16.msra.mxu0 0
      %2448 = vmatprep.subr.bf16.mxu0 0
      %2449 = vmatpush1.bf16.msra.mxu0 0
      %2450 = vmatprep.subr.bf16.mxu0 0
      %2451 = vmatpush1.bf16.msra.mxu0 0
      %2452 = vmatprep.subr.bf16.mxu0 0
      %2453 = vmatpush1.bf16.msra.mxu0 0
      %2454 = vmatprep.mubr.bf16.mxu0 0
      %2455 = vmatmul.mubr.bf16.gmra.mrb[0].mxu0 %v2390
      %v2456 = vpop.f32.mrb[0].mxu0
      %v2457 = vadd.f32 0.0, %v2456
      %v2458 = vpop.f32.mrb[0].mxu0
      %v2459 = vadd.f32 0.0, %v2458
      %v2460 = vpop.f32.mrb[0].mxu0
      %v2461 = vadd.f32 0.0, %v2460
      %v2462 = vpop.f32.mrb[0].mxu0
      %v2463 = vadd.f32 0.0, %v2462
      %2464 = vmatprep.mubr.bf16.mxu0 0
      %2465 = vmatmul.mubr.bf16.gmra.mrb[0].mxu0 %v2391
      %v2466 = vpop.f32.mrb[0].mxu0
      %v2467 = vadd.f32 0.0, %v2466
      %v2468 = vpop.f32.mrb[0].mxu0
      %v2469 = vadd.f32 0.0, %v2468
      %v2470 = vpop.f32.mrb[0].mxu0
      %v2471 = vadd.f32 0.0, %v2470
      %v2472 = vpop.f32.mrb[0].mxu0
      %v2473 = vadd.f32 0.0, %v2472
      %2474 = vmatprep.mubr.bf16.mxu0 0
      %2475 = vmatmul.mubr.bf16.gmra.mrb[0].mxu0 %v2392
      %v2476 = vpop.f32.mrb[0].mxu0
      %v2477 = vadd.f32 0.0, %v2476
      %v2478 = vpop.f32.mrb[0].mxu0
      %v2479 = vadd.f32 0.0, %v2478
      %v2480 = vpop.f32.mrb[0].mxu0
      %v2481 = vadd.f32 0.0, %v2480
      %v2482 = vpop.f32.mrb[0].mxu0
      %v2483 = vadd.f32 0.0, %v2482
      %2484 = vmatprep.mubr.bf16.mxu0 0
      %2485 = vmatmul.mubr.bf16.gmra.mrb[0].mxu0 %v2393
      %v2486 = vpop.f32.mrb[0].mxu0
      %v2487 = vadd.f32 0.0, %v2486
      %v2488 = vpop.f32.mrb[0].mxu0
      %v2489 = vadd.f32 0.0, %v2488
      %v2490 = vpop.f32.mrb[0].mxu0
      %v2491 = vadd.f32 0.0, %v2490
      %v2492 = vpop.f32.mrb[0].mxu0
      %v2493 = vadd.f32 0.0, %v2492
      %2494 = vmatprep.mubr.bf16.mxu0 0
      %2495 = vmatmul.mubr.bf16.gmra.mrb[0].mxu0 %v2394
      %v2496 = vpop.f32.mrb[0].mxu0
      %v2497 = vadd.f32 0.0, %v2496
      %v2498 = vpop.f32.mrb[0].mxu0
      %v2499 = vadd.f32 0.0, %v2498
      %v2500 = vpop.f32.mrb[0].mxu0
      %v2501 = vadd.f32 0.0, %v2500
      %v2502 = vpop.f32.mrb[0].mxu0
      %v2503 = vadd.f32 0.0, %v2502
      %2504 = vmatprep.mubr.bf16.mxu0 0
      %2505 = vmatmul.mubr.bf16.gmra.mrb[0].mxu0 %v2395
      %v2506 = vpop.f32.mrb[0].mxu0
      %v2507 = vadd.f32 0.0, %v2506
      %v2508 = vpop.f32.mrb[0].mxu0
      %v2509 = vadd.f32 0.0, %v2508
      %v2510 = vpop.f32.mrb[0].mxu0
      %v2511 = vadd.f32 0.0, %v2510
      %v2512 = vpop.f32.mrb[0].mxu0
      %v2513 = vadd.f32 0.0, %v2512
      %2514 = vmatprep.mubr.bf16.mxu0 0
      %2515 = vmatmul.mubr.bf16.gmra.mrb[0].mxu0 %v2396
      %v2516 = vpop.f32.mrb[0].mxu0
      %v2517 = vadd.f32 0.0, %v2516
      %v2518 = vpop.f32.mrb[0].mxu0
      %v2519 = vadd.f32 0.0, %v2518
      %v2520 = vpop.f32.mrb[0].mxu0
      %v2521 = vadd.f32 0.0, %v2520
      %v2522 = vpop.f32.mrb[0].mxu0
      %v2523 = vadd.f32 0.0, %v2522
      %2524 = vmatprep.mubr.bf16.mxu0 0
      %2525 = vmatmul.mubr.bf16.gmra.mrb[0].mxu0 %v2397
      %v2526 = vpop.f32.mrb[0].mxu0
      %v2527 = vadd.f32 0.0, %v2526
      %v2528 = vpop.f32.mrb[0].mxu0
      %v2529 = vadd.f32 0.0, %v2528
      %v2530 = vpop.f32.mrb[0].mxu0
      %v2531 = vadd.f32 0.0, %v2530
      %v2532 = vpop.f32.mrb[0].mxu0
      %v2533 = vadd.f32 0.0, %v2532
      %2534 = vmatprep.mubr.bf16.mxu0 0
      %2535 = vmatmul.mubr.bf16.gmra.mrb[0].mxu0 %v2398
      %v2536 = vpop.f32.mrb[0].mxu0
      %v2537 = vadd.f32 0.0, %v2536
      %v2538 = vpop.f32.mrb[0].mxu0
      %v2539 = vadd.f32 0.0, %v2538
      %v2540 = vpop.f32.mrb[0].mxu0
      %v2541 = vadd.f32 0.0, %v2540
      %v2542 = vpop.f32.mrb[0].mxu0
      %v2543 = vadd.f32 0.0, %v2542
      %2544 = vmatprep.mubr.bf16.mxu0 0
      %2545 = vmatmul.mubr.bf16.gmra.mrb[0].mxu0 %v2399
      %v2546 = vpop.f32.mrb[0].mxu0
      %v2547 = vadd.f32 0.0, %v2546
      %v2548 = vpop.f32.mrb[0].mxu0
      %v2549 = vadd.f32 0.0, %v2548
      %v2550 = vpop.f32.mrb[0].mxu0
      %v2551 = vadd.f32 0.0, %v2550
      %v2552 = vpop.f32.mrb[0].mxu0
      %v2553 = vadd.f32 0.0, %v2552
      %2554 = vmatprep.mubr.bf16.mxu0 0
      %2555 = vmatmul.mubr.bf16.gmra.mrb[0].mxu0 %v2400
      %v2556 = vpop.f32.mrb[0].mxu0
      %v2557 = vadd.f32 0.0, %v2556
      %v2558 = vpop.f32.mrb[0].mxu0
      %v2559 = vadd.f32 0.0, %v2558
      %v2560 = vpop.f32.mrb[0].mxu0
      %v2561 = vadd.f32 0.0, %v2560
      %v2562 = vpop.f32.mrb[0].mxu0
      %v2563 = vadd.f32 0.0, %v2562
      %2564 = vmatprep.mubr.bf16.mxu0 0
      %2565 = vmatmul.mubr.bf16.gmra.mrb[0].mxu0 %v2401
      %v2566 = vpop.f32.mrb[0].mxu0
      %v2567 = vadd.f32 0.0, %v2566
      %v2568 = vpop.f32.mrb[0].mxu0
      %v2569 = vadd.f32 0.0, %v2568
      %v2570 = vpop.f32.mrb[0].mxu0
      %v2571 = vadd.f32 0.0, %v2570
      %v2572 = vpop.f32.mrb[0].mxu0
      %v2573 = vadd.f32 0.0, %v2572
      %2574 = vmatprep.mubr.bf16.mxu0 0
      %2575 = vmatmul.mubr.bf16.gmra.mrb[0].mxu0 %v2402
      %v2576 = vpop.f32.mrb[0].mxu0
      %v2577 = vadd.f32 0.0, %v2576
      %v2578 = vpop.f32.mrb[0].mxu0
      %v2579 = vadd.f32 0.0, %v2578
      %v2580 = vpop.f32.mrb[0].mxu0
      %v2581 = vadd.f32 0.0, %v2580
      %v2582 = vpop.f32.mrb[0].mxu0
      %v2583 = vadd.f32 0.0, %v2582
      %2584 = vmatprep.mubr.bf16.mxu0 0
      %2585 = vmatmul.mubr.bf16.gmra.mrb[0].mxu0 %v2403
      %v2586 = vpop.f32.mrb[0].mxu0
      %v2587 = vadd.f32 0.0, %v2586
      %v2588 = vpop.f32.mrb[0].mxu0
      %v2589 = vadd.f32 0.0, %v2588
      %v2590 = vpop.f32.mrb[0].mxu0
      %v2591 = vadd.f32 0.0, %v2590
      %v2592 = vpop.f32.mrb[0].mxu0
      %v2593 = vadd.f32 0.0, %v2592
      %2594 = vmatprep.mubr.bf16.mxu0 0
      %2595 = vmatmul.mubr.bf16.gmra.mrb[0].mxu0 %v2404
      %v2596 = vpop.f32.mrb[0].mxu0
      %v2597 = vadd.f32 0.0, %v2596
      %v2598 = vpop.f32.mrb[0].mxu0
      %v2599 = vadd.f32 0.0, %v2598
      %v2600 = vpop.f32.mrb[0].mxu0
      %v2601 = vadd.f32 0.0, %v2600
      %v2602 = vpop.f32.mrb[0].mxu0
      %v2603 = vadd.f32 0.0, %v2602
      %2604 = vmatprep.mubr.bf16.mxu0 0
      %2605 = vmatmul.mubr.bf16.gmra.mrb[0].mxu0 %v2405
      %v2606 = vpop.f32.mrb[0].mxu0
      %v2607 = vadd.f32 0.0, %v2606
      %v2608 = vpop.f32.mrb[0].mxu0
      %v2609 = vadd.f32 0.0, %v2608
      %v2610 = vpop.f32.mrb[0].mxu0
      %v2611 = vadd.f32 0.0, %v2610
      %v2612 = vpop.f32.mrb[0].mxu0
      %v2613 = vadd.f32 0.0, %v2612
      %2614 = vdwg.mxu0
      %v2615 = vmax.f32 %v2457, %v2459
      %2616 = vmax.xlane.f32.xlu0 %v2615
      %v2617 = vpop.xlane.xlu0 %2616
      %v2618 = vmax.f32 %v2461, %v2463
      %2619 = vmax.xlane.f32.xlu0 %v2618
      %v2620 = vpop.xlane.xlu0 %2619
      %v2621 = vmax.f32 %v2467, %v2469
      %2622 = vmax.xlane.f32.xlu0 %v2621
      %v2623 = vpop.xlane.xlu0 %2622
      %v2624 = vmax.f32 %v2471, %v2473
      %2625 = vmax.xlane.f32.xlu0 %v2624
      %v2626 = vpop.xlane.xlu0 %2625
      %v2627 = vmax.f32 %v2477, %v2479
      %2628 = vmax.xlane.f32.xlu0 %v2627
      %v2629 = vpop.xlane.xlu0 %2628
      %v2630 = vmax.f32 %v2481, %v2483
      %2631 = vmax.xlane.f32.xlu0 %v2630
      %v2632 = vpop.xlane.xlu0 %2631
      %v2633 = vmax.f32 %v2487, %v2489
      %2634 = vmax.xlane.f32.xlu0 %v2633
      %v2635 = vpop.xlane.xlu0 %2634
      %v2636 = vmax.f32 %v2491, %v2493
      %2637 = vmax.xlane.f32.xlu0 %v2636
      %v2638 = vpop.xlane.xlu0 %2637
      %v2639 = vmax.f32 %v2497, %v2499
      %2640 = vmax.xlane.f32.xlu0 %v2639
      %v2641 = vpop.xlane.xlu0 %2640
      %v2642 = vmax.f32 %v2501, %v2503
      %2643 = vmax.xlane.f32.xlu0 %v2642
      %v2644 = vpop.xlane.xlu0 %2643
      %v2645 = vmax.f32 %v2507, %v2509
      %2646 = vmax.xlane.f32.xlu0 %v2645
      %v2647 = vpop.xlane.xlu0 %2646
      %v2648 = vmax.f32 %v2511, %v2513
      %2649 = vmax.xlane.f32.xlu0 %v2648
      %v2650 = vpop.xlane.xlu0 %2649
      %v2651 = vmax.f32 %v2517, %v2519
      %2652 = vmax.xlane.f32.xlu0 %v2651
      %v2653 = vpop.xlane.xlu0 %2652
      %v2654 = vmax.f32 %v2521, %v2523
      %2655 = vmax.xlane.f32.xlu0 %v2654
      %v2656 = vpop.xlane.xlu0 %2655
      %v2657 = vmax.f32 %v2527, %v2529
      %2658 = vmax.xlane.f32.xlu0 %v2657
      %v2659 = vpop.xlane.xlu0 %2658
      %v2660 = vmax.f32 %v2531, %v2533
      %2661 = vmax.xlane.f32.xlu0 %v2660
      %v2662 = vpop.xlane.xlu0 %2661
      %v2663 = vmax.f32 %v2537, %v2539
      %2664 = vmax.xlane.f32.xlu0 %v2663
      %v2665 = vpop.xlane.xlu0 %2664
      %v2666 = vmax.f32 %v2541, %v2543
      %2667 = vmax.xlane.f32.xlu0 %v2666
      %v2668 = vpop.xlane.xlu0 %2667
      %v2669 = vmax.f32 %v2547, %v2549
      %2670 = vmax.xlane.f32.xlu0 %v2669
      %v2671 = vpop.xlane.xlu0 %2670
      %v2672 = vmax.f32 %v2551, %v2553
      %2673 = vmax.xlane.f32.xlu0 %v2672
      %v2674 = vpop.xlane.xlu0 %2673
      %v2675 = vmax.f32 %v2557, %v2559
      %2676 = vmax.xlane.f32.xlu0 %v2675
      %v2677 = vpop.xlane.xlu0 %2676
      %v2678 = vmax.f32 %v2561, %v2563
      %2679 = vmax.xlane.f32.xlu0 %v2678
      %v2680 = vpop.xlane.xlu0 %2679
      %v2681 = vmax.f32 %v2567, %v2569
      %2682 = vmax.xlane.f32.xlu0 %v2681
      %v2683 = vpop.xlane.xlu0 %2682
      %v2684 = vmax.f32 %v2571, %v2573
      %2685 = vmax.xlane.f32.xlu0 %v2684
      %v2686 = vpop.xlane.xlu0 %2685
      %v2687 = vmax.f32 %v2577, %v2579
      %2688 = vmax.xlane.f32.xlu0 %v2687
      %v2689 = vpop.xlane.xlu0 %2688
      %v2690 = vmax.f32 %v2581, %v2583
      %2691 = vmax.xlane.f32.xlu0 %v2690
      %v2692 = vpop.xlane.xlu0 %2691
      %v2693 = vmax.f32 %v2587, %v2589
      %2694 = vmax.xlane.f32.xlu0 %v2693
      %v2695 = vpop.xlane.xlu0 %2694
      %v2696 = vmax.f32 %v2591, %v2593
      %2697 = vmax.xlane.f32.xlu0 %v2696
      %v2698 = vpop.xlane.xlu0 %2697
      %v2699 = vmax.f32 %v2597, %v2599
      %2700 = vmax.xlane.f32.xlu0 %v2699
      %v2701 = vpop.xlane.xlu0 %2700
      %v2702 = vmax.f32 %v2601, %v2603
      %2703 = vmax.xlane.f32.xlu0 %v2702
      %v2704 = vpop.xlane.xlu0 %2703
      %v2705 = vmax.f32 %v2607, %v2609
      %2706 = vmax.xlane.f32.xlu0 %v2705
      %v2707 = vpop.xlane.xlu0 %2706
      %v2708 = vmax.f32 %v2611, %v2613
      %2709 = vmax.xlane.f32.xlu0 %v2708
      %v2710 = vpop.xlane.xlu0 %2709
      %v2711 = vld [vmem:[%s9 + $0x180] sm:$0xf]
      %v2712 = vld [vmem:[%s9 + $0x184] sm:$0xf]
      %v2713 = vld [vmem:[%s9 + $0x188] sm:$0xf]
      %v2714 = vld [vmem:[%s9 + $0x18c] sm:$0xf]
      %v2715 = vld [vmem:[%s9 + $0x190] sm:$0xf]
      %v2716 = vld [vmem:[%s9 + $0x194] sm:$0xf]
      %v2717 = vld [vmem:[%s9 + $0x198] sm:$0xf]
      %v2718 = vld [vmem:[%s9 + $0x19c] sm:$0xf]
      %v2719 = vld [vmem:[%s9 + $0x1a0] sm:$0xf]
      %v2720 = vld [vmem:[%s9 + $0x1a4] sm:$0xf]
      %v2721 = vld [vmem:[%s9 + $0x1a8] sm:$0xf]
      %v2722 = vld [vmem:[%s9 + $0x1ac] sm:$0xf]
      %v2723 = vld [vmem:[%s9 + $0x1b0] sm:$0xf]
      %v2724 = vld [vmem:[%s9 + $0x1b4] sm:$0xf]
      %v2725 = vld [vmem:[%s9 + $0x1b8] sm:$0xf]
      %v2726 = vld [vmem:[%s9 + $0x1bc] sm:$0xf]
      %v2727 = vld [vmem:[%s9 + $0x1c0] sm:$0xf]
      %v2728 = vld [vmem:[%s9 + $0x1c4] sm:$0xf]
      %v2729 = vld [vmem:[%s9 + $0x1c8] sm:$0xf]
      %v2730 = vld [vmem:[%s9 + $0x1cc] sm:$0xf]
      %v2731 = vld [vmem:[%s9 + $0x1d0] sm:$0xf]
      %v2732 = vld [vmem:[%s9 + $0x1d4] sm:$0xf]
      %v2733 = vld [vmem:[%s9 + $0x1d8] sm:$0xf]
      %v2734 = vld [vmem:[%s9 + $0x1dc] sm:$0xf]
      %v2735 = vld [vmem:[%s9 + $0x1e0] sm:$0xf]
      %v2736 = vld [vmem:[%s9 + $0x1e4] sm:$0xf]
      %v2737 = vld [vmem:[%s9 + $0x1e8] sm:$0xf]
      %v2738 = vld [vmem:[%s9 + $0x1ec] sm:$0xf]
      %v2739 = vld [vmem:[%s9 + $0x1f0] sm:$0xf]
      %v2740 = vld [vmem:[%s9 + $0x1f4] sm:$0xf]
      %v2741 = vld [vmem:[%s9 + $0x1f8] sm:$0xf]
      %v2742 = vld [vmem:[%s9 + $0x1fc] sm:$0xf]
      %v2775 = vunpack.c.l.b16 %v2711
      %v2776 = vunpack.c.l.b16 %v2712
      %v2777 = vunpack.c.l.b16 %v2713
      %v2778 = vunpack.c.l.b16 %v2714
      %v2779 = vunpack.c.l.b16 %v2715
      %v2780 = vunpack.c.l.b16 %v2716
      %v2781 = vunpack.c.l.b16 %v2717
      %v2782 = vunpack.c.l.b16 %v2718
      %v2783 = vunpack.c.l.b16 %v2719
      %v2784 = vunpack.c.l.b16 %v2720
      %v2785 = vunpack.c.l.b16 %v2721
      %v2786 = vunpack.c.l.b16 %v2722
      %v2787 = vunpack.c.l.b16 %v2723
      %v2788 = vunpack.c.l.b16 %v2724
      %v2789 = vunpack.c.l.b16 %v2725
      %v2790 = vunpack.c.l.b16 %v2726
      %v2791 = vunpack.c.l.b16 %v2727
      %v2792 = vunpack.c.l.b16 %v2728
      %v2793 = vunpack.c.l.b16 %v2729
      %v2794 = vunpack.c.l.b16 %v2730
      %v2795 = vunpack.c.l.b16 %v2731
      %v2796 = vunpack.c.l.b16 %v2732
      %v2797 = vunpack.c.l.b16 %v2733
      %v2798 = vunpack.c.l.b16 %v2734
      %v2799 = vunpack.c.l.b16 %v2735
      %v2800 = vunpack.c.l.b16 %v2736
      %v2801 = vunpack.c.l.b16 %v2737
      %v2802 = vunpack.c.l.b16 %v2738
      %v2803 = vunpack.c.l.b16 %v2739
      %v2804 = vunpack.c.l.b16 %v2740
      %v2805 = vunpack.c.l.b16 %v2741
      %v2806 = vunpack.c.l.b16 %v2742
      %v2807 = vpack.c.b16 %v2776, %v2775
      %v2808 = vpack.c.b16 %v2778, %v2777
      %v2809 = vpack.c.b16 %v2780, %v2779
      %v2810 = vpack.c.b16 %v2782, %v2781
      %v2811 = vpack.c.b16 %v2784, %v2783
      %v2812 = vpack.c.b16 %v2786, %v2785
      %v2813 = vpack.c.b16 %v2788, %v2787
      %v2814 = vpack.c.b16 %v2790, %v2789
      %v2815 = vpack.c.b16 %v2792, %v2791
      %v2816 = vpack.c.b16 %v2794, %v2793
      %v2817 = vpack.c.b16 %v2796, %v2795
      %v2818 = vpack.c.b16 %v2798, %v2797
      %v2819 = vpack.c.b16 %v2800, %v2799
      %v2820 = vpack.c.b16 %v2802, %v2801
      %v2821 = vpack.c.b16 %v2804, %v2803
      %v2822 = vpack.c.b16 %v2806, %v2805
      %2839 = vmatprep.subr.bf16.mxu0 %v1445
      %2840 = vmatpush1.bf16.msra.mxu0 %v1444
      %2841 = vmatprep.subr.bf16.mxu0 %v1447
      %2842 = vmatpush1.bf16.msra.mxu0 %v1446
      %2843 = vmatprep.subr.bf16.mxu0 %v1449
      %2844 = vmatpush1.bf16.msra.mxu0 %v1448
      %2845 = vmatprep.subr.bf16.mxu0 %v1451
      %2846 = vmatpush1.bf16.msra.mxu0 %v1450
      %2847 = vmatprep.subr.bf16.mxu0 %v1453
      %2848 = vmatpush1.bf16.msra.mxu0 %v1452
      %2849 = vmatprep.subr.bf16.mxu0 %v1455
      %2850 = vmatpush1.bf16.msra.mxu0 %v1454
      %2851 = vmatprep.subr.bf16.mxu0 %v1457
      %2852 = vmatpush1.bf16.msra.mxu0 %v1456
      %2853 = vmatprep.subr.bf16.mxu0 %v1459
      %2854 = vmatpush1.bf16.msra.mxu0 %v1458
      %2855 = vmatprep.subr.bf16.mxu0 0
      %2856 = vmatpush1.bf16.msra.mxu0 0
      %2857 = vmatprep.subr.bf16.mxu0 0
      %2858 = vmatpush1.bf16.msra.mxu0 0
      %2859 = vmatprep.subr.bf16.mxu0 0
      %2860 = vmatpush1.bf16.msra.mxu0 0
      %2861 = vmatprep.subr.bf16.mxu0 0
      %2862 = vmatpush1.bf16.msra.mxu0 0
      %2863 = vmatprep.subr.bf16.mxu0 0
      %2864 = vmatpush1.bf16.msra.mxu0 0
      %2865 = vmatprep.subr.bf16.mxu0 0
      %2866 = vmatpush1.bf16.msra.mxu0 0
      %2867 = vmatprep.subr.bf16.mxu0 0
      %2868 = vmatpush1.bf16.msra.mxu0 0
      %2869 = vmatprep.subr.bf16.mxu0 0
      %2870 = vmatpush1.bf16.msra.mxu0 0
      %2871 = vmatprep.mubr.bf16.mxu0 0
      %2872 = vmatmul.mubr.bf16.gmra.mrb[0].mxu0 %v2807
      %v2873 = vpop.f32.mrb[0].mxu0
      %v2874 = vadd.f32 0.0, %v2873
      %v2875 = vpop.f32.mrb[0].mxu0
      %v2876 = vadd.f32 0.0, %v2875
      %v2877 = vpop.f32.mrb[0].mxu0
      %v2878 = vadd.f32 0.0, %v2877
      %v2879 = vpop.f32.mrb[0].mxu0
      %v2880 = vadd.f32 0.0, %v2879
      %2881 = vmatprep.mubr.bf16.mxu0 0
      %2882 = vmatmul.mubr.bf16.gmra.mrb[0].mxu0 %v2808
      %v2883 = vpop.f32.mrb[0].mxu0
      %v2884 = vadd.f32 0.0, %v2883
      %v2885 = vpop.f32.mrb[0].mxu0
      %v2886 = vadd.f32 0.0, %v2885
      %v2887 = vpop.f32.mrb[0].mxu0
      %v2888 = vadd.f32 0.0, %v2887
      %v2889 = vpop.f32.mrb[0].mxu0
      %v2890 = vadd.f32 0.0, %v2889
      %2891 = vmatprep.mubr.bf16.mxu0 0
      %2892 = vmatmul.mubr.bf16.gmra.mrb[0].mxu0 %v2809
      %v2893 = vpop.f32.mrb[0].mxu0
      %v2894 = vadd.f32 0.0, %v2893
      %v2895 = vpop.f32.mrb[0].mxu0
      %v2896 = vadd.f32 0.0, %v2895
      %v2897 = vpop.f32.mrb[0].mxu0
      %v2898 = vadd.f32 0.0, %v2897
      %v2899 = vpop.f32.mrb[0].mxu0
      %v2900 = vadd.f32 0.0, %v2899
      %2901 = vmatprep.mubr.bf16.mxu0 0
      %2902 = vmatmul.mubr.bf16.gmra.mrb[0].mxu0 %v2810
      %v2903 = vpop.f32.mrb[0].mxu0
      %v2904 = vadd.f32 0.0, %v2903
      %v2905 = vpop.f32.mrb[0].mxu0
      %v2906 = vadd.f32 0.0, %v2905
      %v2907 = vpop.f32.mrb[0].mxu0
      %v2908 = vadd.f32 0.0, %v2907
      %v2909 = vpop.f32.mrb[0].mxu0
      %v2910 = vadd.f32 0.0, %v2909
      %2911 = vmatprep.mubr.bf16.mxu0 0
      %2912 = vmatmul.mubr.bf16.gmra.mrb[0].mxu0 %v2811
      %v2913 = vpop.f32.mrb[0].mxu0
      %v2914 = vadd.f32 0.0, %v2913
      %v2915 = vpop.f32.mrb[0].mxu0
      %v2916 = vadd.f32 0.0, %v2915
      %v2917 = vpop.f32.mrb[0].mxu0
      %v2918 = vadd.f32 0.0, %v2917
      %v2919 = vpop.f32.mrb[0].mxu0
      %v2920 = vadd.f32 0.0, %v2919
      %2921 = vmatprep.mubr.bf16.mxu0 0
      %2922 = vmatmul.mubr.bf16.gmra.mrb[0].mxu0 %v2812
      %v2923 = vpop.f32.mrb[0].mxu0
      %v2924 = vadd.f32 0.0, %v2923
      %v2925 = vpop.f32.mrb[0].mxu0
      %v2926 = vadd.f32 0.0, %v2925
      %v2927 = vpop.f32.mrb[0].mxu0
      %v2928 = vadd.f32 0.0, %v2927
      %v2929 = vpop.f32.mrb[0].mxu0
      %v2930 = vadd.f32 0.0, %v2929
      %2931 = vmatprep.mubr.bf16.mxu0 0
      %2932 = vmatmul.mubr.bf16.gmra.mrb[0].mxu0 %v2813
      %v2933 = vpop.f32.mrb[0].mxu0
      %v2934 = vadd.f32 0.0, %v2933
      %v2935 = vpop.f32.mrb[0].mxu0
      %v2936 = vadd.f32 0.0, %v2935
      %v2937 = vpop.f32.mrb[0].mxu0
      %v2938 = vadd.f32 0.0, %v2937
      %v2939 = vpop.f32.mrb[0].mxu0
      %v2940 = vadd.f32 0.0, %v2939
      %2941 = vmatprep.mubr.bf16.mxu0 0
      %2942 = vmatmul.mubr.bf16.gmra.mrb[0].mxu0 %v2814
      %v2943 = vpop.f32.mrb[0].mxu0
      %v2944 = vadd.f32 0.0, %v2943
      %v2945 = vpop.f32.mrb[0].mxu0
      %v2946 = vadd.f32 0.0, %v2945
      %v2947 = vpop.f32.mrb[0].mxu0
      %v2948 = vadd.f32 0.0, %v2947
      %v2949 = vpop.f32.mrb[0].mxu0
      %v2950 = vadd.f32 0.0, %v2949
      %2951 = vmatprep.mubr.bf16.mxu0 0
      %2952 = vmatmul.mubr.bf16.gmra.mrb[0].mxu0 %v2815
      %v2953 = vpop.f32.mrb[0].mxu0
      %v2954 = vadd.f32 0.0, %v2953
      %v2955 = vpop.f32.mrb[0].mxu0
      %v2956 = vadd.f32 0.0, %v2955
      %v2957 = vpop.f32.mrb[0].mxu0
      %v2958 = vadd.f32 0.0, %v2957
      %v2959 = vpop.f32.mrb[0].mxu0
      %v2960 = vadd.f32 0.0, %v2959
      %2961 = vmatprep.mubr.bf16.mxu0 0
      %2962 = vmatmul.mubr.bf16.gmra.mrb[0].mxu0 %v2816
      %v2963 = vpop.f32.mrb[0].mxu0
      %v2964 = vadd.f32 0.0, %v2963
      %v2965 = vpop.f32.mrb[0].mxu0
      %v2966 = vadd.f32 0.0, %v2965
      %v2967 = vpop.f32.mrb[0].mxu0
      %v2968 = vadd.f32 0.0, %v2967
      %v2969 = vpop.f32.mrb[0].mxu0
      %v2970 = vadd.f32 0.0, %v2969
      %2971 = vmatprep.mubr.bf16.mxu0 0
      %2972 = vmatmul.mubr.bf16.gmra.mrb[0].mxu0 %v2817
      %v2973 = vpop.f32.mrb[0].mxu0
      %v2974 = vadd.f32 0.0, %v2973
      %v2975 = vpop.f32.mrb[0].mxu0
      %v2976 = vadd.f32 0.0, %v2975
      %v2977 = vpop.f32.mrb[0].mxu0
      %v2978 = vadd.f32 0.0, %v2977
      %v2979 = vpop.f32.mrb[0].mxu0
      %v2980 = vadd.f32 0.0, %v2979
      %2981 = vmatprep.mubr.bf16.mxu0 0
      %2982 = vmatmul.mubr.bf16.gmra.mrb[0].mxu0 %v2818
      %v2983 = vpop.f32.mrb[0].mxu0
      %v2984 = vadd.f32 0.0, %v2983
      %v2985 = vpop.f32.mrb[0].mxu0
      %v2986 = vadd.f32 0.0, %v2985
      %v2987 = vpop.f32.mrb[0].mxu0
      %v2988 = vadd.f32 0.0, %v2987
      %v2989 = vpop.f32.mrb[0].mxu0
      %v2990 = vadd.f32 0.0, %v2989
      %2991 = vmatprep.mubr.bf16.mxu0 0
      %2992 = vmatmul.mubr.bf16.gmra.mrb[0].mxu0 %v2819
      %v2993 = vpop.f32.mrb[0].mxu0
      %v2994 = vadd.f32 0.0, %v2993
      %v2995 = vpop.f32.mrb[0].mxu0
      %v2996 = vadd.f32 0.0, %v2995
      %v2997 = vpop.f32.mrb[0].mxu0
      %v2998 = vadd.f32 0.0, %v2997
      %v2999 = vpop.f32.mrb[0].mxu0
      %v3000 = vadd.f32 0.0, %v2999
      %3001 = vmatprep.mubr.bf16.mxu0 0
      %3002 = vmatmul.mubr.bf16.gmra.mrb[0].mxu0 %v2820
      %v3003 = vpop.f32.mrb[0].mxu0
      %v3004 = vadd.f32 0.0, %v3003
      %v3005 = vpop.f32.mrb[0].mxu0
      %v3006 = vadd.f32 0.0, %v3005
      %v3007 = vpop.f32.mrb[0].mxu0
      %v3008 = vadd.f32 0.0, %v3007
      %v3009 = vpop.f32.mrb[0].mxu0
      %v3010 = vadd.f32 0.0, %v3009
      %3011 = vmatprep.mubr.bf16.mxu0 0
      %3012 = vmatmul.mubr.bf16.gmra.mrb[0].mxu0 %v2821
      %v3013 = vpop.f32.mrb[0].mxu0
      %v3014 = vadd.f32 0.0, %v3013
      %v3015 = vpop.f32.mrb[0].mxu0
      %v3016 = vadd.f32 0.0, %v3015
      %v3017 = vpop.f32.mrb[0].mxu0
      %v3018 = vadd.f32 0.0, %v3017
      %v3019 = vpop.f32.mrb[0].mxu0
      %v3020 = vadd.f32 0.0, %v3019
      %3021 = vmatprep.mubr.bf16.mxu0 0
      %3022 = vmatmul.mubr.bf16.gmra.mrb[0].mxu0 %v2822
      %v3023 = vpop.f32.mrb[0].mxu0
      %v3024 = vadd.f32 0.0, %v3023
      %v3025 = vpop.f32.mrb[0].mxu0
      %v3026 = vadd.f32 0.0, %v3025
      %v3027 = vpop.f32.mrb[0].mxu0
      %v3028 = vadd.f32 0.0, %v3027
      %v3029 = vpop.f32.mrb[0].mxu0
      %v3030 = vadd.f32 0.0, %v3029
      %3031 = vdwg.mxu0
      %v3032 = vmax.f32 %v2874, %v2876
      %3033 = vmax.xlane.f32.xlu0 %v3032
      %v3034 = vpop.xlane.xlu0 %3033
      %v3035 = vmax.f32 %v2878, %v2880
      %3036 = vmax.xlane.f32.xlu0 %v3035
      %v3037 = vpop.xlane.xlu0 %3036
      %v3038 = vmax.f32 %v2884, %v2886
      %3039 = vmax.xlane.f32.xlu0 %v3038
      %v3040 = vpop.xlane.xlu0 %3039
      %v3041 = vmax.f32 %v2888, %v2890
      %3042 = vmax.xlane.f32.xlu0 %v3041
      %v3043 = vpop.xlane.xlu0 %3042
      %v3044 = vmax.f32 %v2894, %v2896
      %3045 = vmax.xlane.f32.xlu0 %v3044
      %v3046 = vpop.xlane.xlu0 %3045
      %v3047 = vmax.f32 %v2898, %v2900
      %3048 = vmax.xlane.f32.xlu0 %v3047
      %v3049 = vpop.xlane.xlu0 %3048
      %v3050 = vmax.f32 %v2904, %v2906
      %3051 = vmax.xlane.f32.xlu0 %v3050
      %v3052 = vpop.xlane.xlu0 %3051
      %v3053 = vmax.f32 %v2908, %v2910
      %3054 = vmax.xlane.f32.xlu0 %v3053
      %v3055 = vpop.xlane.xlu0 %3054
      %v3056 = vmax.f32 %v2914, %v2916
      %3057 = vmax.xlane.f32.xlu0 %v3056
      %v3058 = vpop.xlane.xlu0 %3057
      %v3059 = vmax.f32 %v2918, %v2920
      %3060 = vmax.xlane.f32.xlu0 %v3059
      %v3061 = vpop.xlane.xlu0 %3060
      %v3062 = vmax.f32 %v2924, %v2926
      %3063 = vmax.xlane.f32.xlu0 %v3062
      %v3064 = vpop.xlane.xlu0 %3063
      %v3065 = vmax.f32 %v2928, %v2930
      %3066 = vmax.xlane.f32.xlu0 %v3065
      %v3067 = vpop.xlane.xlu0 %3066
      %v3068 = vmax.f32 %v2934, %v2936
      %3069 = vmax.xlane.f32.xlu0 %v3068
      %v3070 = vpop.xlane.xlu0 %3069
      %v3071 = vmax.f32 %v2938, %v2940
      %3072 = vmax.xlane.f32.xlu0 %v3071
      %v3073 = vpop.xlane.xlu0 %3072
      %v3074 = vmax.f32 %v2944, %v2946
      %3075 = vmax.xlane.f32.xlu0 %v3074
      %v3076 = vpop.xlane.xlu0 %3075
      %v3077 = vmax.f32 %v2948, %v2950
      %3078 = vmax.xlane.f32.xlu0 %v3077
      %v3079 = vpop.xlane.xlu0 %3078
      %v3080 = vmax.f32 %v2954, %v2956
      %3081 = vmax.xlane.f32.xlu0 %v3080
      %v3082 = vpop.xlane.xlu0 %3081
      %v3083 = vmax.f32 %v2958, %v2960
      %3084 = vmax.xlane.f32.xlu0 %v3083
      %v3085 = vpop.xlane.xlu0 %3084
      %v3086 = vmax.f32 %v2964, %v2966
      %3087 = vmax.xlane.f32.xlu0 %v3086
      %v3088 = vpop.xlane.xlu0 %3087
      %v3089 = vmax.f32 %v2968, %v2970
      %3090 = vmax.xlane.f32.xlu0 %v3089
      %v3091 = vpop.xlane.xlu0 %3090
      %v3092 = vmax.f32 %v2974, %v2976
      %3093 = vmax.xlane.f32.xlu0 %v3092
      %v3094 = vpop.xlane.xlu0 %3093
      %v3095 = vmax.f32 %v2978, %v2980
      %3096 = vmax.xlane.f32.xlu0 %v3095
      %v3097 = vpop.xlane.xlu0 %3096
      %v3098 = vmax.f32 %v2984, %v2986
      %3099 = vmax.xlane.f32.xlu0 %v3098
      %v3100 = vpop.xlane.xlu0 %3099
      %v3101 = vmax.f32 %v2988, %v2990
      %3102 = vmax.xlane.f32.xlu0 %v3101
      %v3103 = vpop.xlane.xlu0 %3102
      %v3104 = vmax.f32 %v2994, %v2996
      %3105 = vmax.xlane.f32.xlu0 %v3104
      %v3106 = vpop.xlane.xlu0 %3105
      %v3107 = vmax.f32 %v2998, %v3000
      %3108 = vmax.xlane.f32.xlu0 %v3107
      %v3109 = vpop.xlane.xlu0 %3108
      %v3110 = vmax.f32 %v3004, %v3006
      %3111 = vmax.xlane.f32.xlu0 %v3110
      %v3112 = vpop.xlane.xlu0 %3111
      %v3113 = vmax.f32 %v3008, %v3010
      %3114 = vmax.xlane.f32.xlu0 %v3113
      %v3115 = vpop.xlane.xlu0 %3114
      %v3116 = vmax.f32 %v3014, %v3016
      %3117 = vmax.xlane.f32.xlu0 %v3116
      %v3118 = vpop.xlane.xlu0 %3117
      %v3119 = vmax.f32 %v3018, %v3020
      %3120 = vmax.xlane.f32.xlu0 %v3119
      %v3121 = vpop.xlane.xlu0 %3120
      %v3122 = vmax.f32 %v3024, %v3026
      %3123 = vmax.xlane.f32.xlu0 %v3122
      %v3124 = vpop.xlane.xlu0 %3123
      %v3125 = vmax.f32 %v3028, %v3030
      %3126 = vmax.xlane.f32.xlu0 %v3125
      %v3127 = vpop.xlane.xlu0 %3126
      %v3128 = vld [vmem:[%s10] sm:$0xff]
      %v3129 = vld [vmem:[%s10 + $0x8] sm:$0xff]
      %v3130 = vld [vmem:[%s10 + $0x10] sm:$0xff]
      %v3131 = vld [vmem:[%s10 + $0x18] sm:$0xff]
      %v3132 = vld [vmem:[%s10 + $0x20] sm:$0xff]
      %v3133 = vld [vmem:[%s10 + $0x28] sm:$0xff]
      %v3134 = vld [vmem:[%s10 + $0x30] sm:$0xff]
      %v3135 = vld [vmem:[%s10 + $0x38] sm:$0xff]
      %v3136 = vld [vmem:[%s10 + $0x40] sm:$0xff]
      %v3137 = vld [vmem:[%s10 + $0x48] sm:$0xff]
      %v3138 = vld [vmem:[%s10 + $0x50] sm:$0xff]
      %v3139 = vld [vmem:[%s10 + $0x58] sm:$0xff]
      %v3140 = vld [vmem:[%s10 + $0x60] sm:$0xff]
      %v3141 = vld [vmem:[%s10 + $0x68] sm:$0xff]
      %v3142 = vld [vmem:[%s10 + $0x70] sm:$0xff]
      %v3143 = vld [vmem:[%s10 + $0x78] sm:$0xff]
      %v3144 = vld [vmem:[%s10 + $0x80] sm:$0xff]
      %v3145 = vld [vmem:[%s10 + $0x88] sm:$0xff]
      %v3146 = vld [vmem:[%s10 + $0x90] sm:$0xff]
      %v3147 = vld [vmem:[%s10 + $0x98] sm:$0xff]
      %v3148 = vld [vmem:[%s10 + $0xa0] sm:$0xff]
      %v3149 = vld [vmem:[%s10 + $0xa8] sm:$0xff]
      %v3150 = vld [vmem:[%s10 + $0xb0] sm:$0xff]
      %v3151 = vld [vmem:[%s10 + $0xb8] sm:$0xff]
      %v3152 = vld [vmem:[%s10 + $0xc0] sm:$0xff]
      %v3153 = vld [vmem:[%s10 + $0xc8] sm:$0xff]
      %v3154 = vld [vmem:[%s10 + $0xd0] sm:$0xff]
      %v3155 = vld [vmem:[%s10 + $0xd8] sm:$0xff]
      %v3156 = vld [vmem:[%s10 + $0xe0] sm:$0xff]
      %v3157 = vld [vmem:[%s10 + $0xe8] sm:$0xff]
      %v3158 = vld [vmem:[%s10 + $0xf0] sm:$0xff]
      %v3159 = vld [vmem:[%s10 + $0xf8] sm:$0xff]
      %v3160 = vld [vmem:[%s10 + $0x100] sm:$0xff]
      %v3161 = vld [vmem:[%s10 + $0x108] sm:$0xff]
      %v3162 = vld [vmem:[%s10 + $0x110] sm:$0xff]
      %v3163 = vld [vmem:[%s10 + $0x118] sm:$0xff]
      %v3164 = vld [vmem:[%s10 + $0x120] sm:$0xff]
      %v3165 = vld [vmem:[%s10 + $0x128] sm:$0xff]
      %v3166 = vld [vmem:[%s10 + $0x130] sm:$0xff]
      %v3167 = vld [vmem:[%s10 + $0x138] sm:$0xff]
      %v3168 = vld [vmem:[%s10 + $0x140] sm:$0xff]
      %v3169 = vld [vmem:[%s10 + $0x148] sm:$0xff]
      %v3170 = vld [vmem:[%s10 + $0x150] sm:$0xff]
      %v3171 = vld [vmem:[%s10 + $0x158] sm:$0xff]
      %v3172 = vld [vmem:[%s10 + $0x160] sm:$0xff]
      %v3173 = vld [vmem:[%s10 + $0x168] sm:$0xff]
      %v3174 = vld [vmem:[%s10 + $0x170] sm:$0xff]
      %v3175 = vld [vmem:[%s10 + $0x178] sm:$0xff]
      %v3176 = vld [vmem:[%s10 + $0x180] sm:$0xff]
      %v3177 = vld [vmem:[%s10 + $0x188] sm:$0xff]
      %v3178 = vld [vmem:[%s10 + $0x190] sm:$0xff]
      %v3179 = vld [vmem:[%s10 + $0x198] sm:$0xff]
      %v3180 = vld [vmem:[%s10 + $0x1a0] sm:$0xff]
      %v3181 = vld [vmem:[%s10 + $0x1a8] sm:$0xff]
      %v3182 = vld [vmem:[%s10 + $0x1b0] sm:$0xff]
      %v3183 = vld [vmem:[%s10 + $0x1b8] sm:$0xff]
      %v3184 = vld [vmem:[%s10 + $0x1c0] sm:$0xff]
      %v3185 = vld [vmem:[%s10 + $0x1c8] sm:$0xff]
      %v3186 = vld [vmem:[%s10 + $0x1d0] sm:$0xff]
      %v3187 = vld [vmem:[%s10 + $0x1d8] sm:$0xff]
      %v3188 = vld [vmem:[%s10 + $0x1e0] sm:$0xff]
      %v3189 = vld [vmem:[%s10 + $0x1e8] sm:$0xff]
      %v3190 = vld [vmem:[%s10 + $0x1f0] sm:$0xff]
      %v3191 = vld [vmem:[%s10 + $0x1f8] sm:$0xff]
      %v3192 = vld [vmem:[%s10 + $0x200] sm:$0xff]
      %v3193 = vld [vmem:[%s10 + $0x208] sm:$0xff]
      %v3194 = vld [vmem:[%s10 + $0x210] sm:$0xff]
      %v3195 = vld [vmem:[%s10 + $0x218] sm:$0xff]
      %v3196 = vld [vmem:[%s10 + $0x220] sm:$0xff]
      %v3197 = vld [vmem:[%s10 + $0x228] sm:$0xff]
      %v3198 = vld [vmem:[%s10 + $0x230] sm:$0xff]
      %v3199 = vld [vmem:[%s10 + $0x238] sm:$0xff]
      %v3200 = vld [vmem:[%s10 + $0x240] sm:$0xff]
      %v3201 = vld [vmem:[%s10 + $0x248] sm:$0xff]
      %v3202 = vld [vmem:[%s10 + $0x250] sm:$0xff]
      %v3203 = vld [vmem:[%s10 + $0x258] sm:$0xff]
      %v3204 = vld [vmem:[%s10 + $0x260] sm:$0xff]
      %v3205 = vld [vmem:[%s10 + $0x268] sm:$0xff]
      %v3206 = vld [vmem:[%s10 + $0x270] sm:$0xff]
      %v3207 = vld [vmem:[%s10 + $0x278] sm:$0xff]
      %v3208 = vld [vmem:[%s10 + $0x280] sm:$0xff]
      %v3209 = vld [vmem:[%s10 + $0x288] sm:$0xff]
      %v3210 = vld [vmem:[%s10 + $0x290] sm:$0xff]
      %v3211 = vld [vmem:[%s10 + $0x298] sm:$0xff]
      %v3212 = vld [vmem:[%s10 + $0x2a0] sm:$0xff]
      %v3213 = vld [vmem:[%s10 + $0x2a8] sm:$0xff]
      %v3214 = vld [vmem:[%s10 + $0x2b0] sm:$0xff]
      %v3215 = vld [vmem:[%s10 + $0x2b8] sm:$0xff]
      %v3216 = vld [vmem:[%s10 + $0x2c0] sm:$0xff]
      %v3217 = vld [vmem:[%s10 + $0x2c8] sm:$0xff]
      %v3218 = vld [vmem:[%s10 + $0x2d0] sm:$0xff]
      %v3219 = vld [vmem:[%s10 + $0x2d8] sm:$0xff]
      %v3220 = vld [vmem:[%s10 + $0x2e0] sm:$0xff]
      %v3221 = vld [vmem:[%s10 + $0x2e8] sm:$0xff]
      %v3222 = vld [vmem:[%s10 + $0x2f0] sm:$0xff]
      %v3223 = vld [vmem:[%s10 + $0x2f8] sm:$0xff]
      %v3224 = vld [vmem:[%s10 + $0x300] sm:$0xff]
      %v3225 = vld [vmem:[%s10 + $0x308] sm:$0xff]
      %v3226 = vld [vmem:[%s10 + $0x310] sm:$0xff]
      %v3227 = vld [vmem:[%s10 + $0x318] sm:$0xff]
      %v3228 = vld [vmem:[%s10 + $0x320] sm:$0xff]
      %v3229 = vld [vmem:[%s10 + $0x328] sm:$0xff]
      %v3230 = vld [vmem:[%s10 + $0x330] sm:$0xff]
      %v3231 = vld [vmem:[%s10 + $0x338] sm:$0xff]
      %v3232 = vld [vmem:[%s10 + $0x340] sm:$0xff]
      %v3233 = vld [vmem:[%s10 + $0x348] sm:$0xff]
      %v3234 = vld [vmem:[%s10 + $0x350] sm:$0xff]
      %v3235 = vld [vmem:[%s10 + $0x358] sm:$0xff]
      %v3236 = vld [vmem:[%s10 + $0x360] sm:$0xff]
      %v3237 = vld [vmem:[%s10 + $0x368] sm:$0xff]
      %v3238 = vld [vmem:[%s10 + $0x370] sm:$0xff]
      %v3239 = vld [vmem:[%s10 + $0x378] sm:$0xff]
      %v3240 = vld [vmem:[%s10 + $0x380] sm:$0xff]
      %v3241 = vld [vmem:[%s10 + $0x388] sm:$0xff]
      %v3242 = vld [vmem:[%s10 + $0x390] sm:$0xff]
      %v3243 = vld [vmem:[%s10 + $0x398] sm:$0xff]
      %v3244 = vld [vmem:[%s10 + $0x3a0] sm:$0xff]
      %v3245 = vld [vmem:[%s10 + $0x3a8] sm:$0xff]
      %v3246 = vld [vmem:[%s10 + $0x3b0] sm:$0xff]
      %v3247 = vld [vmem:[%s10 + $0x3b8] sm:$0xff]
      %v3248 = vld [vmem:[%s10 + $0x3c0] sm:$0xff]
      %v3249 = vld [vmem:[%s10 + $0x3c8] sm:$0xff]
      %v3250 = vld [vmem:[%s10 + $0x3d0] sm:$0xff]
      %v3251 = vld [vmem:[%s10 + $0x3d8] sm:$0xff]
      %v3252 = vld [vmem:[%s10 + $0x3e0] sm:$0xff]
      %v3253 = vld [vmem:[%s10 + $0x3e8] sm:$0xff]
      %v3254 = vld [vmem:[%s10 + $0x3f0] sm:$0xff]
      %v3255 = vld [vmem:[%s10 + $0x3f8] sm:$0xff]
      %v3256 = vadd.f32 %v1783, %v3128
      %v3257 = vadd.f32 %v1786, %v3129
      %v3258 = vadd.f32 %v1789, %v3130
      %v3259 = vadd.f32 %v1792, %v3131
      %v3260 = vadd.f32 %v1795, %v3132
      %v3261 = vadd.f32 %v1798, %v3133
      %v3262 = vadd.f32 %v1801, %v3134
      %v3263 = vadd.f32 %v1804, %v3135
      %v3264 = vadd.f32 %v1807, %v3136
      %v3265 = vadd.f32 %v1810, %v3137
      %v3266 = vadd.f32 %v1813, %v3138
      %v3267 = vadd.f32 %v1816, %v3139
      %v3268 = vadd.f32 %v1819, %v3140
      %v3269 = vadd.f32 %v1822, %v3141
      %v3270 = vadd.f32 %v1825, %v3142
      %v3271 = vadd.f32 %v1828, %v3143
      %v3272 = vadd.f32 %v1831, %v3144
      %v3273 = vadd.f32 %v1834, %v3145
      %v3274 = vadd.f32 %v1837, %v3146
      %v3275 = vadd.f32 %v1840, %v3147
      %v3276 = vadd.f32 %v1843, %v3148
      %v3277 = vadd.f32 %v1846, %v3149
      %v3278 = vadd.f32 %v1849, %v3150
      %v3279 = vadd.f32 %v1852, %v3151
      %v3280 = vadd.f32 %v1855, %v3152
      %v3281 = vadd.f32 %v1858, %v3153
      %v3282 = vadd.f32 %v1861, %v3154
      %v3283 = vadd.f32 %v1864, %v3155
      %v3284 = vadd.f32 %v1867, %v3156
      %v3285 = vadd.f32 %v1870, %v3157
      %v3286 = vadd.f32 %v1873, %v3158
      %v3287 = vadd.f32 %v1876, %v3159
      %v3288 = vadd.f32 %v2200, %v3160
      %v3289 = vadd.f32 %v2203, %v3161
      %v3290 = vadd.f32 %v2206, %v3162
      %v3291 = vadd.f32 %v2209, %v3163
      %v3292 = vadd.f32 %v2212, %v3164
      %v3293 = vadd.f32 %v2215, %v3165
      %v3294 = vadd.f32 %v2218, %v3166
      %v3295 = vadd.f32 %v2221, %v3167
      %v3296 = vadd.f32 %v2224, %v3168
      %v3297 = vadd.f32 %v2227, %v3169
      %v3298 = vadd.f32 %v2230, %v3170
      %v3299 = vadd.f32 %v2233, %v3171
      %v3300 = vadd.f32 %v2236, %v3172
      %v3301 = vadd.f32 %v2239, %v3173
      %v3302 = vadd.f32 %v2242, %v3174
      %v3303 = vadd.f32 %v2245, %v3175
      %v3304 = vadd.f32 %v2248, %v3176
      %v3305 = vadd.f32 %v2251, %v3177
      %v3306 = vadd.f32 %v2254, %v3178
      %v3307 = vadd.f32 %v2257, %v3179
      %v3308 = vadd.f32 %v2260, %v3180
      %v3309 = vadd.f32 %v2263, %v3181
      %v3310 = vadd.f32 %v2266, %v3182
      %v3311 = vadd.f32 %v2269, %v3183
      %v3312 = vadd.f32 %v2272, %v3184
      %v3313 = vadd.f32 %v2275, %v3185
      %v3314 = vadd.f32 %v2278, %v3186
      %v3315 = vadd.f32 %v2281, %v3187
      %v3316 = vadd.f32 %v2284, %v3188
      %v3317 = vadd.f32 %v2287, %v3189
      %v3318 = vadd.f32 %v2290, %v3190
      %v3319 = vadd.f32 %v2293, %v3191
      %v3320 = vadd.f32 %v2617, %v3192
      %v3321 = vadd.f32 %v2620, %v3193
      %v3322 = vadd.f32 %v2623, %v3194
      %v3323 = vadd.f32 %v2626, %v3195
      %v3324 = vadd.f32 %v2629, %v3196
      %v3325 = vadd.f32 %v2632, %v3197
      %v3326 = vadd.f32 %v2635, %v3198
      %v3327 = vadd.f32 %v2638, %v3199
      %v3328 = vadd.f32 %v2641, %v3200
      %v3329 = vadd.f32 %v2644, %v3201
      %v3330 = vadd.f32 %v2647, %v3202
      %v3331 = vadd.f32 %v2650, %v3203
      %v3332 = vadd.f32 %v2653, %v3204
      %v3333 = vadd.f32 %v2656, %v3205
      %v3334 = vadd.f32 %v2659, %v3206
      %v3335 = vadd.f32 %v2662, %v3207
      %v3336 = vadd.f32 %v2665, %v3208
      %v3337 = vadd.f32 %v2668, %v3209
      %v3338 = vadd.f32 %v2671, %v3210
      %v3339 = vadd.f32 %v2674, %v3211
      %v3340 = vadd.f32 %v2677, %v3212
      %v3341 = vadd.f32 %v2680, %v3213
      %v3342 = vadd.f32 %v2683, %v3214
      %v3343 = vadd.f32 %v2686, %v3215
      %v3344 = vadd.f32 %v2689, %v3216
      %v3345 = vadd.f32 %v2692, %v3217
      %v3346 = vadd.f32 %v2695, %v3218
      %v3347 = vadd.f32 %v2698, %v3219
      %v3348 = vadd.f32 %v2701, %v3220
      %v3349 = vadd.f32 %v2704, %v3221
      %v3350 = vadd.f32 %v2707, %v3222
      %v3351 = vadd.f32 %v2710, %v3223
      %v3352 = vadd.f32 %v3034, %v3224
      %v3353 = vadd.f32 %v3037, %v3225
      %v3354 = vadd.f32 %v3040, %v3226
      %v3355 = vadd.f32 %v3043, %v3227
      %v3356 = vadd.f32 %v3046, %v3228
      %v3357 = vadd.f32 %v3049, %v3229
      %v3358 = vadd.f32 %v3052, %v3230
      %v3359 = vadd.f32 %v3055, %v3231
      %v3360 = vadd.f32 %v3058, %v3232
      %v3361 = vadd.f32 %v3061, %v3233
      %v3362 = vadd.f32 %v3064, %v3234
      %v3363 = vadd.f32 %v3067, %v3235
      %v3364 = vadd.f32 %v3070, %v3236
      %v3365 = vadd.f32 %v3073, %v3237
      %v3366 = vadd.f32 %v3076, %v3238
      %v3367 = vadd.f32 %v3079, %v3239
      %v3368 = vadd.f32 %v3082, %v3240
      %v3369 = vadd.f32 %v3085, %v3241
      %v3370 = vadd.f32 %v3088, %v3242
      %v3371 = vadd.f32 %v3091, %v3243
      %v3372 = vadd.f32 %v3094, %v3244
      %v3373 = vadd.f32 %v3097, %v3245
      %v3374 = vadd.f32 %v3100, %v3246
      %v3375 = vadd.f32 %v3103, %v3247
      %v3376 = vadd.f32 %v3106, %v3248
      %v3377 = vadd.f32 %v3109, %v3249
      %v3378 = vadd.f32 %v3112, %v3250
      %v3379 = vadd.f32 %v3115, %v3251
      %v3380 = vadd.f32 %v3118, %v3252
      %v3381 = vadd.f32 %v3121, %v3253
      %v3382 = vadd.f32 %v3124, %v3254
      %v3383 = vadd.f32 %v3127, %v3255
      %v3384 = vmax.f32 %v3256, 0.0
      %v3385 = vmax.f32 %v3257, 0.0
      %v3386 = vmax.f32 %v3258, 0.0
      %v3387 = vmax.f32 %v3259, 0.0
      %v3388 = vmax.f32 %v3260, 0.0
      %v3389 = vmax.f32 %v3261, 0.0
      %v3390 = vmax.f32 %v3262, 0.0
      %v3391 = vmax.f32 %v3263, 0.0
      %v3392 = vmax.f32 %v3264, 0.0
      %v3393 = vmax.f32 %v3265, 0.0
      %v3394 = vmax.f32 %v3266, 0.0
      %v3395 = vmax.f32 %v3267, 0.0
      %v3396 = vmax.f32 %v3268, 0.0
      %v3397 = vmax.f32 %v3269, 0.0
      %v3398 = vmax.f32 %v3270, 0.0
      %v3399 = vmax.f32 %v3271, 0.0
      %v3400 = vmax.f32 %v3272, 0.0
      %v3401 = vmax.f32 %v3273, 0.0
      %v3402 = vmax.f32 %v3274, 0.0
      %v3403 = vmax.f32 %v3275, 0.0
      %v3404 = vmax.f32 %v3276, 0.0
      %v3405 = vmax.f32 %v3277, 0.0
      %v3406 = vmax.f32 %v3278, 0.0
      %v3407 = vmax.f32 %v3279, 0.0
      %v3408 = vmax.f32 %v3280, 0.0
      %v3409 = vmax.f32 %v3281, 0.0
      %v3410 = vmax.f32 %v3282, 0.0
      %v3411 = vmax.f32 %v3283, 0.0
      %v3412 = vmax.f32 %v3284, 0.0
      %v3413 = vmax.f32 %v3285, 0.0
      %v3414 = vmax.f32 %v3286, 0.0
      %v3415 = vmax.f32 %v3287, 0.0
      %v3416 = vmax.f32 %v3288, 0.0
      %v3417 = vmax.f32 %v3289, 0.0
      %v3418 = vmax.f32 %v3290, 0.0
      %v3419 = vmax.f32 %v3291, 0.0
      %v3420 = vmax.f32 %v3292, 0.0
      %v3421 = vmax.f32 %v3293, 0.0
      %v3422 = vmax.f32 %v3294, 0.0
      %v3423 = vmax.f32 %v3295, 0.0
      %v3424 = vmax.f32 %v3296, 0.0
      %v3425 = vmax.f32 %v3297, 0.0
      %v3426 = vmax.f32 %v3298, 0.0
      %v3427 = vmax.f32 %v3299, 0.0
      %v3428 = vmax.f32 %v3300, 0.0
      %v3429 = vmax.f32 %v3301, 0.0
      %v3430 = vmax.f32 %v3302, 0.0
      %v3431 = vmax.f32 %v3303, 0.0
      %v3432 = vmax.f32 %v3304, 0.0
      %v3433 = vmax.f32 %v3305, 0.0
      %v3434 = vmax.f32 %v3306, 0.0
      %v3435 = vmax.f32 %v3307, 0.0
      %v3436 = vmax.f32 %v3308, 0.0
      %v3437 = vmax.f32 %v3309, 0.0
      %v3438 = vmax.f32 %v3310, 0.0
      %v3439 = vmax.f32 %v3311, 0.0
      %v3440 = vmax.f32 %v3312, 0.0
      %v3441 = vmax.f32 %v3313, 0.0
      %v3442 = vmax.f32 %v3314, 0.0
      %v3443 = vmax.f32 %v3315, 0.0
      %v3444 = vmax.f32 %v3316, 0.0
      %v3445 = vmax.f32 %v3317, 0.0
      %v3446 = vmax.f32 %v3318, 0.0
      %v3447 = vmax.f32 %v3319, 0.0
      %v3448 = vmax.f32 %v3320, 0.0
      %v3449 = vmax.f32 %v3321, 0.0
      %v3450 = vmax.f32 %v3322, 0.0
      %v3451 = vmax.f32 %v3323, 0.0
      %v3452 = vmax.f32 %v3324, 0.0
      %v3453 = vmax.f32 %v3325, 0.0
      %v3454 = vmax.f32 %v3326, 0.0
      %v3455 = vmax.f32 %v3327, 0.0
      %v3456 = vmax.f32 %v3328, 0.0
      %v3457 = vmax.f32 %v3329, 0.0
      %v3458 = vmax.f32 %v3330, 0.0
      %v3459 = vmax.f32 %v3331, 0.0
      %v3460 = vmax.f32 %v3332, 0.0
      %v3461 = vmax.f32 %v3333, 0.0
      %v3462 = vmax.f32 %v3334, 0.0
      %v3463 = vmax.f32 %v3335, 0.0
      %v3464 = vmax.f32 %v3336, 0.0
      %v3465 = vmax.f32 %v3337, 0.0
      %v3466 = vmax.f32 %v3338, 0.0
      %v3467 = vmax.f32 %v3339, 0.0
      %v3468 = vmax.f32 %v3340, 0.0
      %v3469 = vmax.f32 %v3341, 0.0
      %v3470 = vmax.f32 %v3342, 0.0
      %v3471 = vmax.f32 %v3343, 0.0
      %v3472 = vmax.f32 %v3344, 0.0
      %v3473 = vmax.f32 %v3345, 0.0
      %v3474 = vmax.f32 %v3346, 0.0
      %v3475 = vmax.f32 %v3347, 0.0
      %v3476 = vmax.f32 %v3348, 0.0
      %v3477 = vmax.f32 %v3349, 0.0
      %v3478 = vmax.f32 %v3350, 0.0
      %v3479 = vmax.f32 %v3351, 0.0
      %v3480 = vmax.f32 %v3352, 0.0
      %v3481 = vmax.f32 %v3353, 0.0
      %v3482 = vmax.f32 %v3354, 0.0
      %v3483 = vmax.f32 %v3355, 0.0
      %v3484 = vmax.f32 %v3356, 0.0
      %v3485 = vmax.f32 %v3357, 0.0
      %v3486 = vmax.f32 %v3358, 0.0
      %v3487 = vmax.f32 %v3359, 0.0
      %v3488 = vmax.f32 %v3360, 0.0
      %v3489 = vmax.f32 %v3361, 0.0
      %v3490 = vmax.f32 %v3362, 0.0
      %v3491 = vmax.f32 %v3363, 0.0
      %v3492 = vmax.f32 %v3364, 0.0
      %v3493 = vmax.f32 %v3365, 0.0
      %v3494 = vmax.f32 %v3366, 0.0
      %v3495 = vmax.f32 %v3367, 0.0
      %v3496 = vmax.f32 %v3368, 0.0
      %v3497 = vmax.f32 %v3369, 0.0
      %v3498 = vmax.f32 %v3370, 0.0
      %v3499 = vmax.f32 %v3371, 0.0
      %v3500 = vmax.f32 %v3372, 0.0
      %v3501 = vmax.f32 %v3373, 0.0
      %v3502 = vmax.f32 %v3374, 0.0
      %v3503 = vmax.f32 %v3375, 0.0
      %v3504 = vmax.f32 %v3376, 0.0
      %v3505 = vmax.f32 %v3377, 0.0
      %v3506 = vmax.f32 %v3378, 0.0
      %v3507 = vmax.f32 %v3379, 0.0
      %v3508 = vmax.f32 %v3380, 0.0
      %v3509 = vmax.f32 %v3381, 0.0
      %v3510 = vmax.f32 %v3382, 0.0
      %v3511 = vmax.f32 %v3383, 0.0
      %p3512 = scmp.eq.s32.totalorder %s27, 0
      // Predicated region
      $region65: #{pointnet_partseg_features.1} parent=63 // pred_check
        %p3513 = pneg %p3512
      $region66: #{pointnet_partseg_features.1} parent=63 // pred_check_branch
        %3515 = sbr.rel (%p3513) target = $region68
      $region67: #{pointnet_partseg_features.1} parent=63 // pred_region
        %vm3516 = vcmask 7168
        %3517 = vst.msk [vmem:[%s414] sm:$0xff] %vm3516, %v3384
        %3518 = vst.msk [vmem:[%s414 + $0x8] sm:$0xff] %vm3516, %v3385
        %3519 = vst.msk [vmem:[%s414 + $0x10] sm:$0xff] %vm3516, %v3386
        %3520 = vst.msk [vmem:[%s414 + $0x18] sm:$0xff] %vm3516, %v3387
        %3521 = vst.msk [vmem:[%s414 + $0x20] sm:$0xff] %vm3516, %v3388
        %3522 = vst.msk [vmem:[%s414 + $0x28] sm:$0xff] %vm3516, %v3389
        %3523 = vst.msk [vmem:[%s414 + $0x30] sm:$0xff] %vm3516, %v3390
        %3524 = vst.msk [vmem:[%s414 + $0x38] sm:$0xff] %vm3516, %v3391
        %3525 = vst.msk [vmem:[%s414 + $0x40] sm:$0xff] %vm3516, %v3392
        %3526 = vst.msk [vmem:[%s414 + $0x48] sm:$0xff] %vm3516, %v3393
        %3527 = vst.msk [vmem:[%s414 + $0x50] sm:$0xff] %vm3516, %v3394
        %3528 = vst.msk [vmem:[%s414 + $0x58] sm:$0xff] %vm3516, %v3395
        %3529 = vst.msk [vmem:[%s414 + $0x60] sm:$0xff] %vm3516, %v3396
        %3530 = vst.msk [vmem:[%s414 + $0x68] sm:$0xff] %vm3516, %v3397
        %3531 = vst.msk [vmem:[%s414 + $0x70] sm:$0xff] %vm3516, %v3398
        %3532 = vst.msk [vmem:[%s414 + $0x78] sm:$0xff] %vm3516, %v3399
        %3533 = vst.msk [vmem:[%s414 + $0x80] sm:$0xff] %vm3516, %v3400
        %3534 = vst.msk [vmem:[%s414 + $0x88] sm:$0xff] %vm3516, %v3401
        %3535 = vst.msk [vmem:[%s414 + $0x90] sm:$0xff] %vm3516, %v3402
        %3536 = vst.msk [vmem:[%s414 + $0x98] sm:$0xff] %vm3516, %v3403
        %3537 = vst.msk [vmem:[%s414 + $0xa0] sm:$0xff] %vm3516, %v3404
        %3538 = vst.msk [vmem:[%s414 + $0xa8] sm:$0xff] %vm3516, %v3405
        %3539 = vst.msk [vmem:[%s414 + $0xb0] sm:$0xff] %vm3516, %v3406
        %3540 = vst.msk [vmem:[%s414 + $0xb8] sm:$0xff] %vm3516, %v3407
        %3541 = vst.msk [vmem:[%s414 + $0xc0] sm:$0xff] %vm3516, %v3408
        %3542 = vst.msk [vmem:[%s414 + $0xc8] sm:$0xff] %vm3516, %v3409
        %3543 = vst.msk [vmem:[%s414 + $0xd0] sm:$0xff] %vm3516, %v3410
        %3544 = vst.msk [vmem:[%s414 + $0xd8] sm:$0xff] %vm3516, %v3411
        %3545 = vst.msk [vmem:[%s414 + $0xe0] sm:$0xff] %vm3516, %v3412
        %3546 = vst.msk [vmem:[%s414 + $0xe8] sm:$0xff] %vm3516, %v3413
        %3547 = vst.msk [vmem:[%s414 + $0xf0] sm:$0xff] %vm3516, %v3414
        %3548 = vst.msk [vmem:[%s414 + $0xf8] sm:$0xff] %vm3516, %v3415
        %3549 = vst.msk [vmem:[%s414 + $0x100] sm:$0xff] %vm3516, %v3416
        %3550 = vst.msk [vmem:[%s414 + $0x108] sm:$0xff] %vm3516, %v3417
        %3551 = vst.msk [vmem:[%s414 + $0x110] sm:$0xff] %vm3516, %v3418
        %3552 = vst.msk [vmem:[%s414 + $0x118] sm:$0xff] %vm3516, %v3419
        %3553 = vst.msk [vmem:[%s414 + $0x120] sm:$0xff] %vm3516, %v3420
        %3554 = vst.msk [vmem:[%s414 + $0x128] sm:$0xff] %vm3516, %v3421
        %3555 = vst.msk [vmem:[%s414 + $0x130] sm:$0xff] %vm3516, %v3422
        %3556 = vst.msk [vmem:[%s414 + $0x138] sm:$0xff] %vm3516, %v3423
        %3557 = vst.msk [vmem:[%s414 + $0x140] sm:$0xff] %vm3516, %v3424
        %3558 = vst.msk [vmem:[%s414 + $0x148] sm:$0xff] %vm3516, %v3425
        %3559 = vst.msk [vmem:[%s414 + $0x150] sm:$0xff] %vm3516, %v3426
        %3560 = vst.msk [vmem:[%s414 + $0x158] sm:$0xff] %vm3516, %v3427
        %3561 = vst.msk [vmem:[%s414 + $0x160] sm:$0xff] %vm3516, %v3428
        %3562 = vst.msk [vmem:[%s414 + $0x168] sm:$0xff] %vm3516, %v3429
        %3563 = vst.msk [vmem:[%s414 + $0x170] sm:$0xff] %vm3516, %v3430
        %3564 = vst.msk [vmem:[%s414 + $0x178] sm:$0xff] %vm3516, %v3431
        %3565 = vst.msk [vmem:[%s414 + $0x180] sm:$0xff] %vm3516, %v3432
        %3566 = vst.msk [vmem:[%s414 + $0x188] sm:$0xff] %vm3516, %v3433
        %3567 = vst.msk [vmem:[%s414 + $0x190] sm:$0xff] %vm3516, %v3434
        %3568 = vst.msk [vmem:[%s414 + $0x198] sm:$0xff] %vm3516, %v3435
        %3569 = vst.msk [vmem:[%s414 + $0x1a0] sm:$0xff] %vm3516, %v3436
        %3570 = vst.msk [vmem:[%s414 + $0x1a8] sm:$0xff] %vm3516, %v3437
        %3571 = vst.msk [vmem:[%s414 + $0x1b0] sm:$0xff] %vm3516, %v3438
        %3572 = vst.msk [vmem:[%s414 + $0x1b8] sm:$0xff] %vm3516, %v3439
        %3573 = vst.msk [vmem:[%s414 + $0x1c0] sm:$0xff] %vm3516, %v3440
        %3574 = vst.msk [vmem:[%s414 + $0x1c8] sm:$0xff] %vm3516, %v3441
        %3575 = vst.msk [vmem:[%s414 + $0x1d0] sm:$0xff] %vm3516, %v3442
        %3576 = vst.msk [vmem:[%s414 + $0x1d8] sm:$0xff] %vm3516, %v3443
        %3577 = vst.msk [vmem:[%s414 + $0x1e0] sm:$0xff] %vm3516, %v3444
        %3578 = vst.msk [vmem:[%s414 + $0x1e8] sm:$0xff] %vm3516, %v3445
        %3579 = vst.msk [vmem:[%s414 + $0x1f0] sm:$0xff] %vm3516, %v3446
        %3580 = vst.msk [vmem:[%s414 + $0x1f8] sm:$0xff] %vm3516, %v3447
        %3581 = vst.msk [vmem:[%s414 + $0x200] sm:$0xff] %vm3516, %v3448
        %3582 = vst.msk [vmem:[%s414 + $0x208] sm:$0xff] %vm3516, %v3449
        %3583 = vst.msk [vmem:[%s414 + $0x210] sm:$0xff] %vm3516, %v3450
        %3584 = vst.msk [vmem:[%s414 + $0x218] sm:$0xff] %vm3516, %v3451
        %3585 = vst.msk [vmem:[%s414 + $0x220] sm:$0xff] %vm3516, %v3452
        %3586 = vst.msk [vmem:[%s414 + $0x228] sm:$0xff] %vm3516, %v3453
        %3587 = vst.msk [vmem:[%s414 + $0x230] sm:$0xff] %vm3516, %v3454
        %3588 = vst.msk [vmem:[%s414 + $0x238] sm:$0xff] %vm3516, %v3455
        %3589 = vst.msk [vmem:[%s414 + $0x240] sm:$0xff] %vm3516, %v3456
        %3590 = vst.msk [vmem:[%s414 + $0x248] sm:$0xff] %vm3516, %v3457
        %3591 = vst.msk [vmem:[%s414 + $0x250] sm:$0xff] %vm3516, %v3458
        %3592 = vst.msk [vmem:[%s414 + $0x258] sm:$0xff] %vm3516, %v3459
        %3593 = vst.msk [vmem:[%s414 + $0x260] sm:$0xff] %vm3516, %v3460
        %3594 = vst.msk [vmem:[%s414 + $0x268] sm:$0xff] %vm3516, %v3461
        %3595 = vst.msk [vmem:[%s414 + $0x270] sm:$0xff] %vm3516, %v3462
        %3596 = vst.msk [vmem:[%s414 + $0x278] sm:$0xff] %vm3516, %v3463
        %3597 = vst.msk [vmem:[%s414 + $0x280] sm:$0xff] %vm3516, %v3464
        %3598 = vst.msk [vmem:[%s414 + $0x288] sm:$0xff] %vm3516, %v3465
        %3599 = vst.msk [vmem:[%s414 + $0x290] sm:$0xff] %vm3516, %v3466
        %3600 = vst.msk [vmem:[%s414 + $0x298] sm:$0xff] %vm3516, %v3467
        %3601 = vst.msk [vmem:[%s414 + $0x2a0] sm:$0xff] %vm3516, %v3468
        %3602 = vst.msk [vmem:[%s414 + $0x2a8] sm:$0xff] %vm3516, %v3469
        %3603 = vst.msk [vmem:[%s414 + $0x2b0] sm:$0xff] %vm3516, %v3470
        %3604 = vst.msk [vmem:[%s414 + $0x2b8] sm:$0xff] %vm3516, %v3471
        %3605 = vst.msk [vmem:[%s414 + $0x2c0] sm:$0xff] %vm3516, %v3472
        %3606 = vst.msk [vmem:[%s414 + $0x2c8] sm:$0xff] %vm3516, %v3473
        %3607 = vst.msk [vmem:[%s414 + $0x2d0] sm:$0xff] %vm3516, %v3474
        %3608 = vst.msk [vmem:[%s414 + $0x2d8] sm:$0xff] %vm3516, %v3475
        %3609 = vst.msk [vmem:[%s414 + $0x2e0] sm:$0xff] %vm3516, %v3476
        %3610 = vst.msk [vmem:[%s414 + $0x2e8] sm:$0xff] %vm3516, %v3477
        %3611 = vst.msk [vmem:[%s414 + $0x2f0] sm:$0xff] %vm3516, %v3478
        %3612 = vst.msk [vmem:[%s414 + $0x2f8] sm:$0xff] %vm3516, %v3479
        %3613 = vst.msk [vmem:[%s414 + $0x300] sm:$0xff] %vm3516, %v3480
        %3614 = vst.msk [vmem:[%s414 + $0x308] sm:$0xff] %vm3516, %v3481
        %3615 = vst.msk [vmem:[%s414 + $0x310] sm:$0xff] %vm3516, %v3482
        %3616 = vst.msk [vmem:[%s414 + $0x318] sm:$0xff] %vm3516, %v3483
        %3617 = vst.msk [vmem:[%s414 + $0x320] sm:$0xff] %vm3516, %v3484
        %3618 = vst.msk [vmem:[%s414 + $0x328] sm:$0xff] %vm3516, %v3485
        %3619 = vst.msk [vmem:[%s414 + $0x330] sm:$0xff] %vm3516, %v3486
        %3620 = vst.msk [vmem:[%s414 + $0x338] sm:$0xff] %vm3516, %v3487
        %3621 = vst.msk [vmem:[%s414 + $0x340] sm:$0xff] %vm3516, %v3488
        %3622 = vst.msk [vmem:[%s414 + $0x348] sm:$0xff] %vm3516, %v3489
        %3623 = vst.msk [vmem:[%s414 + $0x350] sm:$0xff] %vm3516, %v3490
        %3624 = vst.msk [vmem:[%s414 + $0x358] sm:$0xff] %vm3516, %v3491
        %3625 = vst.msk [vmem:[%s414 + $0x360] sm:$0xff] %vm3516, %v3492
        %3626 = vst.msk [vmem:[%s414 + $0x368] sm:$0xff] %vm3516, %v3493
        %3627 = vst.msk [vmem:[%s414 + $0x370] sm:$0xff] %vm3516, %v3494
        %3628 = vst.msk [vmem:[%s414 + $0x378] sm:$0xff] %vm3516, %v3495
        %3629 = vst.msk [vmem:[%s414 + $0x380] sm:$0xff] %vm3516, %v3496
        %3630 = vst.msk [vmem:[%s414 + $0x388] sm:$0xff] %vm3516, %v3497
        %3631 = vst.msk [vmem:[%s414 + $0x390] sm:$0xff] %vm3516, %v3498
        %3632 = vst.msk [vmem:[%s414 + $0x398] sm:$0xff] %vm3516, %v3499
        %3633 = vst.msk [vmem:[%s414 + $0x3a0] sm:$0xff] %vm3516, %v3500
        %3634 = vst.msk [vmem:[%s414 + $0x3a8] sm:$0xff] %vm3516, %v3501
        %3635 = vst.msk [vmem:[%s414 + $0x3b0] sm:$0xff] %vm3516, %v3502
        %3636 = vst.msk [vmem:[%s414 + $0x3b8] sm:$0xff] %vm3516, %v3503
        %3637 = vst.msk [vmem:[%s414 + $0x3c0] sm:$0xff] %vm3516, %v3504
        %3638 = vst.msk [vmem:[%s414 + $0x3c8] sm:$0xff] %vm3516, %v3505
        %3639 = vst.msk [vmem:[%s414 + $0x3d0] sm:$0xff] %vm3516, %v3506
        %3640 = vst.msk [vmem:[%s414 + $0x3d8] sm:$0xff] %vm3516, %v3507
        %3641 = vst.msk [vmem:[%s414 + $0x3e0] sm:$0xff] %vm3516, %v3508
        %3642 = vst.msk [vmem:[%s414 + $0x3e8] sm:$0xff] %vm3516, %v3509
        %3643 = vst.msk [vmem:[%s414 + $0x3f0] sm:$0xff] %vm3516, %v3510
        %3644 = vst.msk [vmem:[%s414 + $0x3f8] sm:$0xff] %vm3516, %v3511
      $region68: #{pointnet_partseg_features.1} parent=63 // pred_fallthru
        _
      %p3645 = scmp.gt.s32.totalorder %s27, 0
      // Predicated region
      $region69: #{pointnet_partseg_features.1} parent=63 // pred_check
        %p3646 = pneg %p3645
      $region70: #{pointnet_partseg_features.1} parent=63 // pred_check_branch
        %3648 = sbr.rel (%p3646) target = $region72
      $region71: #{pointnet_partseg_features.1} parent=63 // pred_region
        %v3649 = vld [vmem:[%s414] sm:$0xff]
        %v3650 = vld [vmem:[%s414 + $0x8] sm:$0xff]
        %v3651 = vld [vmem:[%s414 + $0x10] sm:$0xff]
        %v3652 = vld [vmem:[%s414 + $0x18] sm:$0xff]
        %v3653 = vld [vmem:[%s414 + $0x20] sm:$0xff]
        %v3654 = vld [vmem:[%s414 + $0x28] sm:$0xff]
        %v3655 = vld [vmem:[%s414 + $0x30] sm:$0xff]
        %v3656 = vld [vmem:[%s414 + $0x38] sm:$0xff]
        %v3657 = vld [vmem:[%s414 + $0x40] sm:$0xff]
        %v3658 = vld [vmem:[%s414 + $0x48] sm:$0xff]
        %v3659 = vld [vmem:[%s414 + $0x50] sm:$0xff]
        %v3660 = vld [vmem:[%s414 + $0x58] sm:$0xff]
        %v3661 = vld [vmem:[%s414 + $0x60] sm:$0xff]
        %v3662 = vld [vmem:[%s414 + $0x68] sm:$0xff]
        %v3663 = vld [vmem:[%s414 + $0x70] sm:$0xff]
        %v3664 = vld [vmem:[%s414 + $0x78] sm:$0xff]
        %v3665 = vld [vmem:[%s414 + $0x80] sm:$0xff]
        %v3666 = vld [vmem:[%s414 + $0x88] sm:$0xff]
        %v3667 = vld [vmem:[%s414 + $0x90] sm:$0xff]
        %v3668 = vld [vmem:[%s414 + $0x98] sm:$0xff]
        %v3669 = vld [vmem:[%s414 + $0xa0] sm:$0xff]
        %v3670 = vld [vmem:[%s414 + $0xa8] sm:$0xff]
        %v3671 = vld [vmem:[%s414 + $0xb0] sm:$0xff]
        %v3672 = vld [vmem:[%s414 + $0xb8] sm:$0xff]
        %v3673 = vld [vmem:[%s414 + $0xc0] sm:$0xff]
        %v3674 = vld [vmem:[%s414 + $0xc8] sm:$0xff]
        %v3675 = vld [vmem:[%s414 + $0xd0] sm:$0xff]
        %v3676 = vld [vmem:[%s414 + $0xd8] sm:$0xff]
        %v3677 = vld [vmem:[%s414 + $0xe0] sm:$0xff]
        %v3678 = vld [vmem:[%s414 + $0xe8] sm:$0xff]
        %v3679 = vld [vmem:[%s414 + $0xf0] sm:$0xff]
        %v3680 = vld [vmem:[%s414 + $0xf8] sm:$0xff]
        %v3681 = vld [vmem:[%s414 + $0x100] sm:$0xff]
        %v3682 = vld [vmem:[%s414 + $0x108] sm:$0xff]
        %v3683 = vld [vmem:[%s414 + $0x110] sm:$0xff]
        %v3684 = vld [vmem:[%s414 + $0x118] sm:$0xff]
        %v3685 = vld [vmem:[%s414 + $0x120] sm:$0xff]
        %v3686 = vld [vmem:[%s414 + $0x128] sm:$0xff]
        %v3687 = vld [vmem:[%s414 + $0x130] sm:$0xff]
        %v3688 = vld [vmem:[%s414 + $0x138] sm:$0xff]
        %v3689 = vld [vmem:[%s414 + $0x140] sm:$0xff]
        %v3690 = vld [vmem:[%s414 + $0x148] sm:$0xff]
        %v3691 = vld [vmem:[%s414 + $0x150] sm:$0xff]
        %v3692 = vld [vmem:[%s414 + $0x158] sm:$0xff]
        %v3693 = vld [vmem:[%s414 + $0x160] sm:$0xff]
        %v3694 = vld [vmem:[%s414 + $0x168] sm:$0xff]
        %v3695 = vld [vmem:[%s414 + $0x170] sm:$0xff]
        %v3696 = vld [vmem:[%s414 + $0x178] sm:$0xff]
        %v3697 = vld [vmem:[%s414 + $0x180] sm:$0xff]
        %v3698 = vld [vmem:[%s414 + $0x188] sm:$0xff]
        %v3699 = vld [vmem:[%s414 + $0x190] sm:$0xff]
        %v3700 = vld [vmem:[%s414 + $0x198] sm:$0xff]
        %v3701 = vld [vmem:[%s414 + $0x1a0] sm:$0xff]
        %v3702 = vld [vmem:[%s414 + $0x1a8] sm:$0xff]
        %v3703 = vld [vmem:[%s414 + $0x1b0] sm:$0xff]
        %v3704 = vld [vmem:[%s414 + $0x1b8] sm:$0xff]
        %v3705 = vld [vmem:[%s414 + $0x1c0] sm:$0xff]
        %v3706 = vld [vmem:[%s414 + $0x1c8] sm:$0xff]
        %v3707 = vld [vmem:[%s414 + $0x1d0] sm:$0xff]
        %v3708 = vld [vmem:[%s414 + $0x1d8] sm:$0xff]
        %v3709 = vld [vmem:[%s414 + $0x1e0] sm:$0xff]
        %v3710 = vld [vmem:[%s414 + $0x1e8] sm:$0xff]
        %v3711 = vld [vmem:[%s414 + $0x1f0] sm:$0xff]
        %v3712 = vld [vmem:[%s414 + $0x1f8] sm:$0xff]
        %v3713 = vld [vmem:[%s414 + $0x200] sm:$0xff]
        %v3714 = vld [vmem:[%s414 + $0x208] sm:$0xff]
        %v3715 = vld [vmem:[%s414 + $0x210] sm:$0xff]
        %v3716 = vld [vmem:[%s414 + $0x218] sm:$0xff]
        %v3717 = vld [vmem:[%s414 + $0x220] sm:$0xff]
        %v3718 = vld [vmem:[%s414 + $0x228] sm:$0xff]
        %v3719 = vld [vmem:[%s414 + $0x230] sm:$0xff]
        %v3720 = vld [vmem:[%s414 + $0x238] sm:$0xff]
        %v3721 = vld [vmem:[%s414 + $0x240] sm:$0xff]
        %v3722 = vld [vmem:[%s414 + $0x248] sm:$0xff]
        %v3723 = vld [vmem:[%s414 + $0x250] sm:$0xff]
        %v3724 = vld [vmem:[%s414 + $0x258] sm:$0xff]
        %v3725 = vld [vmem:[%s414 + $0x260] sm:$0xff]
        %v3726 = vld [vmem:[%s414 + $0x268] sm:$0xff]
        %v3727 = vld [vmem:[%s414 + $0x270] sm:$0xff]
        %v3728 = vld [vmem:[%s414 + $0x278] sm:$0xff]
        %v3729 = vld [vmem:[%s414 + $0x280] sm:$0xff]
        %v3730 = vld [vmem:[%s414 + $0x288] sm:$0xff]
        %v3731 = vld [vmem:[%s414 + $0x290] sm:$0xff]
        %v3732 = vld [vmem:[%s414 + $0x298] sm:$0xff]
        %v3733 = vld [vmem:[%s414 + $0x2a0] sm:$0xff]
        %v3734 = vld [vmem:[%s414 + $0x2a8] sm:$0xff]
        %v3735 = vld [vmem:[%s414 + $0x2b0] sm:$0xff]
        %v3736 = vld [vmem:[%s414 + $0x2b8] sm:$0xff]
        %v3737 = vld [vmem:[%s414 + $0x2c0] sm:$0xff]
        %v3738 = vld [vmem:[%s414 + $0x2c8] sm:$0xff]
        %v3739 = vld [vmem:[%s414 + $0x2d0] sm:$0xff]
        %v3740 = vld [vmem:[%s414 + $0x2d8] sm:$0xff]
        %v3741 = vld [vmem:[%s414 + $0x2e0] sm:$0xff]
        %v3742 = vld [vmem:[%s414 + $0x2e8] sm:$0xff]
        %v3743 = vld [vmem:[%s414 + $0x2f0] sm:$0xff]
        %v3744 = vld [vmem:[%s414 + $0x2f8] sm:$0xff]
        %v3745 = vld [vmem:[%s414 + $0x300] sm:$0xff]
        %v3746 = vld [vmem:[%s414 + $0x308] sm:$0xff]
        %v3747 = vld [vmem:[%s414 + $0x310] sm:$0xff]
        %v3748 = vld [vmem:[%s414 + $0x318] sm:$0xff]
        %v3749 = vld [vmem:[%s414 + $0x320] sm:$0xff]
        %v3750 = vld [vmem:[%s414 + $0x328] sm:$0xff]
        %v3751 = vld [vmem:[%s414 + $0x330] sm:$0xff]
        %v3752 = vld [vmem:[%s414 + $0x338] sm:$0xff]
        %v3753 = vld [vmem:[%s414 + $0x340] sm:$0xff]
        %v3754 = vld [vmem:[%s414 + $0x348] sm:$0xff]
        %v3755 = vld [vmem:[%s414 + $0x350] sm:$0xff]
        %v3756 = vld [vmem:[%s414 + $0x358] sm:$0xff]
        %v3757 = vld [vmem:[%s414 + $0x360] sm:$0xff]
        %v3758 = vld [vmem:[%s414 + $0x368] sm:$0xff]
        %v3759 = vld [vmem:[%s414 + $0x370] sm:$0xff]
        %v3760 = vld [vmem:[%s414 + $0x378] sm:$0xff]
        %v3761 = vld [vmem:[%s414 + $0x380] sm:$0xff]
        %v3762 = vld [vmem:[%s414 + $0x388] sm:$0xff]
        %v3763 = vld [vmem:[%s414 + $0x390] sm:$0xff]
        %v3764 = vld [vmem:[%s414 + $0x398] sm:$0xff]
        %v3765 = vld [vmem:[%s414 + $0x3a0] sm:$0xff]
        %v3766 = vld [vmem:[%s414 + $0x3a8] sm:$0xff]
        %v3767 = vld [vmem:[%s414 + $0x3b0] sm:$0xff]
        %v3768 = vld [vmem:[%s414 + $0x3b8] sm:$0xff]
        %v3769 = vld [vmem:[%s414 + $0x3c0] sm:$0xff]
        %v3770 = vld [vmem:[%s414 + $0x3c8] sm:$0xff]
        %v3771 = vld [vmem:[%s414 + $0x3d0] sm:$0xff]
        %v3772 = vld [vmem:[%s414 + $0x3d8] sm:$0xff]
        %v3773 = vld [vmem:[%s414 + $0x3e0] sm:$0xff]
        %v3774 = vld [vmem:[%s414 + $0x3e8] sm:$0xff]
        %v3775 = vld [vmem:[%s414 + $0x3f0] sm:$0xff]
        %v3776 = vld [vmem:[%s414 + $0x3f8] sm:$0xff]
        %v3777 = vmax.f32 %v3649, %v3384
        %v3778 = vmax.f32 %v3650, %v3385
        %v3779 = vmax.f32 %v3651, %v3386
        %v3780 = vmax.f32 %v3652, %v3387
        %v3781 = vmax.f32 %v3653, %v3388
        %v3782 = vmax.f32 %v3654, %v3389
        %v3783 = vmax.f32 %v3655, %v3390
        %v3784 = vmax.f32 %v3656, %v3391
        %v3785 = vmax.f32 %v3657, %v3392
        %v3786 = vmax.f32 %v3658, %v3393
        %v3787 = vmax.f32 %v3659, %v3394
        %v3788 = vmax.f32 %v3660, %v3395
        %v3789 = vmax.f32 %v3661, %v3396
        %v3790 = vmax.f32 %v3662, %v3397
        %v3791 = vmax.f32 %v3663, %v3398
        %v3792 = vmax.f32 %v3664, %v3399
        %v3793 = vmax.f32 %v3665, %v3400
        %v3794 = vmax.f32 %v3666, %v3401
        %v3795 = vmax.f32 %v3667, %v3402
        %v3796 = vmax.f32 %v3668, %v3403
        %v3797 = vmax.f32 %v3669, %v3404
        %v3798 = vmax.f32 %v3670, %v3405
        %v3799 = vmax.f32 %v3671, %v3406
        %v3800 = vmax.f32 %v3672, %v3407
        %v3801 = vmax.f32 %v3673, %v3408
        %v3802 = vmax.f32 %v3674, %v3409
        %v3803 = vmax.f32 %v3675, %v3410
        %v3804 = vmax.f32 %v3676, %v3411
        %v3805 = vmax.f32 %v3677, %v3412
        %v3806 = vmax.f32 %v3678, %v3413
        %v3807 = vmax.f32 %v3679, %v3414
        %v3808 = vmax.f32 %v3680, %v3415
        %v3809 = vmax.f32 %v3681, %v3416
        %v3810 = vmax.f32 %v3682, %v3417
        %v3811 = vmax.f32 %v3683, %v3418
        %v3812 = vmax.f32 %v3684, %v3419
        %v3813 = vmax.f32 %v3685, %v3420
        %v3814 = vmax.f32 %v3686, %v3421
        %v3815 = vmax.f32 %v3687, %v3422
        %v3816 = vmax.f32 %v3688, %v3423
        %v3817 = vmax.f32 %v3689, %v3424
        %v3818 = vmax.f32 %v3690, %v3425
        %v3819 = vmax.f32 %v3691, %v3426
        %v3820 = vmax.f32 %v3692, %v3427
        %v3821 = vmax.f32 %v3693, %v3428
        %v3822 = vmax.f32 %v3694, %v3429
        %v3823 = vmax.f32 %v3695, %v3430
        %v3824 = vmax.f32 %v3696, %v3431
        %v3825 = vmax.f32 %v3697, %v3432
        %v3826 = vmax.f32 %v3698, %v3433
        %v3827 = vmax.f32 %v3699, %v3434
        %v3828 = vmax.f32 %v3700, %v3435
        %v3829 = vmax.f32 %v3701, %v3436
        %v3830 = vmax.f32 %v3702, %v3437
        %v3831 = vmax.f32 %v3703, %v3438
        %v3832 = vmax.f32 %v3704, %v3439
        %v3833 = vmax.f32 %v3705, %v3440
        %v3834 = vmax.f32 %v3706, %v3441
        %v3835 = vmax.f32 %v3707, %v3442
        %v3836 = vmax.f32 %v3708, %v3443
        %v3837 = vmax.f32 %v3709, %v3444
        %v3838 = vmax.f32 %v3710, %v3445
        %v3839 = vmax.f32 %v3711, %v3446
        %v3840 = vmax.f32 %v3712, %v3447
        %v3841 = vmax.f32 %v3713, %v3448
        %v3842 = vmax.f32 %v3714, %v3449
        %v3843 = vmax.f32 %v3715, %v3450
        %v3844 = vmax.f32 %v3716, %v3451
        %v3845 = vmax.f32 %v3717, %v3452
        %v3846 = vmax.f32 %v3718, %v3453
        %v3847 = vmax.f32 %v3719, %v3454
        %v3848 = vmax.f32 %v3720, %v3455
        %v3849 = vmax.f32 %v3721, %v3456
        %v3850 = vmax.f32 %v3722, %v3457
        %v3851 = vmax.f32 %v3723, %v3458
        %v3852 = vmax.f32 %v3724, %v3459
        %v3853 = vmax.f32 %v3725, %v3460
        %v3854 = vmax.f32 %v3726, %v3461
        %v3855 = vmax.f32 %v3727, %v3462
        %v3856 = vmax.f32 %v3728, %v3463
        %v3857 = vmax.f32 %v3729, %v3464
        %v3858 = vmax.f32 %v3730, %v3465
        %v3859 = vmax.f32 %v3731, %v3466
        %v3860 = vmax.f32 %v3732, %v3467
        %v3861 = vmax.f32 %v3733, %v3468
        %v3862 = vmax.f32 %v3734, %v3469
        %v3863 = vmax.f32 %v3735, %v3470
        %v3864 = vmax.f32 %v3736, %v3471
        %v3865 = vmax.f32 %v3737, %v3472
        %v3866 = vmax.f32 %v3738, %v3473
        %v3867 = vmax.f32 %v3739, %v3474
        %v3868 = vmax.f32 %v3740, %v3475
        %v3869 = vmax.f32 %v3741, %v3476
        %v3870 = vmax.f32 %v3742, %v3477
        %v3871 = vmax.f32 %v3743, %v3478
        %v3872 = vmax.f32 %v3744, %v3479
        %v3873 = vmax.f32 %v3745, %v3480
        %v3874 = vmax.f32 %v3746, %v3481
        %v3875 = vmax.f32 %v3747, %v3482
        %v3876 = vmax.f32 %v3748, %v3483
        %v3877 = vmax.f32 %v3749, %v3484
        %v3878 = vmax.f32 %v3750, %v3485
        %v3879 = vmax.f32 %v3751, %v3486
        %v3880 = vmax.f32 %v3752, %v3487
        %v3881 = vmax.f32 %v3753, %v3488
        %v3882 = vmax.f32 %v3754, %v3489
        %v3883 = vmax.f32 %v3755, %v3490
        %v3884 = vmax.f32 %v3756, %v3491
        %v3885 = vmax.f32 %v3757, %v3492
        %v3886 = vmax.f32 %v3758, %v3493
        %v3887 = vmax.f32 %v3759, %v3494
        %v3888 = vmax.f32 %v3760, %v3495
        %v3889 = vmax.f32 %v3761, %v3496
        %v3890 = vmax.f32 %v3762, %v3497
        %v3891 = vmax.f32 %v3763, %v3498
        %v3892 = vmax.f32 %v3764, %v3499
        %v3893 = vmax.f32 %v3765, %v3500
        %v3894 = vmax.f32 %v3766, %v3501
        %v3895 = vmax.f32 %v3767, %v3502
        %v3896 = vmax.f32 %v3768, %v3503
        %v3897 = vmax.f32 %v3769, %v3504
        %v3898 = vmax.f32 %v3770, %v3505
        %v3899 = vmax.f32 %v3771, %v3506
        %v3900 = vmax.f32 %v3772, %v3507
        %v3901 = vmax.f32 %v3773, %v3508
        %v3902 = vmax.f32 %v3774, %v3509
        %v3903 = vmax.f32 %v3775, %v3510
        %v3904 = vmax.f32 %v3776, %v3511
        %vm3905 = vcmask 7168
        %3906 = vst.msk [vmem:[%s414] sm:$0xff] %vm3905, %v3777
        %3907 = vst.msk [vmem:[%s414 + $0x8] sm:$0xff] %vm3905, %v3778
        %3908 = vst.msk [vmem:[%s414 + $0x10] sm:$0xff] %vm3905, %v3779
        %3909 = vst.msk [vmem:[%s414 + $0x18] sm:$0xff] %vm3905, %v3780
        %3910 = vst.msk [vmem:[%s414 + $0x20] sm:$0xff] %vm3905, %v3781
        %3911 = vst.msk [vmem:[%s414 + $0x28] sm:$0xff] %vm3905, %v3782
        %3912 = vst.msk [vmem:[%s414 + $0x30] sm:$0xff] %vm3905, %v3783
        %3913 = vst.msk [vmem:[%s414 + $0x38] sm:$0xff] %vm3905, %v3784
        %3914 = vst.msk [vmem:[%s414 + $0x40] sm:$0xff] %vm3905, %v3785
        %3915 = vst.msk [vmem:[%s414 + $0x48] sm:$0xff] %vm3905, %v3786
        %3916 = vst.msk [vmem:[%s414 + $0x50] sm:$0xff] %vm3905, %v3787
        %3917 = vst.msk [vmem:[%s414 + $0x58] sm:$0xff] %vm3905, %v3788
        %3918 = vst.msk [vmem:[%s414 + $0x60] sm:$0xff] %vm3905, %v3789
        %3919 = vst.msk [vmem:[%s414 + $0x68] sm:$0xff] %vm3905, %v3790
        %3920 = vst.msk [vmem:[%s414 + $0x70] sm:$0xff] %vm3905, %v3791
        %3921 = vst.msk [vmem:[%s414 + $0x78] sm:$0xff] %vm3905, %v3792
        %3922 = vst.msk [vmem:[%s414 + $0x80] sm:$0xff] %vm3905, %v3793
        %3923 = vst.msk [vmem:[%s414 + $0x88] sm:$0xff] %vm3905, %v3794
        %3924 = vst.msk [vmem:[%s414 + $0x90] sm:$0xff] %vm3905, %v3795
        %3925 = vst.msk [vmem:[%s414 + $0x98] sm:$0xff] %vm3905, %v3796
        %3926 = vst.msk [vmem:[%s414 + $0xa0] sm:$0xff] %vm3905, %v3797
        %3927 = vst.msk [vmem:[%s414 + $0xa8] sm:$0xff] %vm3905, %v3798
        %3928 = vst.msk [vmem:[%s414 + $0xb0] sm:$0xff] %vm3905, %v3799
        %3929 = vst.msk [vmem:[%s414 + $0xb8] sm:$0xff] %vm3905, %v3800
        %3930 = vst.msk [vmem:[%s414 + $0xc0] sm:$0xff] %vm3905, %v3801
        %3931 = vst.msk [vmem:[%s414 + $0xc8] sm:$0xff] %vm3905, %v3802
        %3932 = vst.msk [vmem:[%s414 + $0xd0] sm:$0xff] %vm3905, %v3803
        %3933 = vst.msk [vmem:[%s414 + $0xd8] sm:$0xff] %vm3905, %v3804
        %3934 = vst.msk [vmem:[%s414 + $0xe0] sm:$0xff] %vm3905, %v3805
        %3935 = vst.msk [vmem:[%s414 + $0xe8] sm:$0xff] %vm3905, %v3806
        %3936 = vst.msk [vmem:[%s414 + $0xf0] sm:$0xff] %vm3905, %v3807
        %3937 = vst.msk [vmem:[%s414 + $0xf8] sm:$0xff] %vm3905, %v3808
        %3938 = vst.msk [vmem:[%s414 + $0x100] sm:$0xff] %vm3905, %v3809
        %3939 = vst.msk [vmem:[%s414 + $0x108] sm:$0xff] %vm3905, %v3810
        %3940 = vst.msk [vmem:[%s414 + $0x110] sm:$0xff] %vm3905, %v3811
        %3941 = vst.msk [vmem:[%s414 + $0x118] sm:$0xff] %vm3905, %v3812
        %3942 = vst.msk [vmem:[%s414 + $0x120] sm:$0xff] %vm3905, %v3813
        %3943 = vst.msk [vmem:[%s414 + $0x128] sm:$0xff] %vm3905, %v3814
        %3944 = vst.msk [vmem:[%s414 + $0x130] sm:$0xff] %vm3905, %v3815
        %3945 = vst.msk [vmem:[%s414 + $0x138] sm:$0xff] %vm3905, %v3816
        %3946 = vst.msk [vmem:[%s414 + $0x140] sm:$0xff] %vm3905, %v3817
        %3947 = vst.msk [vmem:[%s414 + $0x148] sm:$0xff] %vm3905, %v3818
        %3948 = vst.msk [vmem:[%s414 + $0x150] sm:$0xff] %vm3905, %v3819
        %3949 = vst.msk [vmem:[%s414 + $0x158] sm:$0xff] %vm3905, %v3820
        %3950 = vst.msk [vmem:[%s414 + $0x160] sm:$0xff] %vm3905, %v3821
        %3951 = vst.msk [vmem:[%s414 + $0x168] sm:$0xff] %vm3905, %v3822
        %3952 = vst.msk [vmem:[%s414 + $0x170] sm:$0xff] %vm3905, %v3823
        %3953 = vst.msk [vmem:[%s414 + $0x178] sm:$0xff] %vm3905, %v3824
        %3954 = vst.msk [vmem:[%s414 + $0x180] sm:$0xff] %vm3905, %v3825
        %3955 = vst.msk [vmem:[%s414 + $0x188] sm:$0xff] %vm3905, %v3826
        %3956 = vst.msk [vmem:[%s414 + $0x190] sm:$0xff] %vm3905, %v3827
        %3957 = vst.msk [vmem:[%s414 + $0x198] sm:$0xff] %vm3905, %v3828
        %3958 = vst.msk [vmem:[%s414 + $0x1a0] sm:$0xff] %vm3905, %v3829
        %3959 = vst.msk [vmem:[%s414 + $0x1a8] sm:$0xff] %vm3905, %v3830
        %3960 = vst.msk [vmem:[%s414 + $0x1b0] sm:$0xff] %vm3905, %v3831
        %3961 = vst.msk [vmem:[%s414 + $0x1b8] sm:$0xff] %vm3905, %v3832
        %3962 = vst.msk [vmem:[%s414 + $0x1c0] sm:$0xff] %vm3905, %v3833
        %3963 = vst.msk [vmem:[%s414 + $0x1c8] sm:$0xff] %vm3905, %v3834
        %3964 = vst.msk [vmem:[%s414 + $0x1d0] sm:$0xff] %vm3905, %v3835
        %3965 = vst.msk [vmem:[%s414 + $0x1d8] sm:$0xff] %vm3905, %v3836
        %3966 = vst.msk [vmem:[%s414 + $0x1e0] sm:$0xff] %vm3905, %v3837
        %3967 = vst.msk [vmem:[%s414 + $0x1e8] sm:$0xff] %vm3905, %v3838
        %3968 = vst.msk [vmem:[%s414 + $0x1f0] sm:$0xff] %vm3905, %v3839
        %3969 = vst.msk [vmem:[%s414 + $0x1f8] sm:$0xff] %vm3905, %v3840
        %3970 = vst.msk [vmem:[%s414 + $0x200] sm:$0xff] %vm3905, %v3841
        %3971 = vst.msk [vmem:[%s414 + $0x208] sm:$0xff] %vm3905, %v3842
        %3972 = vst.msk [vmem:[%s414 + $0x210] sm:$0xff] %vm3905, %v3843
        %3973 = vst.msk [vmem:[%s414 + $0x218] sm:$0xff] %vm3905, %v3844
        %3974 = vst.msk [vmem:[%s414 + $0x220] sm:$0xff] %vm3905, %v3845
        %3975 = vst.msk [vmem:[%s414 + $0x228] sm:$0xff] %vm3905, %v3846
        %3976 = vst.msk [vmem:[%s414 + $0x230] sm:$0xff] %vm3905, %v3847
        %3977 = vst.msk [vmem:[%s414 + $0x238] sm:$0xff] %vm3905, %v3848
        %3978 = vst.msk [vmem:[%s414 + $0x240] sm:$0xff] %vm3905, %v3849
        %3979 = vst.msk [vmem:[%s414 + $0x248] sm:$0xff] %vm3905, %v3850
        %3980 = vst.msk [vmem:[%s414 + $0x250] sm:$0xff] %vm3905, %v3851
        %3981 = vst.msk [vmem:[%s414 + $0x258] sm:$0xff] %vm3905, %v3852
        %3982 = vst.msk [vmem:[%s414 + $0x260] sm:$0xff] %vm3905, %v3853
        %3983 = vst.msk [vmem:[%s414 + $0x268] sm:$0xff] %vm3905, %v3854
        %3984 = vst.msk [vmem:[%s414 + $0x270] sm:$0xff] %vm3905, %v3855
        %3985 = vst.msk [vmem:[%s414 + $0x278] sm:$0xff] %vm3905, %v3856
        %3986 = vst.msk [vmem:[%s414 + $0x280] sm:$0xff] %vm3905, %v3857
        %3987 = vst.msk [vmem:[%s414 + $0x288] sm:$0xff] %vm3905, %v3858
        %3988 = vst.msk [vmem:[%s414 + $0x290] sm:$0xff] %vm3905, %v3859
        %3989 = vst.msk [vmem:[%s414 + $0x298] sm:$0xff] %vm3905, %v3860
        %3990 = vst.msk [vmem:[%s414 + $0x2a0] sm:$0xff] %vm3905, %v3861
        %3991 = vst.msk [vmem:[%s414 + $0x2a8] sm:$0xff] %vm3905, %v3862
        %3992 = vst.msk [vmem:[%s414 + $0x2b0] sm:$0xff] %vm3905, %v3863
        %3993 = vst.msk [vmem:[%s414 + $0x2b8] sm:$0xff] %vm3905, %v3864
        %3994 = vst.msk [vmem:[%s414 + $0x2c0] sm:$0xff] %vm3905, %v3865
        %3995 = vst.msk [vmem:[%s414 + $0x2c8] sm:$0xff] %vm3905, %v3866
        %3996 = vst.msk [vmem:[%s414 + $0x2d0] sm:$0xff] %vm3905, %v3867
        %3997 = vst.msk [vmem:[%s414 + $0x2d8] sm:$0xff] %vm3905, %v3868
        %3998 = vst.msk [vmem:[%s414 + $0x2e0] sm:$0xff] %vm3905, %v3869
        %3999 = vst.msk [vmem:[%s414 + $0x2e8] sm:$0xff] %vm3905, %v3870
        %4000 = vst.msk [vmem:[%s414 + $0x2f0] sm:$0xff] %vm3905, %v3871
        %4001 = vst.msk [vmem:[%s414 + $0x2f8] sm:$0xff] %vm3905, %v3872
        %4002 = vst.msk [vmem:[%s414 + $0x300] sm:$0xff] %vm3905, %v3873
        %4003 = vst.msk [vmem:[%s414 + $0x308] sm:$0xff] %vm3905, %v3874
        %4004 = vst.msk [vmem:[%s414 + $0x310] sm:$0xff] %vm3905, %v3875
        %4005 = vst.msk [vmem:[%s414 + $0x318] sm:$0xff] %vm3905, %v3876
        %4006 = vst.msk [vmem:[%s414 + $0x320] sm:$0xff] %vm3905, %v3877
        %4007 = vst.msk [vmem:[%s414 + $0x328] sm:$0xff] %vm3905, %v3878
        %4008 = vst.msk [vmem:[%s414 + $0x330] sm:$0xff] %vm3905, %v3879
        %4009 = vst.msk [vmem:[%s414 + $0x338] sm:$0xff] %vm3905, %v3880
        %4010 = vst.msk [vmem:[%s414 + $0x340] sm:$0xff] %vm3905, %v3881
        %4011 = vst.msk [vmem:[%s414 + $0x348] sm:$0xff] %vm3905, %v3882
        %4012 = vst.msk [vmem:[%s414 + $0x350] sm:$0xff] %vm3905, %v3883
        %4013 = vst.msk [vmem:[%s414 + $0x358] sm:$0xff] %vm3905, %v3884
        %4014 = vst.msk [vmem:[%s414 + $0x360] sm:$0xff] %vm3905, %v3885
        %4015 = vst.msk [vmem:[%s414 + $0x368] sm:$0xff] %vm3905, %v3886
        %4016 = vst.msk [vmem:[%s414 + $0x370] sm:$0xff] %vm3905, %v3887
        %4017 = vst.msk [vmem:[%s414 + $0x378] sm:$0xff] %vm3905, %v3888
        %4018 = vst.msk [vmem:[%s414 + $0x380] sm:$0xff] %vm3905, %v3889
        %4019 = vst.msk [vmem:[%s414 + $0x388] sm:$0xff] %vm3905, %v3890
        %4020 = vst.msk [vmem:[%s414 + $0x390] sm:$0xff] %vm3905, %v3891
        %4021 = vst.msk [vmem:[%s414 + $0x398] sm:$0xff] %vm3905, %v3892
        %4022 = vst.msk [vmem:[%s414 + $0x3a0] sm:$0xff] %vm3905, %v3893
        %4023 = vst.msk [vmem:[%s414 + $0x3a8] sm:$0xff] %vm3905, %v3894
        %4024 = vst.msk [vmem:[%s414 + $0x3b0] sm:$0xff] %vm3905, %v3895
        %4025 = vst.msk [vmem:[%s414 + $0x3b8] sm:$0xff] %vm3905, %v3896
        %4026 = vst.msk [vmem:[%s414 + $0x3c0] sm:$0xff] %vm3905, %v3897
        %4027 = vst.msk [vmem:[%s414 + $0x3c8] sm:$0xff] %vm3905, %v3898
        %4028 = vst.msk [vmem:[%s414 + $0x3d0] sm:$0xff] %vm3905, %v3899
        %4029 = vst.msk [vmem:[%s414 + $0x3d8] sm:$0xff] %vm3905, %v3900
        %4030 = vst.msk [vmem:[%s414 + $0x3e0] sm:$0xff] %vm3905, %v3901
        %4031 = vst.msk [vmem:[%s414 + $0x3e8] sm:$0xff] %vm3905, %v3902
        %4032 = vst.msk [vmem:[%s414 + $0x3f0] sm:$0xff] %vm3905, %v3903
        %4033 = vst.msk [vmem:[%s414 + $0x3f8] sm:$0xff] %vm3905, %v3904
      $region72: #{pointnet_partseg_features.1} parent=63 // pred_fallthru
        _
      %p4034 = scmp.lt.s32.totalorder %s26, 1
      %s4035 = scalar_select %p4034, %s26, 1
      %s4036 = smul.addr %s4035, 128
      %s4037 = smul.addr %s4036, 8
      %s4038 = scalar_lea.vmem %s11, %s4037
      // Predicated region
      $region73: #{pointnet_partseg_features.1} parent=63 // pred_check
        %p4039 = pneg %p290
      $region74: #{pointnet_partseg_features.1} parent=63 // pred_check_branch
        %4041 = sbr.rel (%p4039) target = $region76
      $region75: #{pointnet_partseg_features.1} parent=63 // pred_region
        _
      $region76: #{pointnet_partseg_features.1} parent=63 // pred_fallthru
        _
    $region64: #{pointnet_partseg_features.1} parent=5 // pred_fallthru
      _
    %p4042 = scmp.le.s32.totalorder 2, %s17
    // Predicated region
    $region77: #{pointnet_partseg_features.1} parent=5 // pred_check
      %p4043 = pneg %p4042
    $region78: #{pointnet_partseg_features.1} parent=5 // pred_check_branch
      %4045 = sbr.rel (%p4043) target = $region80
    $region79: #{pointnet_partseg_features.1} parent=5 // pred_region
      %s4046 = ssub.s32 %s17, 2
      // Predicated region
      $region81: #{pointnet_partseg_features.1} parent=79 // pred_check
        %p4047 = pneg %p296
      $region82: #{pointnet_partseg_features.1} parent=79 // pred_check_branch
        %4049 = sbr.rel (%p4047) target = $region84
      $region83: #{pointnet_partseg_features.1} parent=79 // pred_region
        %p4050 = scmp.lt.s32.totalorder %s28, 1
        %s4051 = scalar_select %p4050, %s28, 1
        %s4052 = smul.addr %s4051, 128
        %s4053 = smul.addr %s4052, 8
        %s4054 = scalar_lea.vmem %s11, %s4053
      $region84: #{pointnet_partseg_features.1} parent=79 // pred_fallthru
        _
    $region80: #{pointnet_partseg_features.1} parent=5 // pred_fallthru
      _
  $region6: #{pointnet_partseg_features.1} parent=0 // loop_footer
    %s21 = sadd.s32 1, %s17
  $region7: #{pointnet_partseg_features.1} parent=0 // loop_footer_branch
    %16 = sbr.rel target = $region3
  $region8: #{pointnet_partseg_features.1} parent=0 // loop_exit
    _

</llo_original>
